<compile_context>
chip_gen: v5e
topology: v5e:2x2
jax: 0.10.0
libtpu: 0.0.40
codegen_flags: <defaults>
</compile_context>

<pallas_src>
import jax
import jax.numpy as jnp
import numpy as np
from jax import lax
from jax.experimental import pallas as pl
from jax.experimental.pallas import tpu as pltpu

INPUT_DIMS = 18
HIDDEN_DIMS = [512, 256, 128, 64]
OUTPUT_DIMS = 1
SKIP_IN = (2,)

_H0 = HIDDEN_DIMS[0]                       # 512
_SPLIT = HIDDEN_DIMS[1] - INPUT_DIMS       # 238 (real width of lin1's output)


# ----------------------------- Pallas kernel ---------------------------------
def _mlp_kernel(x_ref,
                w0b_ref, b0_ref,
                w1_ref, b1_ref,
                w2a_ref, b2_ref,
                w3_ref, b3_ref,
                w4_ref, b4_ref,
                o_ref):
    hdt = w1_ref.dtype                       # hidden-layer matmul dtype (bf16 by default)
    x = x_ref[...]                           # (TB, 18) f32 (kept f32 for input precision)

    # fused layer-0 + skip matmul: x @ [W0 | W2b] -> (TB, 640) f32 accumulation
    xw = jnp.dot(x, w0b_ref[...], preferred_element_type=jnp.float32)
    h = jnp.maximum(xw[:, :_H0] + b0_ref[...], 0.0).astype(hdt)     # (TB, 512)
    skip = xw[:, _H0:]                                              # (TB, 128) f32, layer-2 x-term

    # layer 1: 512 -> 256 (238 real + 18 zero-padded lanes), relu
    h = jnp.dot(h, w1_ref[...], preferred_element_type=jnp.float32) + b1_ref[...]
    h = jnp.maximum(h, 0.0).astype(hdt)                             # (TB, 256)

    # layer 2 (skip): cat([h, x]) @ W2 + b2 == h @ W2a + x @ W2b + b2  (exact)
    h = (jnp.dot(h, w2a_ref[...], preferred_element_type=jnp.float32) + skip + b2_ref[...])
    h = jnp.maximum(h, 0.0).astype(hdt)                             # (TB, 128)

    # layer 3: 128 -> 64, relu (kept f32 into the tiny final layer)
    h = jnp.dot(h, w3_ref[...], preferred_element_type=jnp.float32) + b3_ref[...]
    h64 = jnp.maximum(h, 0.0)                                       # (TB, 64) f32

    # layer 4: 64 -> 1, computed as (1,64) x (TB,64) contracted over dim 64 -> (1, TB)
    # (lane-dense output block; Mosaic can fold the operand transpose into the MXU feed)
    out_row = lax.dot_general(w4_ref[...], h64,
                              dimension_numbers=(((1,), (1,)), ((), ())),
                              preferred_element_type=jnp.float32)   # (1, TB)
    o_ref[...] = jnp.abs(out_row + b4_ref[...]).reshape(o_ref.shape)


# ------------------------- one-time parameter prep ----------------------------
def prepare_params(params, *, use_bf16=True):
    """params: list of 5 (W, b) tuples with W:(in, out), b:(out,), as in the PyTorch
    module (W is the transpose of PyTorch's weight).  Do this ONCE, not per call."""
    (w0, b0), (w1, b1), (w2, b2), (w3, b3), (w4, b4) = params
    lane_pad = HIDDEN_DIMS[1] - _SPLIT                      # pad 238 -> 256 (exact: zeros)
    hdt = jnp.bfloat16 if use_bf16 else jnp.float32

    w2a = jnp.pad(w2[:_SPLIT], ((0, lane_pad), (0, 0))).astype(hdt)   # (256, 128), multiplies h
    w2b = w2[_SPLIT:]                                                 # (18, 128),  multiplies x
    # fused x-driven weight [W0 | W2b] -> (18, 640); kept f32 (K=18 is pad-dominated anyway)
    w0b = jnp.concatenate([w0, w2b], axis=1).astype(jnp.float32)

    w1p = jnp.pad(w1, ((0, 0), (0, lane_pad))).astype(hdt)            # (512, 256)
    w3c = w3.astype(hdt)                                              # (128, 64)
    w4t = w4.T.astype(jnp.float32)                                    # (1, 64)

    b0r = b0.reshape(1, -1).astype(jnp.float32)                       # (1, 512)
    b1r = jnp.pad(b1, ((0, lane_pad),)).reshape(1, -1).astype(jnp.float32)  # (1, 256)
    b2r = b2.reshape(1, -1).astype(jnp.float32)                       # (1, 128)
    b3r = b3.reshape(1, -1).astype(jnp.float32)                       # (1, 64)
    b4r = b4.reshape(1, -1).astype(jnp.float32)                       # (1, 1)

    return (w0b, b0r, w1p, b1r, w2a, b2r, w3c, b3r, w4t, b4r)


# ------------------------------ tiling helpers ---------------------------------
def _choose_tb(batch, tb_req, align=256):
    """Align the batch tile to 256 (MXU-friendly on v6e/v7x, multiple of 128 for v5e) and
    clamp it so that ceil(B/tb) >= 2 whenever the batch allows it — the single 'parallel'
    grid axis is the only way this kernel can feed v7x's second TensorCore."""
    tb = max(align, (int(tb_req) // align) * align)
    half = -(-batch // 2)                       # ceil(B / 2)
    half_aligned = max(align, -(-half // align) * align)
    return min(tb, half_aligned)


def _vmem_limit_bytes(tb, weight_bytes):
    """Footprint-based scoped-VMEM request, clamped to 75% of physical VMEM (48 MiB on
    v7x, 96 MiB on v5e/v6e).  Never request the whole 64 MiB of a v7x TensorCore."""
    # per-row live intermediates: xw(640 f32) + h512(f32+bf16) + h256(f32+bf16)
    # + h128(f32+bf16) + h64(f32 x2) + skip(128 f32)  -- generous upper bound
    per_row = 640 * 4 + 512 * 6 + 256 * 6 + 128 * 6 + 64 * 8 + 128 * 4
    need = tb * per_row
    need += 2 * tb * 128 * 4        # double-buffered x tile (18 lane-padded to 128)
    need += 2 * tb * 8 * 4          # double-buffered (1,1,tb) output tile
    need += int(weight_bytes)       # resident weights/biases
    need = int(1.3 * need) + (4 << 20)   # Mosaic internal scratch / margin
    try:
        cap = int(0.75 * pltpu.get_tpu_info().vmem_capacity_bytes)
    except Exception:
        cap = 48 << 20              # safe on every generation (v7x physical = 64 MiB)
    return int(min(max(need, 32 << 20), cap))


# ------------------------------- forward wrapper -------------------------------
def self_collision_cdf_forward(x, prepared, *, tb=1024):
    """x: (B, 18) float32.  prepared: output of prepare_params()."""
    B, F = x.shape
    assert F == INPUT_DIMS
    weights = tuple(prepared)

    tb = _choose_tb(B, tb)
    nt = pl.cdiv(B, tb)
    Bp = nt * tb
    xf = x.astype(jnp.float32)
    if Bp != B:
        xf = jnp.pad(xf, ((0, Bp - B), (0, 0)))

    weight_bytes = sum(int(np.prod(a.shape)) * a.dtype.itemsize for a in weights)
    vmem_limit = _vmem_limit_bytes(tb, weight_bytes)

    per_row_flops = 2 * (INPUT_DIMS * (_H0 + 128) + 512 * 256 + 256 * 128 + 128 * 64 + 64)
    cost = pl.CostEstimate(
        flops=int(Bp) * per_row_flops,
        transcendentals=0,
        bytes_accessed=int(xf.size) * 4 + int(Bp) * 4 + int(weight_bytes))

    x_spec = pl.BlockSpec((tb, INPUT_DIMS), lambda i: (i, 0))
    out_spec = pl.BlockSpec((1, 1, tb), lambda i: (i, 0, 0))     # lane-dense output block

    def resident_spec(a, single_buffer):
        nd = a.ndim
        idx = lambda i, _nd=nd: (0,) * _nd
        if single_buffer:
            try:
                # grid-invariant weights/biases: one pipeline buffer is enough.
                return pl.BlockSpec(a.shape, idx, pipeline_mode=pl.Buffered(1))
            except TypeError:
                pass
        return pl.BlockSpec(a.shape, idx)

    def run(single_buffer):
        in_specs = [x_spec] + [resident_spec(a, single_buffer) for a in weights]
        return pl.pallas_call(
            _mlp_kernel,
            out_shape=jax.ShapeDtypeStruct((nt, 1, tb), jnp.float32),
            grid=(nt,),
            in_specs=in_specs,
            out_specs=out_spec,
            compiler_params=pltpu.CompilerParams(
                dimension_semantics=("parallel",),
                vmem_limit_bytes=vmem_limit),
            cost_estimate=cost,
        )(xf, *weights)

    try:
        out3d = run(True)
    except Exception:
        # Some jax versions reject pipeline_mode=pl.Buffered(1); fall back to the
        # default double-buffered resident weights (identical numerics).
        out3d = run(False)

    return out3d.reshape(-1)[:B].reshape(B, OUTPUT_DIMS)


# ------------------------- deterministic params --------------------------------
def init_params(key):
    dims = [INPUT_DIMS] + HIDDEN_DIMS + [OUTPUT_DIMS]
    num_layers = len(dims)
    params = []
    for layer in range(num_layers - 1):
        if layer + 1 in SKIP_IN:
            out_dim = dims[layer + 1] - INPUT_DIMS
        else:
            out_dim = dims[layer + 1]
        in_dim = dims[layer]
        key, kw, kb = jax.random.split(key, 3)
        scale = 1.0 / jnp.sqrt(jnp.float32(in_dim))
        w = jax.random.uniform(kw, (in_dim, out_dim), jnp.float32, -scale, scale)
        b = jax.random.uniform(kb, (out_dim,), jnp.float32, -scale, scale)
        params.append((w, b))
    return params


# ----------------------------- pure-JAX reference -------------------------------
def ref_forward(x, params):
    input_x = x
    h = x
    for layer, (w, b) in enumerate(params):
        if layer in SKIP_IN:
            h = jnp.concatenate([h, input_x], axis=-1)
        h = h @ w + b
        if layer < len(params) - 1:
            h = jax.nn.relu(h)
    return jnp.abs(h)


if __name__ == "__main__":
    key = jax.random.PRNGKey(0)
    key, kx = jax.random.split(key)
    params = init_params(key)

    prepared_bf16 = prepare_params(params, use_bf16=True)    # default fast path
    prepared_f32 = prepare_params(params, use_bf16=False)    # exactness check path

    # small check (B=8): single tile; f32 path must match the reference tightly
    x_small = jax.random.normal(kx, (8, INPUT_DIMS), jnp.float32)
    ref_small = ref_forward(x_small, params)

    out_f32 = jax.block_until_ready(self_collision_cdf_forward(x_small, prepared_f32))
    assert out_f32.shape == (8, OUTPUT_DIMS)
    np.testing.assert_allclose(np.asarray(out_f32), np.asarray(ref_small),
                               rtol=1e-3, atol=1e-4)

    out_bf16 = jax.block_until_ready(self_collision_cdf_forward(x_small, prepared_bf16))
    np.testing.assert_allclose(np.asarray(out_bf16), np.asarray(ref_small),
                               rtol=5e-2, atol=3e-2)

    # multi-tile + padded-batch check (B=600): default tb clamps to 512 -> 2 parallel steps
    key, kx2 = jax.random.split(key)
    x_big = jax.random.normal(kx2, (600, INPUT_DIMS), jnp.float32)
    ref_big = ref_forward(x_big, params)

    out_big_f32 = jax.block_until_ready(self_collision_cdf_forward(x_big, prepared_f32))
    np.testing.assert_allclose(np.asarray(out_big_f32), np.asarray(ref_big),
                               rtol=1e-3, atol=1e-4)

    # 3-step grid (tb=256) on the bf16 default path
    out_big_bf16 = jax.block_until_ready(
        self_collision_cdf_forward(x_big, prepared_bf16, tb=256))
    np.testing.assert_allclose(np.asarray(out_big_bf16), np.asarray(ref_big),
                               rtol=5e-2, atol=3e-2)

    print("KERNEL_OK")
</pallas_src>

<mosaic_0001>
module attributes {stable_mosaic.version = 11 : i64} {
  func.func @_mlp_kernel(%arg0: i32, %arg1: memref<256x18xf32, #tpu.memory_space<vmem>>, %arg2: memref<18x640xf32, #tpu.memory_space<vmem>>, %arg3: memref<1x512xf32, #tpu.memory_space<vmem>>, %arg4: memref<512x256xf32, #tpu.memory_space<vmem>>, %arg5: memref<1x256xf32, #tpu.memory_space<vmem>>, %arg6: memref<256x128xf32, #tpu.memory_space<vmem>>, %arg7: memref<1x128xf32, #tpu.memory_space<vmem>>, %arg8: memref<128x64xf32, #tpu.memory_space<vmem>>, %arg9: memref<1x64xf32, #tpu.memory_space<vmem>>, %arg10: memref<1x64xf32, #tpu.memory_space<vmem>>, %arg11: memref<1x1xf32, #tpu.memory_space<vmem>>, %arg12: memref<1x1x256xf32, #tpu.memory_space<vmem>>) attributes {dimension_semantics = [#tpu.dimension_semantics<parallel>], iteration_bounds = array<i64: 1>, scalar_prefetch = 0 : i64, scratch_operands = 0 : i64, tpu.core_type = #tpu.core_type<tc>, window_params = [{transform_indices = @transform_0, window_bounds = array<i64: 256, 18>}, {pipeline_mode = #tpu.pipeline_mode<synchronous>, transform_indices = @transform_1, window_bounds = array<i64: 18, 640>}, {pipeline_mode = #tpu.pipeline_mode<synchronous>, transform_indices = @transform_2, window_bounds = array<i64: 1, 512>}, {pipeline_mode = #tpu.pipeline_mode<synchronous>, transform_indices = @transform_3, window_bounds = array<i64: 512, 256>}, {pipeline_mode = #tpu.pipeline_mode<synchronous>, transform_indices = @transform_4, window_bounds = array<i64: 1, 256>}, {pipeline_mode = #tpu.pipeline_mode<synchronous>, transform_indices = @transform_5, window_bounds = array<i64: 256, 128>}, {pipeline_mode = #tpu.pipeline_mode<synchronous>, transform_indices = @transform_6, window_bounds = array<i64: 1, 128>}, {pipeline_mode = #tpu.pipeline_mode<synchronous>, transform_indices = @transform_7, window_bounds = array<i64: 128, 64>}, {pipeline_mode = #tpu.pipeline_mode<synchronous>, transform_indices = @transform_8, window_bounds = array<i64: 1, 64>}, {pipeline_mode = #tpu.pipeline_mode<synchronous>, transform_indices = @transform_9, window_bounds = array<i64: 1, 64>}, {pipeline_mode = #tpu.pipeline_mode<synchronous>, transform_indices = @transform_10, window_bounds = array<i64: 1, 1>}, {transform_indices = @transform_11, window_bounds = array<i64: 1, 1, 256>}]} {
    %c0 = arith.constant 0 : index
    %c0_0 = arith.constant 0 : index
    %0 = vector.load %arg1[%c0, %c0_0] : memref<256x18xf32, #tpu.memory_space<vmem>>, vector<256x18xf32>
    %c0_1 = arith.constant 0 : index
    %c0_2 = arith.constant 0 : index
    %1 = vector.load %arg2[%c0_1, %c0_2] : memref<18x640xf32, #tpu.memory_space<vmem>>, vector<18x640xf32>
    %cst = arith.constant dense<0.000000e+00> : vector<256x640xf32>
    %2 = tpu.matmul %0, %1, %cst {dimension_numbers = #tpu.dot_dimension_numbers<[1], [0], [0], [1], [0, 0, 1, 1], [], []>} : vector<256x18xf32>, vector<18x640xf32>, vector<256x640xf32> -> vector<256x640xf32>
    %3 = vector.extract_strided_slice %2 {offsets = [0, 0], sizes = [256, 512], strides = [1, 1]} : vector<256x640xf32> to vector<256x512xf32>
    %c0_3 = arith.constant 0 : index
    %c0_4 = arith.constant 0 : index
    %4 = vector.load %arg3[%c0_3, %c0_4] : memref<1x512xf32, #tpu.memory_space<vmem>>, vector<1x512xf32>
    %5 = vector.broadcast %4 : vector<1x512xf32> to vector<256x512xf32>
    %6 = arith.addf %3, %5 : vector<256x512xf32>
    %cst_5 = arith.constant 0.000000e+00 : f32
    %7 = vector.broadcast %cst_5 : f32 to vector<256x512xf32>
    %8 = arith.maximumf %6, %7 : vector<256x512xf32>
    %9 = vector.extract_strided_slice %2 {offsets = [0, 512], sizes = [256, 128], strides = [1, 1]} : vector<256x640xf32> to vector<256x128xf32>
    %c0_6 = arith.constant 0 : index
    %c0_7 = arith.constant 0 : index
    %10 = vector.load %arg4[%c0_6, %c0_7] : memref<512x256xf32, #tpu.memory_space<vmem>>, vector<512x256xf32>
    %cst_8 = arith.constant dense<0.000000e+00> : vector<256x256xf32>
    %11 = tpu.matmul %8, %10, %cst_8 {dimension_numbers = #tpu.dot_dimension_numbers<[1], [0], [0], [1], [0, 0, 1, 1], [], []>} : vector<256x512xf32>, vector<512x256xf32>, vector<256x256xf32> -> vector<256x256xf32>
    %c0_9 = arith.constant 0 : index
    %c0_10 = arith.constant 0 : index
    %12 = vector.load %arg5[%c0_9, %c0_10] : memref<1x256xf32, #tpu.memory_space<vmem>>, vector<1x256xf32>
    %13 = vector.broadcast %12 : vector<1x256xf32> to vector<256x256xf32>
    %14 = arith.addf %11, %13 : vector<256x256xf32>
    %cst_11 = arith.constant 0.000000e+00 : f32
    %15 = vector.broadcast %cst_11 : f32 to vector<256x256xf32>
    %16 = arith.maximumf %14, %15 : vector<256x256xf32>
    %c0_12 = arith.constant 0 : index
    %c0_13 = arith.constant 0 : index
    %17 = vector.load %arg6[%c0_12, %c0_13] : memref<256x128xf32, #tpu.memory_space<vmem>>, vector<256x128xf32>
    %cst_14 = arith.constant dense<0.000000e+00> : vector<256x128xf32>
    %18 = tpu.matmul %16, %17, %cst_14 {dimension_numbers = #tpu.dot_dimension_numbers<[1], [0], [0], [1], [0, 0, 1, 1], [], []>} : vector<256x256xf32>, vector<256x128xf32>, vector<256x128xf32> -> vector<256x128xf32>
    %19 = arith.addf %18, %9 : vector<256x128xf32>
    %c0_15 = arith.constant 0 : index
    %c0_16 = arith.constant 0 : index
    %20 = vector.load %arg7[%c0_15, %c0_16] : memref<1x128xf32, #tpu.memory_space<vmem>>, vector<1x128xf32>
    %21 = vector.broadcast %20 : vector<1x128xf32> to vector<256x128xf32>
    %22 = arith.addf %19, %21 : vector<256x128xf32>
    %cst_17 = arith.constant 0.000000e+00 : f32
    %23 = vector.broadcast %cst_17 : f32 to vector<256x128xf32>
    %24 = arith.maximumf %22, %23 : vector<256x128xf32>
    %c0_18 = arith.constant 0 : index
    %c0_19 = arith.constant 0 : index
    %25 = vector.load %arg8[%c0_18, %c0_19] : memref<128x64xf32, #tpu.memory_space<vmem>>, vector<128x64xf32>
    %cst_20 = arith.constant dense<0.000000e+00> : vector<256x64xf32>
    %26 = tpu.matmul %24, %25, %cst_20 {dimension_numbers = #tpu.dot_dimension_numbers<[1], [0], [0], [1], [0, 0, 1, 1], [], []>} : vector<256x128xf32>, vector<128x64xf32>, vector<256x64xf32> -> vector<256x64xf32>
    %c0_21 = arith.constant 0 : index
    %c0_22 = arith.constant 0 : index
    %27 = vector.load %arg9[%c0_21, %c0_22] : memref<1x64xf32, #tpu.memory_space<vmem>>, vector<1x64xf32>
    %28 = vector.broadcast %27 : vector<1x64xf32> to vector<256x64xf32>
    %29 = arith.addf %26, %28 : vector<256x64xf32>
    %cst_23 = arith.constant 0.000000e+00 : f32
    %30 = vector.broadcast %cst_23 : f32 to vector<256x64xf32>
    %31 = arith.maximumf %29, %30 : vector<256x64xf32>
    %c0_24 = arith.constant 0 : index
    %c0_25 = arith.constant 0 : index
    %32 = vector.load %arg10[%c0_24, %c0_25] : memref<1x64xf32, #tpu.memory_space<vmem>>, vector<1x64xf32>
    %cst_26 = arith.constant dense<0.000000e+00> : vector<1x256xf32>
    %33 = tpu.matmul %32, %31, %cst_26 {dimension_numbers = #tpu.dot_dimension_numbers<[1], [1], [0], [0], [0, 0, 1, 0], [], []>} : vector<1x64xf32>, vector<256x64xf32>, vector<1x256xf32> -> vector<1x256xf32>
    %c0_27 = arith.constant 0 : index
    %c0_28 = arith.constant 0 : index
    %34 = vector.load %arg11[%c0_27, %c0_28] : memref<1x1xf32, #tpu.memory_space<vmem>>, vector<1x1xf32>
    %35 = vector.broadcast %34 : vector<1x1xf32> to vector<1x256xf32>
    %36 = arith.addf %33, %35 : vector<1x256xf32>
    %37 = math.absf %36 : vector<1x256xf32>
    %38 = vector.shape_cast %37 : vector<1x256xf32> to vector<1x1x256xf32>
    %c0_29 = arith.constant 0 : index
    %c0_30 = arith.constant 0 : index
    %c0_31 = arith.constant 0 : index
    %39 = vector.load %arg12[%c0_29, %c0_30, %c0_31] : memref<1x1x256xf32, #tpu.memory_space<vmem>>, vector<1x1x256xf32>
    tpu.vector_store %arg12[%c0_29, %c0_30, %c0_31], %38 {strides = array<i32>} : memref<1x1x256xf32, #tpu.memory_space<vmem>>, vector<1x1x256xf32>,
    return
  }
  func.func @transform_0(%arg0: i32) -> (i32, i32) {
    %c0_i32 = arith.constant 0 : i32
    %c0_i32_0 = arith.constant 0 : i32
    return %arg0, %c0_i32 : i32, i32
  }
  func.func @transform_1(%arg0: i32) -> (i32, i32) {
    %c0_i32 = arith.constant 0 : i32
    %c0_i32_0 = arith.constant 0 : i32
    %c0_i32_1 = arith.constant 0 : i32
    return %c0_i32, %c0_i32_0 : i32, i32
  }
  func.func @transform_2(%arg0: i32) -> (i32, i32) {
    %c0_i32 = arith.constant 0 : i32
    %c0_i32_0 = arith.constant 0 : i32
    %c0_i32_1 = arith.constant 0 : i32
    return %c0_i32, %c0_i32_0 : i32, i32
  }
  func.func @transform_3(%arg0: i32) -> (i32, i32) {
    %c0_i32 = arith.constant 0 : i32
    %c0_i32_0 = arith.constant 0 : i32
    %c0_i32_1 = arith.constant 0 : i32
    return %c0_i32, %c0_i32_0 : i32, i32
  }
  func.func @transform_4(%arg0: i32) -> (i32, i32) {
    %c0_i32 = arith.constant 0 : i32
    %c0_i32_0 = arith.constant 0 : i32
    %c0_i32_1 = arith.constant 0 : i32
    return %c0_i32, %c0_i32_0 : i32, i32
  }
  func.func @transform_5(%arg0: i32) -> (i32, i32) {
    %c0_i32 = arith.constant 0 : i32
    %c0_i32_0 = arith.constant 0 : i32
    %c0_i32_1 = arith.constant 0 : i32
    return %c0_i32, %c0_i32_0 : i32, i32
  }
  func.func @transform_6(%arg0: i32) -> (i32, i32) {
    %c0_i32 = arith.constant 0 : i32
    %c0_i32_0 = arith.constant 0 : i32
    %c0_i32_1 = arith.constant 0 : i32
    return %c0_i32, %c0_i32_0 : i32, i32
  }
  func.func @transform_7(%arg0: i32) -> (i32, i32) {
    %c0_i32 = arith.constant 0 : i32
    %c0_i32_0 = arith.constant 0 : i32
    %c0_i32_1 = arith.constant 0 : i32
    return %c0_i32, %c0_i32_0 : i32, i32
  }
  func.func @transform_8(%arg0: i32) -> (i32, i32) {
    %c0_i32 = arith.constant 0 : i32
    %c0_i32_0 = arith.constant 0 : i32
    %c0_i32_1 = arith.constant 0 : i32
    return %c0_i32, %c0_i32_0 : i32, i32
  }
  func.func @transform_9(%arg0: i32) -> (i32, i32) {
    %c0_i32 = arith.constant 0 : i32
    %c0_i32_0 = arith.constant 0 : i32
    %c0_i32_1 = arith.constant 0 : i32
    return %c0_i32, %c0_i32_0 : i32, i32
  }
  func.func @transform_10(%arg0: i32) -> (i32, i32) {
    %c0_i32 = arith.constant 0 : i32
    %c0_i32_0 = arith.constant 0 : i32
    %c0_i32_1 = arith.constant 0 : i32
    return %c0_i32, %c0_i32_0 : i32, i32
  }
  func.func @transform_11(%arg0: i32) -> (i32, i32, i32) {
    %c0_i32 = arith.constant 0 : i32
    %c0_i32_0 = arith.constant 0 : i32
    %c0_i32_1 = arith.constant 0 : i32
    return %arg0, %c0_i32, %c0_i32_0 : i32, i32, i32
  }
}

module attributes {stable_mosaic.version = 11 : i64} {
  func.func @_mlp_kernel(%arg0: i32, %arg1: memref<256x18xf32, #tpu.memory_space<vmem>>, %arg2: memref<18x640xf32, #tpu.memory_space<vmem>>, %arg3: memref<1x512xf32, #tpu.memory_space<vmem>>, %arg4: memref<512x256xf32, #tpu.memory_space<vmem>>, %arg5: memref<1x256xf32, #tpu.memory_space<vmem>>, %arg6: memref<256x128xf32, #tpu.memory_space<vmem>>, %arg7: memref<1x128xf32, #tpu.memory_space<vmem>>, %arg8: memref<128x64xf32, #tpu.memory_space<vmem>>, %arg9: memref<1x64xf32, #tpu.memory_space<vmem>>, %arg10: memref<1x64xf32, #tpu.memory_space<vmem>>, %arg11: memref<1x1xf32, #tpu.memory_space<vmem>>, %arg12: memref<1x1x256xf32, #tpu.memory_space<vmem>>) attributes {dimension_semantics = [#tpu.dimension_semantics<parallel>], iteration_bounds = array<i64: 1>, scalar_prefetch = 0 : i64, scratch_operands = 0 : i64, tpu.core_type = #tpu.core_type<tc>, window_params = [{transform_indices = @transform_0, window_bounds = array<i64: 256, 18>}, {pipeline_mode = #tpu.pipeline_mode<synchronous>, transform_indices = @transform_1, window_bounds = array<i64: 18, 640>}, {pipeline_mode = #tpu.pipeline_mode<synchronous>, transform_indices = @transform_2, window_bounds = array<i64: 1, 512>}, {pipeline_mode = #tpu.pipeline_mode<synchronous>, transform_indices = @transform_3, window_bounds = array<i64: 512, 256>}, {pipeline_mode = #tpu.pipeline_mode<synchronous>, transform_indices = @transform_4, window_bounds = array<i64: 1, 256>}, {pipeline_mode = #tpu.pipeline_mode<synchronous>, transform_indices = @transform_5, window_bounds = array<i64: 256, 128>}, {pipeline_mode = #tpu.pipeline_mode<synchronous>, transform_indices = @transform_6, window_bounds = array<i64: 1, 128>}, {pipeline_mode = #tpu.pipeline_mode<synchronous>, transform_indices = @transform_7, window_bounds = array<i64: 128, 64>}, {pipeline_mode = #tpu.pipeline_mode<synchronous>, transform_indices = @transform_8, window_bounds = array<i64: 1, 64>}, {pipeline_mode = #tpu.pipeline_mode<synchronous>, transform_indices = @transform_9, window_bounds = array<i64: 1, 64>}, {pipeline_mode = #tpu.pipeline_mode<synchronous>, transform_indices = @transform_10, window_bounds = array<i64: 1, 1>}, {transform_indices = @transform_11, window_bounds = array<i64: 1, 1, 256>}]} {
    %c0 = arith.constant 0 : index
    %c0_0 = arith.constant 0 : index
    %0 = vector.load %arg1[%c0, %c0_0] : memref<256x18xf32, #tpu.memory_space<vmem>>, vector<256x18xf32>
    %c0_1 = arith.constant 0 : index
    %c0_2 = arith.constant 0 : index
    %1 = vector.load %arg2[%c0_1, %c0_2] : memref<18x640xf32, #tpu.memory_space<vmem>>, vector<18x640xf32>
    %cst = arith.constant dense<0.000000e+00> : vector<256x640xf32>
    %2 = tpu.matmul %0, %1, %cst {dimension_numbers = #tpu.dot_dimension_numbers<[1], [0], [0], [1], [0, 0, 1, 1], [], []>} : vector<256x18xf32>, vector<18x640xf32>, vector<256x640xf32> -> vector<256x640xf32>
    %3 = vector.extract_strided_slice %2 {offsets = [0, 0], sizes = [256, 512], strides = [1, 1]} : vector<256x640xf32> to vector<256x512xf32>
    %c0_3 = arith.constant 0 : index
    %c0_4 = arith.constant 0 : index
    %4 = vector.load %arg3[%c0_3, %c0_4] : memref<1x512xf32, #tpu.memory_space<vmem>>, vector<1x512xf32>
    %5 = vector.broadcast %4 : vector<1x512xf32> to vector<256x512xf32>
    %6 = arith.addf %3, %5 : vector<256x512xf32>
    %cst_5 = arith.constant 0.000000e+00 : f32
    %7 = vector.broadcast %cst_5 : f32 to vector<256x512xf32>
    %8 = arith.maximumf %6, %7 : vector<256x512xf32>
    %9 = vector.extract_strided_slice %2 {offsets = [0, 512], sizes = [256, 128], strides = [1, 1]} : vector<256x640xf32> to vector<256x128xf32>
    %c0_6 = arith.constant 0 : index
    %c0_7 = arith.constant 0 : index
    %10 = vector.load %arg4[%c0_6, %c0_7] : memref<512x256xf32, #tpu.memory_space<vmem>>, vector<512x256xf32>
    %cst_8 = arith.constant dense<0.000000e+00> : vector<256x256xf32>
    %11 = tpu.matmul %8, %10, %cst_8 {dimension_numbers = #tpu.dot_dimension_numbers<[1], [0], [0], [1], [0, 0, 1, 1], [], []>} : vector<256x512xf32>, vector<512x256xf32>, vector<256x256xf32> -> vector<256x256xf32>
    %c0_9 = arith.constant 0 : index
    %c0_10 = arith.constant 0 : index
    %12 = vector.load %arg5[%c0_9, %c0_10] : memref<1x256xf32, #tpu.memory_space<vmem>>, vector<1x256xf32>
    %13 = vector.broadcast %12 : vector<1x256xf32> to vector<256x256xf32>
    %14 = arith.addf %11, %13 : vector<256x256xf32>
    %cst_11 = arith.constant 0.000000e+00 : f32
    %15 = vector.broadcast %cst_11 : f32 to vector<256x256xf32>
    %16 = arith.maximumf %14, %15 : vector<256x256xf32>
    %c0_12 = arith.constant 0 : index
    %c0_13 = arith.constant 0 : index
    %17 = vector.load %arg6[%c0_12, %c0_13] : memref<256x128xf32, #tpu.memory_space<vmem>>, vector<256x128xf32>
    %cst_14 = arith.constant dense<0.000000e+00> : vector<256x128xf32>
    %18 = tpu.matmul %16, %17, %cst_14 {dimension_numbers = #tpu.dot_dimension_numbers<[1], [0], [0], [1], [0, 0, 1, 1], [], []>} : vector<256x256xf32>, vector<256x128xf32>, vector<256x128xf32> -> vector<256x128xf32>
    %19 = arith.addf %18, %9 : vector<256x128xf32>
    %c0_15 = arith.constant 0 : index
    %c0_16 = arith.constant 0 : index
    %20 = vector.load %arg7[%c0_15, %c0_16] : memref<1x128xf32, #tpu.memory_space<vmem>>, vector<1x128xf32>
    %21 = vector.broadcast %20 : vector<1x128xf32> to vector<256x128xf32>
    %22 = arith.addf %19, %21 : vector<256x128xf32>
    %cst_17 = arith.constant 0.000000e+00 : f32
    %23 = vector.broadcast %cst_17 : f32 to vector<256x128xf32>
    %24 = arith.maximumf %22, %23 : vector<256x128xf32>
    %c0_18 = arith.constant 0 : index
    %c0_19 = arith.constant 0 : index
    %25 = vector.load %arg8[%c0_18, %c0_19] : memref<128x64xf32, #tpu.memory_space<vmem>>, vector<128x64xf32>
    %cst_20 = arith.constant dense<0.000000e+00> : vector<256x64xf32>
    %26 = tpu.matmul %24, %25, %cst_20 {dimension_numbers = #tpu.dot_dimension_numbers<[1], [0], [0], [1], [0, 0, 1, 1], [], []>} : vector<256x128xf32>, vector<128x64xf32>, vector<256x64xf32> -> vector<256x64xf32>
    %c0_21 = arith.constant 0 : index
    %c0_22 = arith.constant 0 : index
    %27 = vector.load %arg9[%c0_21, %c0_22] : memref<1x64xf32, #tpu.memory_space<vmem>>, vector<1x64xf32>
    %28 = vector.broadcast %27 : vector<1x64xf32> to vector<256x64xf32>
    %29 = arith.addf %26, %28 : vector<256x64xf32>
    %cst_23 = arith.constant 0.000000e+00 : f32
    %30 = vector.broadcast %cst_23 : f32 to vector<256x64xf32>
    %31 = arith.maximumf %29, %30 : vector<256x64xf32>
    %c0_24 = arith.constant 0 : index
    %c0_25 = arith.constant 0 : index
    %32 = vector.load %arg10[%c0_24, %c0_25] : memref<1x64xf32, #tpu.memory_space<vmem>>, vector<1x64xf32>
    %cst_26 = arith.constant dense<0.000000e+00> : vector<1x256xf32>
    %33 = tpu.matmul %32, %31, %cst_26 {dimension_numbers = #tpu.dot_dimension_numbers<[1], [1], [0], [0], [0, 0, 1, 0], [], []>} : vector<1x64xf32>, vector<256x64xf32>, vector<1x256xf32> -> vector<1x256xf32>
    %c0_27 = arith.constant 0 : index
    %c0_28 = arith.constant 0 : index
    %34 = vector.load %arg11[%c0_27, %c0_28] : memref<1x1xf32, #tpu.memory_space<vmem>>, vector<1x1xf32>
    %35 = vector.broadcast %34 : vector<1x1xf32> to vector<1x256xf32>
    %36 = arith.addf %33, %35 : vector<1x256xf32>
    %37 = math.absf %36 : vector<1x256xf32>
    %38 = vector.shape_cast %37 : vector<1x256xf32> to vector<1x1x256xf32>
    %c0_29 = arith.constant 0 : index
    %c0_30 = arith.constant 0 : index
    %c0_31 = arith.constant 0 : index
    %39 = vector.load %arg12[%c0_29, %c0_30, %c0_31] : memref<1x1x256xf32, #tpu.memory_space<vmem>>, vector<1x1x256xf32>
    tpu.vector_store %arg12[%c0_29, %c0_30, %c0_31], %38 {strides = array<i32>} : memref<1x1x256xf32, #tpu.memory_space<vmem>>, vector<1x1x256xf32>,
    return
  }
  func.func @transform_0(%arg0: i32) -> (i32, i32) {
    %c0_i32 = arith.constant 0 : i32
    %c0_i32_0 = arith.constant 0 : i32
    return %arg0, %c0_i32 : i32, i32
  }
  func.func @transform_1(%arg0: i32) -> (i32, i32) {
    %c0_i32 = arith.constant 0 : i32
    %c0_i32_0 = arith.constant 0 : i32
    %c0_i32_1 = arith.constant 0 : i32
    return %c0_i32, %c0_i32_0 : i32, i32
  }
  func.func @transform_2(%arg0: i32) -> (i32, i32) {
    %c0_i32 = arith.constant 0 : i32
    %c0_i32_0 = arith.constant 0 : i32
    %c0_i32_1 = arith.constant 0 : i32
    return %c0_i32, %c0_i32_0 : i32, i32
  }
  func.func @transform_3(%arg0: i32) -> (i32, i32) {
    %c0_i32 = arith.constant 0 : i32
    %c0_i32_0 = arith.constant 0 : i32
    %c0_i32_1 = arith.constant 0 : i32
    return %c0_i32, %c0_i32_0 : i32, i32
  }
  func.func @transform_4(%arg0: i32) -> (i32, i32) {
    %c0_i32 = arith.constant 0 : i32
    %c0_i32_0 = arith.constant 0 : i32
    %c0_i32_1 = arith.constant 0 : i32
    return %c0_i32, %c0_i32_0 : i32, i32
  }
  func.func @transform_5(%arg0: i32) -> (i32, i32) {
    %c0_i32 = arith.constant 0 : i32
    %c0_i32_0 = arith.constant 0 : i32
    %c0_i32_1 = arith.constant 0 : i32
    return %c0_i32, %c0_i32_0 : i32, i32
  }
  func.func @transform_6(%arg0: i32) -> (i32, i32) {
    %c0_i32 = arith.constant 0 : i32
    %c0_i32_0 = arith.constant 0 : i32
    %c0_i32_1 = arith.constant 0 : i32
    return %c0_i32, %c0_i32_0 : i32, i32
  }
  func.func @transform_7(%arg0: i32) -> (i32, i32) {
    %c0_i32 = arith.constant 0 : i32
    %c0_i32_0 = arith.constant 0 : i32
    %c0_i32_1 = arith.constant 0 : i32
    return %c0_i32, %c0_i32_0 : i32, i32
  }
  func.func @transform_8(%arg0: i32) -> (i32, i32) {
    %c0_i32 = arith.constant 0 : i32
    %c0_i32_0 = arith.constant 0 : i32
    %c0_i32_1 = arith.constant 0 : i32
    return %c0_i32, %c0_i32_0 : i32, i32
  }
  func.func @transform_9(%arg0: i32) -> (i32, i32) {
    %c0_i32 = arith.constant 0 : i32
    %c0_i32_0 = arith.constant 0 : i32
    %c0_i32_1 = arith.constant 0 : i32
    return %c0_i32, %c0_i32_0 : i32, i32
  }
  func.func @transform_10(%arg0: i32) -> (i32, i32) {
    %c0_i32 = arith.constant 0 : i32
    %c0_i32_0 = arith.constant 0 : i32
    %c0_i32_1 = arith.constant 0 : i32
    return %c0_i32, %c0_i32_0 : i32, i32
  }
  func.func @transform_11(%arg0: i32) -> (i32, i32, i32) {
    %c0_i32 = arith.constant 0 : i32
    %c0_i32_0 = arith.constant 0 : i32
    %c0_i32_1 = arith.constant 0 : i32
    return %arg0, %c0_i32, %c0_i32_0 : i32, i32, i32
  }
}

</mosaic_0001>

<llo_original>
// kernel: tpu_custom_call.1
$region0: #{tpu_custom_call.1}
  #allocation0 [shape = 'u32[]', space=smem, size = 0x4, offset = 0x4, fixed_abs, tag = 'smem constant byte address 0x4 - core index']
  #allocation1 [shape = 'u32[72,128]{1,0:T(1,128)}', space=vmem, size = 0x9000, scoped, tag = 'internal scratch']
  #allocation2 [shape = 'f32[1,1]{1,0:T(1,128)S(1)}', space=vmem, size = 0x200, scoped, tag = 'scoped memory for tpu_custom_call.1']
  %s0 = inlined_call_operand.vmem [shape: f32[256,18], index: 0, kind: input, shape index: {}]
  %s1 = inlined_call_operand.vmem [shape: f32[18,640], index: 1, kind: input, shape index: {}]
  %s2 = inlined_call_operand.vmem [shape: f32[1,512], index: 2, kind: input, shape index: {}]
  %s3 = inlined_call_operand.hbm [shape: f32[512,256], index: 3, kind: input, shape index: {}]
  %s4 = inlined_call_operand.vmem [shape: f32[1,256], index: 4, kind: input, shape index: {}]
  %s5 = inlined_call_operand.vmem [shape: f32[256,128], index: 5, kind: input, shape index: {}]
  %s6 = inlined_call_operand.vmem [shape: f32[1,128], index: 6, kind: input, shape index: {}]
  %s7 = inlined_call_operand.vmem [shape: f32[128,64], index: 7, kind: input, shape index: {}]
  %s8 = inlined_call_operand.vmem [shape: f32[1,64], index: 8, kind: input, shape index: {}]
  %s9 = inlined_call_operand.vmem [shape: f32[1,64], index: 9, kind: input, shape index: {}]
  %s10 = inlined_call_operand.<no memory space> [shape: f32[1,1], index: 10, kind: input, shape index: {}]
  %s11 = inlined_call_operand.hbm [shape: f32[1,1,256], index: 11, kind: output, shape index: {}]
  %s12 = sld [smem:[#allocation0]]
  $region58: #{tpu_custom_call.1} parent=0
    _
  %s14 = ssub.s32 1, %s12
  %s15 = scalar_select 0, %s14, %s12
  %v16 = vstv %s10
  %17 = vst [vmem:[#allocation2] sm:$0x1] %v16
  $region1: #{tpu_custom_call.1} parent=0
    #allocation3 [shape = 'u8[524288]{0}', space=vmem, size = 0x80000, scoped, tag = 'input window, operand 3, single buffered']
    #allocation4 [shape = 's32[1]{0}', space=sflag, size = 0x4, scoped, tag = 'scoped memory for tpu_custom_call.1']
    #allocation5 [shape = 's32[1]{0}', space=sflag, size = 0x4, scoped, tag = 'scoped memory for tpu_custom_call.1']
    #allocation6 [shape = 'u8[1024]{0}', space=vmem, size = 0x400, scoped, tag = 'output window, operand 0, single buffered']
    %18 = vsyncpa [#allocation4], 0
    %19 = vsyncpa [#allocation5], 0
    // Predicated region
    $region2: #{tpu_custom_call.1} parent=1 // pred_check
      _
    $region3: #{tpu_custom_call.1} parent=1 // pred_check_branch
      %21 = sbr.rel (0) target = $region5
    $region4: #{tpu_custom_call.1} parent=1 // pred_region
      _
    $region5: #{tpu_custom_call.1} parent=1 // pred_fallthru
      _
    // Predicated region
    $region6: #{tpu_custom_call.1} parent=1 // pred_check
      _
    $region7: #{tpu_custom_call.1} parent=1 // pred_check_branch
      %23 = sbr.rel (0) target = $region9
    $region8: #{tpu_custom_call.1} parent=1 // pred_region
      _
    $region9: #{tpu_custom_call.1} parent=1 // pred_fallthru
      _
    // Predicated region
    $region10: #{tpu_custom_call.1} parent=1 // pred_check
      _
    $region11: #{tpu_custom_call.1} parent=1 // pred_check_branch
      %25 = sbr.rel (0) target = $region13
    $region12: #{tpu_custom_call.1} parent=1 // pred_region
      _
    $region13: #{tpu_custom_call.1} parent=1 // pred_fallthru
      _
    // Predicated region
    $region14: #{tpu_custom_call.1} parent=1 // pred_check
      _
    $region15: #{tpu_custom_call.1} parent=1 // pred_check_branch
      %27 = sbr.rel (0) target = $region17
    $region16: #{tpu_custom_call.1} parent=1 // pred_region
      %29 = vsyncadd [#allocation4], 0
      %s30 = sshll.u32 %s3, 4
      %s31 = int_to_ptr.hbm [resolvable:$true] %s30
      %s32 = sshll.u32 [#allocation3], 4
      %s33 = int_to_ptr.vmem [resolvable:$true] %s32
      %38 = dma.hbm_to_vmem [thread:$0]  %s31, 16384, %s33, [#allocation4], 256, 256, 16
    $region17: #{tpu_custom_call.1} parent=1 // pred_fallthru
      _
    // Predicated region
    $region18: #{tpu_custom_call.1} parent=1 // pred_check
      _
    $region19: #{tpu_custom_call.1} parent=1 // pred_check_branch
      %40 = sbr.rel (0) target = $region21
    $region20: #{tpu_custom_call.1} parent=1 // pred_region
      _
    $region21: #{tpu_custom_call.1} parent=1 // pred_fallthru
      _
    // Predicated region
    $region22: #{tpu_custom_call.1} parent=1 // pred_check
      _
    $region23: #{tpu_custom_call.1} parent=1 // pred_check_branch
      %42 = sbr.rel (0) target = $region25
    $region24: #{tpu_custom_call.1} parent=1 // pred_region
      _
    $region25: #{tpu_custom_call.1} parent=1 // pred_fallthru
      _
    // Predicated region
    $region26: #{tpu_custom_call.1} parent=1 // pred_check
      _
    $region27: #{tpu_custom_call.1} parent=1 // pred_check_branch
      %44 = sbr.rel (0) target = $region29
    $region28: #{tpu_custom_call.1} parent=1 // pred_region
      _
    $region29: #{tpu_custom_call.1} parent=1 // pred_fallthru
      _
    // Predicated region
    $region30: #{tpu_custom_call.1} parent=1 // pred_check
      _
    $region31: #{tpu_custom_call.1} parent=1 // pred_check_branch
      %46 = sbr.rel (0) target = $region33
    $region32: #{tpu_custom_call.1} parent=1 // pred_region
      _
    $region33: #{tpu_custom_call.1} parent=1 // pred_fallthru
      _
    // Predicated region
    $region34: #{tpu_custom_call.1} parent=1 // pred_check
      _
    $region35: #{tpu_custom_call.1} parent=1 // pred_check_branch
      %48 = sbr.rel (0) target = $region37
    $region36: #{tpu_custom_call.1} parent=1 // pred_region
      _
    $region37: #{tpu_custom_call.1} parent=1 // pred_fallthru
      _
    // Predicated region
    $region38: #{tpu_custom_call.1} parent=1 // pred_check
      _
    $region39: #{tpu_custom_call.1} parent=1 // pred_check_branch
      %50 = sbr.rel (0) target = $region41
    $region40: #{tpu_custom_call.1} parent=1 // pred_region
      _
    $region41: #{tpu_custom_call.1} parent=1 // pred_fallthru
      _
    // Predicated region
    $region42: #{tpu_custom_call.1} parent=1 // pred_check
      _
    $region43: #{tpu_custom_call.1} parent=1 // pred_check_branch
      %52 = sbr.rel (0) target = $region45
    $region44: #{tpu_custom_call.1} parent=1 // pred_region
      _
    $region45: #{tpu_custom_call.1} parent=1 // pred_fallthru
      _
    // Predicated region
    $region46: #{tpu_custom_call.1} parent=1 // pred_check
      _
    $region47: #{tpu_custom_call.1} parent=1 // pred_check_branch
      %54 = sbr.rel (0) target = $region49
    $region48: #{tpu_custom_call.1} parent=1 // pred_region
      %56 = dma.done [#allocation4], 16384
    $region49: #{tpu_custom_call.1} parent=1 // pred_fallthru
      _
    %v57 = vld [vmem:[%s0] sm:$0xff]
    %v58 = vld [vmem:[%s0 + $0x8] sm:$0xff]
    %v59 = vld [vmem:[%s0 + $0x10] sm:$0xff]
    %v60 = vld [vmem:[%s0 + $0x18] sm:$0xff]
    %v61 = vld [vmem:[%s0 + $0x20] sm:$0xff]
    %v62 = vld [vmem:[%s0 + $0x28] sm:$0xff]
    %v63 = vld [vmem:[%s0 + $0x30] sm:$0xff]
    %v64 = vld [vmem:[%s0 + $0x38] sm:$0xff]
    %v65 = vld [vmem:[%s0 + $0x40] sm:$0xff]
    %v66 = vld [vmem:[%s0 + $0x48] sm:$0xff]
    %v67 = vld [vmem:[%s0 + $0x50] sm:$0xff]
    %v68 = vld [vmem:[%s0 + $0x58] sm:$0xff]
    %v69 = vld [vmem:[%s0 + $0x60] sm:$0xff]
    %v70 = vld [vmem:[%s0 + $0x68] sm:$0xff]
    %v71 = vld [vmem:[%s0 + $0x70] sm:$0xff]
    %v72 = vld [vmem:[%s0 + $0x78] sm:$0xff]
    %v73 = vld [vmem:[%s0 + $0x80] sm:$0xff]
    %v74 = vld [vmem:[%s0 + $0x88] sm:$0xff]
    %v75 = vld [vmem:[%s0 + $0x90] sm:$0xff]
    %v76 = vld [vmem:[%s0 + $0x98] sm:$0xff]
    %v77 = vld [vmem:[%s0 + $0xa0] sm:$0xff]
    %v78 = vld [vmem:[%s0 + $0xa8] sm:$0xff]
    %v79 = vld [vmem:[%s0 + $0xb0] sm:$0xff]
    %v80 = vld [vmem:[%s0 + $0xb8] sm:$0xff]
    %v81 = vld [vmem:[%s0 + $0xc0] sm:$0xff]
    %v82 = vld [vmem:[%s0 + $0xc8] sm:$0xff]
    %v83 = vld [vmem:[%s0 + $0xd0] sm:$0xff]
    %v84 = vld [vmem:[%s0 + $0xd8] sm:$0xff]
    %v85 = vld [vmem:[%s0 + $0xe0] sm:$0xff]
    %v86 = vld [vmem:[%s0 + $0xe8] sm:$0xff]
    %v87 = vld [vmem:[%s0 + $0xf0] sm:$0xff]
    %v88 = vld [vmem:[%s0 + $0xf8] sm:$0xff]
    %v89 = vld [vmem:[%s1] sm:$0xff]
    %v90 = vld [vmem:[%s1 + $0x8] sm:$0xff]
    %v91 = vld [vmem:[%s1 + $0x10] sm:$0xff]
    %v92 = vld [vmem:[%s1 + $0x18] sm:$0xff]
    %v93 = vld [vmem:[%s1 + $0x20] sm:$0xff]
    %v94 = vld [vmem:[%s1 + $0x28] sm:$0xff]
    %v95 = vld [vmem:[%s1 + $0x30] sm:$0xff]
    %v96 = vld [vmem:[%s1 + $0x38] sm:$0xff]
    %v97 = vld [vmem:[%s1 + $0x40] sm:$0xff]
    %v98 = vld [vmem:[%s1 + $0x48] sm:$0xff]
    %v99 = vld [vmem:[%s1 + $0x50] sm:$0x3]
    %v100 = vld [vmem:[%s1 + $0x58] sm:$0x3]
    %v101 = vld [vmem:[%s1 + $0x60] sm:$0x3]
    %v102 = vld [vmem:[%s1 + $0x68] sm:$0x3]
    %v103 = vld [vmem:[%s1 + $0x70] sm:$0x3]
    %vm104 = vcmask 146432
    %v106 = vsel %vm104, %v57, 0
    %v109 = vsel %vm104, %v58, 0
    %v112 = vsel %vm104, %v59, 0
    %v115 = vsel %vm104, %v60, 0
    %v118 = vsel %vm104, %v61, 0
    %v121 = vsel %vm104, %v62, 0
    %v124 = vsel %vm104, %v63, 0
    %v127 = vsel %vm104, %v64, 0
    %v130 = vsel %vm104, %v65, 0
    %v133 = vsel %vm104, %v66, 0
    %v136 = vsel %vm104, %v67, 0
    %v139 = vsel %vm104, %v68, 0
    %v142 = vsel %vm104, %v69, 0
    %v145 = vsel %vm104, %v70, 0
    %v148 = vsel %vm104, %v71, 0
    %v151 = vsel %vm104, %v72, 0
    %v154 = vsel %vm104, %v73, 0
    %v157 = vsel %vm104, %v74, 0
    %v160 = vsel %vm104, %v75, 0
    %v163 = vsel %vm104, %v76, 0
    %v166 = vsel %vm104, %v77, 0
    %v169 = vsel %vm104, %v78, 0
    %v172 = vsel %vm104, %v79, 0
    %v175 = vsel %vm104, %v80, 0
    %v178 = vsel %vm104, %v81, 0
    %v181 = vsel %vm104, %v82, 0
    %v184 = vsel %vm104, %v83, 0
    %v187 = vsel %vm104, %v84, 0
    %v190 = vsel %vm104, %v85, 0
    %v193 = vsel %vm104, %v86, 0
    %v196 = vsel %vm104, %v87, 0
    %v199 = vsel %vm104, %v88, 0
    %vm201 = vcmask 1041408
    %v203 = vsel %vm201, %v99, 0
    %v206 = vsel %vm201, %v100, 0
    %v209 = vsel %vm201, %v101, 0
    %v212 = vsel %vm201, %v102, 0
    %v215 = vsel %vm201, %v103, 0
    %217 = vmatpush.msra.mxu0 0.0
    %218 = vmatpush.msra.mxu0 0.0
    %219 = vmatpush.msra.mxu0 0.0
    %220 = vmatpush.msra.mxu0 0.0
    %221 = vmatpush.msra.mxu0 0.0
    %222 = vmatpush.msra.mxu0 0.0
    %223 = vmatpush.msra.mxu0 0.0
    %224 = vmatpush.msra.mxu0 0.0
    %225 = vmatpush.msra.mxu0 0.0
    %226 = vmatpush.msra.mxu0 0.0
    %227 = vmatpush.msra.mxu0 0.0
    %228 = vmatpush.msra.mxu0 0.0
    %229 = vmatpush.msra.mxu0 0.0
    %230 = vmatpush.msra.mxu0 %v203
    %231 = vmatpush.msra.mxu0 %v94
    %232 = vmatpush.msra.mxu0 %v89
    %233 = vmatmul.f32.gmra.mxu0 %v106
    %v234 = vpop.f32.mrf.mxu0
    %v235 = vadd.f32 0.0, %v234
    %236 = vmatmul.f32.gmra.mxu0 %v109
    %v237 = vpop.f32.mrf.mxu0
    %v238 = vadd.f32 0.0, %v237
    %239 = vmatmul.f32.gmra.mxu0 %v112
    %v240 = vpop.f32.mrf.mxu0
    %v241 = vadd.f32 0.0, %v240
    %242 = vmatmul.f32.gmra.mxu0 %v115
    %v243 = vpop.f32.mrf.mxu0
    %v244 = vadd.f32 0.0, %v243
    %245 = vmatmul.f32.gmra.mxu0 %v118
    %v246 = vpop.f32.mrf.mxu0
    %v247 = vadd.f32 0.0, %v246
    %248 = vmatmul.f32.gmra.mxu0 %v121
    %v249 = vpop.f32.mrf.mxu0
    %v250 = vadd.f32 0.0, %v249
    %251 = vmatmul.f32.gmra.mxu0 %v124
    %v252 = vpop.f32.mrf.mxu0
    %v253 = vadd.f32 0.0, %v252
    %254 = vmatmul.f32.gmra.mxu0 %v127
    %v255 = vpop.f32.mrf.mxu0
    %v256 = vadd.f32 0.0, %v255
    %257 = vmatmul.f32.gmra.mxu0 %v130
    %v258 = vpop.f32.mrf.mxu0
    %v259 = vadd.f32 0.0, %v258
    %260 = vmatmul.f32.gmra.mxu0 %v133
    %v261 = vpop.f32.mrf.mxu0
    %v262 = vadd.f32 0.0, %v261
    %263 = vmatmul.f32.gmra.mxu0 %v136
    %v264 = vpop.f32.mrf.mxu0
    %v265 = vadd.f32 0.0, %v264
    %266 = vmatmul.f32.gmra.mxu0 %v139
    %v267 = vpop.f32.mrf.mxu0
    %v268 = vadd.f32 0.0, %v267
    %269 = vmatmul.f32.gmra.mxu0 %v142
    %v270 = vpop.f32.mrf.mxu0
    %v271 = vadd.f32 0.0, %v270
    %272 = vmatmul.f32.gmra.mxu0 %v145
    %v273 = vpop.f32.mrf.mxu0
    %v274 = vadd.f32 0.0, %v273
    %275 = vmatmul.f32.gmra.mxu0 %v148
    %v276 = vpop.f32.mrf.mxu0
    %v277 = vadd.f32 0.0, %v276
    %278 = vmatmul.f32.gmra.mxu0 %v151
    %v279 = vpop.f32.mrf.mxu0
    %v280 = vadd.f32 0.0, %v279
    %281 = vmatmul.f32.gmra.mxu0 %v154
    %v282 = vpop.f32.mrf.mxu0
    %v283 = vadd.f32 0.0, %v282
    %284 = vmatmul.f32.gmra.mxu0 %v157
    %v285 = vpop.f32.mrf.mxu0
    %v286 = vadd.f32 0.0, %v285
    %287 = vmatmul.f32.gmra.mxu0 %v160
    %v288 = vpop.f32.mrf.mxu0
    %v289 = vadd.f32 0.0, %v288
    %290 = vmatmul.f32.gmra.mxu0 %v163
    %v291 = vpop.f32.mrf.mxu0
    %v292 = vadd.f32 0.0, %v291
    %293 = vmatmul.f32.gmra.mxu0 %v166
    %v294 = vpop.f32.mrf.mxu0
    %v295 = vadd.f32 0.0, %v294
    %296 = vmatmul.f32.gmra.mxu0 %v169
    %v297 = vpop.f32.mrf.mxu0
    %v298 = vadd.f32 0.0, %v297
    %299 = vmatmul.f32.gmra.mxu0 %v172
    %v300 = vpop.f32.mrf.mxu0
    %v301 = vadd.f32 0.0, %v300
    %302 = vmatmul.f32.gmra.mxu0 %v175
    %v303 = vpop.f32.mrf.mxu0
    %v304 = vadd.f32 0.0, %v303
    %305 = vmatmul.f32.gmra.mxu0 %v178
    %v306 = vpop.f32.mrf.mxu0
    %v307 = vadd.f32 0.0, %v306
    %308 = vmatmul.f32.gmra.mxu0 %v181
    %v309 = vpop.f32.mrf.mxu0
    %v310 = vadd.f32 0.0, %v309
    %311 = vmatmul.f32.gmra.mxu0 %v184
    %v312 = vpop.f32.mrf.mxu0
    %v313 = vadd.f32 0.0, %v312
    %314 = vmatmul.f32.gmra.mxu0 %v187
    %v315 = vpop.f32.mrf.mxu0
    %v316 = vadd.f32 0.0, %v315
    %317 = vmatmul.f32.gmra.mxu0 %v190
    %v318 = vpop.f32.mrf.mxu0
    %v319 = vadd.f32 0.0, %v318
    %320 = vmatmul.f32.gmra.mxu0 %v193
    %v321 = vpop.f32.mrf.mxu0
    %v322 = vadd.f32 0.0, %v321
    %323 = vmatmul.f32.gmra.mxu0 %v196
    %v324 = vpop.f32.mrf.mxu0
    %v325 = vadd.f32 0.0, %v324
    %326 = vmatmul.f32.gmra.mxu0 %v199
    %v327 = vpop.f32.mrf.mxu0
    %v328 = vadd.f32 0.0, %v327
    %329 = vdwg.mxu0
    %330 = vmatpush.msra.mxu0 0.0
    %331 = vmatpush.msra.mxu0 0.0
    %332 = vmatpush.msra.mxu0 0.0
    %333 = vmatpush.msra.mxu0 0.0
    %334 = vmatpush.msra.mxu0 0.0
    %335 = vmatpush.msra.mxu0 0.0
    %336 = vmatpush.msra.mxu0 0.0
    %337 = vmatpush.msra.mxu0 0.0
    %338 = vmatpush.msra.mxu0 0.0
    %339 = vmatpush.msra.mxu0 0.0
    %340 = vmatpush.msra.mxu0 0.0
    %341 = vmatpush.msra.mxu0 0.0
    %342 = vmatpush.msra.mxu0 0.0
    %343 = vmatpush.msra.mxu0 %v206
    %344 = vmatpush.msra.mxu0 %v95
    %345 = vmatpush.msra.mxu0 %v90
    %346 = vmatmul.f32.gmra.mxu0 %v106
    %v347 = vpop.f32.mrf.mxu0
    %v348 = vadd.f32 0.0, %v347
    %349 = vmatmul.f32.gmra.mxu0 %v109
    %v350 = vpop.f32.mrf.mxu0
    %v351 = vadd.f32 0.0, %v350
    %352 = vmatmul.f32.gmra.mxu0 %v112
    %v353 = vpop.f32.mrf.mxu0
    %v354 = vadd.f32 0.0, %v353
    %355 = vmatmul.f32.gmra.mxu0 %v115
    %v356 = vpop.f32.mrf.mxu0
    %v357 = vadd.f32 0.0, %v356
    %358 = vmatmul.f32.gmra.mxu0 %v118
    %v359 = vpop.f32.mrf.mxu0
    %v360 = vadd.f32 0.0, %v359
    %361 = vmatmul.f32.gmra.mxu0 %v121
    %v362 = vpop.f32.mrf.mxu0
    %v363 = vadd.f32 0.0, %v362
    %364 = vmatmul.f32.gmra.mxu0 %v124
    %v365 = vpop.f32.mrf.mxu0
    %v366 = vadd.f32 0.0, %v365
    %367 = vmatmul.f32.gmra.mxu0 %v127
    %v368 = vpop.f32.mrf.mxu0
    %v369 = vadd.f32 0.0, %v368
    %370 = vmatmul.f32.gmra.mxu0 %v130
    %v371 = vpop.f32.mrf.mxu0
    %v372 = vadd.f32 0.0, %v371
    %373 = vmatmul.f32.gmra.mxu0 %v133
    %v374 = vpop.f32.mrf.mxu0
    %v375 = vadd.f32 0.0, %v374
    %376 = vmatmul.f32.gmra.mxu0 %v136
    %v377 = vpop.f32.mrf.mxu0
    %v378 = vadd.f32 0.0, %v377
    %379 = vmatmul.f32.gmra.mxu0 %v139
    %v380 = vpop.f32.mrf.mxu0
    %v381 = vadd.f32 0.0, %v380
    %382 = vmatmul.f32.gmra.mxu0 %v142
    %v383 = vpop.f32.mrf.mxu0
    %v384 = vadd.f32 0.0, %v383
    %385 = vmatmul.f32.gmra.mxu0 %v145
    %v386 = vpop.f32.mrf.mxu0
    %v387 = vadd.f32 0.0, %v386
    %388 = vmatmul.f32.gmra.mxu0 %v148
    %v389 = vpop.f32.mrf.mxu0
    %v390 = vadd.f32 0.0, %v389
    %391 = vmatmul.f32.gmra.mxu0 %v151
    %v392 = vpop.f32.mrf.mxu0
    %v393 = vadd.f32 0.0, %v392
    %394 = vmatmul.f32.gmra.mxu0 %v154
    %v395 = vpop.f32.mrf.mxu0
    %v396 = vadd.f32 0.0, %v395
    %397 = vmatmul.f32.gmra.mxu0 %v157
    %v398 = vpop.f32.mrf.mxu0
    %v399 = vadd.f32 0.0, %v398
    %400 = vmatmul.f32.gmra.mxu0 %v160
    %v401 = vpop.f32.mrf.mxu0
    %v402 = vadd.f32 0.0, %v401
    %403 = vmatmul.f32.gmra.mxu0 %v163
    %v404 = vpop.f32.mrf.mxu0
    %v405 = vadd.f32 0.0, %v404
    %406 = vmatmul.f32.gmra.mxu0 %v166
    %v407 = vpop.f32.mrf.mxu0
    %v408 = vadd.f32 0.0, %v407
    %409 = vmatmul.f32.gmra.mxu0 %v169
    %v410 = vpop.f32.mrf.mxu0
    %v411 = vadd.f32 0.0, %v410
    %412 = vmatmul.f32.gmra.mxu0 %v172
    %v413 = vpop.f32.mrf.mxu0
    %v414 = vadd.f32 0.0, %v413
    %415 = vmatmul.f32.gmra.mxu0 %v175
    %v416 = vpop.f32.mrf.mxu0
    %v417 = vadd.f32 0.0, %v416
    %418 = vmatmul.f32.gmra.mxu0 %v178
    %v419 = vpop.f32.mrf.mxu0
    %v420 = vadd.f32 0.0, %v419
    %421 = vmatmul.f32.gmra.mxu0 %v181
    %v422 = vpop.f32.mrf.mxu0
    %v423 = vadd.f32 0.0, %v422
    %424 = vmatmul.f32.gmra.mxu0 %v184
    %v425 = vpop.f32.mrf.mxu0
    %v426 = vadd.f32 0.0, %v425
    %427 = vmatmul.f32.gmra.mxu0 %v187
    %v428 = vpop.f32.mrf.mxu0
    %v429 = vadd.f32 0.0, %v428
    %430 = vmatmul.f32.gmra.mxu0 %v190
    %v431 = vpop.f32.mrf.mxu0
    %v432 = vadd.f32 0.0, %v431
    %433 = vmatmul.f32.gmra.mxu0 %v193
    %v434 = vpop.f32.mrf.mxu0
    %v435 = vadd.f32 0.0, %v434
    %436 = vmatmul.f32.gmra.mxu0 %v196
    %v437 = vpop.f32.mrf.mxu0
    %v438 = vadd.f32 0.0, %v437
    %439 = vmatmul.f32.gmra.mxu0 %v199
    %v440 = vpop.f32.mrf.mxu0
    %v441 = vadd.f32 0.0, %v440
    %442 = vdwg.mxu0
    %443 = vmatpush.msra.mxu0 0.0
    %444 = vmatpush.msra.mxu0 0.0
    %445 = vmatpush.msra.mxu0 0.0
    %446 = vmatpush.msra.mxu0 0.0
    %447 = vmatpush.msra.mxu0 0.0
    %448 = vmatpush.msra.mxu0 0.0
    %449 = vmatpush.msra.mxu0 0.0
    %450 = vmatpush.msra.mxu0 0.0
    %451 = vmatpush.msra.mxu0 0.0
    %452 = vmatpush.msra.mxu0 0.0
    %453 = vmatpush.msra.mxu0 0.0
    %454 = vmatpush.msra.mxu0 0.0
    %455 = vmatpush.msra.mxu0 0.0
    %456 = vmatpush.msra.mxu0 %v209
    %457 = vmatpush.msra.mxu0 %v96
    %458 = vmatpush.msra.mxu0 %v91
    %459 = vmatmul.f32.gmra.mxu0 %v106
    %v460 = vpop.f32.mrf.mxu0
    %v461 = vadd.f32 0.0, %v460
    %462 = vmatmul.f32.gmra.mxu0 %v109
    %v463 = vpop.f32.mrf.mxu0
    %v464 = vadd.f32 0.0, %v463
    %465 = vmatmul.f32.gmra.mxu0 %v112
    %v466 = vpop.f32.mrf.mxu0
    %v467 = vadd.f32 0.0, %v466
    %468 = vmatmul.f32.gmra.mxu0 %v115
    %v469 = vpop.f32.mrf.mxu0
    %v470 = vadd.f32 0.0, %v469
    %471 = vmatmul.f32.gmra.mxu0 %v118
    %v472 = vpop.f32.mrf.mxu0
    %v473 = vadd.f32 0.0, %v472
    %474 = vmatmul.f32.gmra.mxu0 %v121
    %v475 = vpop.f32.mrf.mxu0
    %v476 = vadd.f32 0.0, %v475
    %477 = vmatmul.f32.gmra.mxu0 %v124
    %v478 = vpop.f32.mrf.mxu0
    %v479 = vadd.f32 0.0, %v478
    %480 = vmatmul.f32.gmra.mxu0 %v127
    %v481 = vpop.f32.mrf.mxu0
    %v482 = vadd.f32 0.0, %v481
    %483 = vmatmul.f32.gmra.mxu0 %v130
    %v484 = vpop.f32.mrf.mxu0
    %v485 = vadd.f32 0.0, %v484
    %486 = vmatmul.f32.gmra.mxu0 %v133
    %v487 = vpop.f32.mrf.mxu0
    %v488 = vadd.f32 0.0, %v487
    %489 = vmatmul.f32.gmra.mxu0 %v136
    %v490 = vpop.f32.mrf.mxu0
    %v491 = vadd.f32 0.0, %v490
    %492 = vmatmul.f32.gmra.mxu0 %v139
    %v493 = vpop.f32.mrf.mxu0
    %v494 = vadd.f32 0.0, %v493
    %495 = vmatmul.f32.gmra.mxu0 %v142
    %v496 = vpop.f32.mrf.mxu0
    %v497 = vadd.f32 0.0, %v496
    %498 = vmatmul.f32.gmra.mxu0 %v145
    %v499 = vpop.f32.mrf.mxu0
    %v500 = vadd.f32 0.0, %v499
    %501 = vmatmul.f32.gmra.mxu0 %v148
    %v502 = vpop.f32.mrf.mxu0
    %v503 = vadd.f32 0.0, %v502
    %504 = vmatmul.f32.gmra.mxu0 %v151
    %v505 = vpop.f32.mrf.mxu0
    %v506 = vadd.f32 0.0, %v505
    %507 = vmatmul.f32.gmra.mxu0 %v154
    %v508 = vpop.f32.mrf.mxu0
    %v509 = vadd.f32 0.0, %v508
    %510 = vmatmul.f32.gmra.mxu0 %v157
    %v511 = vpop.f32.mrf.mxu0
    %v512 = vadd.f32 0.0, %v511
    %513 = vmatmul.f32.gmra.mxu0 %v160
    %v514 = vpop.f32.mrf.mxu0
    %v515 = vadd.f32 0.0, %v514
    %516 = vmatmul.f32.gmra.mxu0 %v163
    %v517 = vpop.f32.mrf.mxu0
    %v518 = vadd.f32 0.0, %v517
    %519 = vmatmul.f32.gmra.mxu0 %v166
    %v520 = vpop.f32.mrf.mxu0
    %v521 = vadd.f32 0.0, %v520
    %522 = vmatmul.f32.gmra.mxu0 %v169
    %v523 = vpop.f32.mrf.mxu0
    %v524 = vadd.f32 0.0, %v523
    %525 = vmatmul.f32.gmra.mxu0 %v172
    %v526 = vpop.f32.mrf.mxu0
    %v527 = vadd.f32 0.0, %v526
    %528 = vmatmul.f32.gmra.mxu0 %v175
    %v529 = vpop.f32.mrf.mxu0
    %v530 = vadd.f32 0.0, %v529
    %531 = vmatmul.f32.gmra.mxu0 %v178
    %v532 = vpop.f32.mrf.mxu0
    %v533 = vadd.f32 0.0, %v532
    %534 = vmatmul.f32.gmra.mxu0 %v181
    %v535 = vpop.f32.mrf.mxu0
    %v536 = vadd.f32 0.0, %v535
    %537 = vmatmul.f32.gmra.mxu0 %v184
    %v538 = vpop.f32.mrf.mxu0
    %v539 = vadd.f32 0.0, %v538
    %540 = vmatmul.f32.gmra.mxu0 %v187
    %v541 = vpop.f32.mrf.mxu0
    %v542 = vadd.f32 0.0, %v541
    %543 = vmatmul.f32.gmra.mxu0 %v190
    %v544 = vpop.f32.mrf.mxu0
    %v545 = vadd.f32 0.0, %v544
    %546 = vmatmul.f32.gmra.mxu0 %v193
    %v547 = vpop.f32.mrf.mxu0
    %v548 = vadd.f32 0.0, %v547
    %549 = vmatmul.f32.gmra.mxu0 %v196
    %v550 = vpop.f32.mrf.mxu0
    %v551 = vadd.f32 0.0, %v550
    %552 = vmatmul.f32.gmra.mxu0 %v199
    %v553 = vpop.f32.mrf.mxu0
    %v554 = vadd.f32 0.0, %v553
    %555 = vdwg.mxu0
    %556 = vmatpush.msra.mxu0 0.0
    %557 = vmatpush.msra.mxu0 0.0
    %558 = vmatpush.msra.mxu0 0.0
    %559 = vmatpush.msra.mxu0 0.0
    %560 = vmatpush.msra.mxu0 0.0
    %561 = vmatpush.msra.mxu0 0.0
    %562 = vmatpush.msra.mxu0 0.0
    %563 = vmatpush.msra.mxu0 0.0
    %564 = vmatpush.msra.mxu0 0.0
    %565 = vmatpush.msra.mxu0 0.0
    %566 = vmatpush.msra.mxu0 0.0
    %567 = vmatpush.msra.mxu0 0.0
    %568 = vmatpush.msra.mxu0 0.0
    %569 = vmatpush.msra.mxu0 %v212
    %570 = vmatpush.msra.mxu0 %v97
    %571 = vmatpush.msra.mxu0 %v92
    %572 = vmatmul.f32.gmra.mxu0 %v106
    %v573 = vpop.f32.mrf.mxu0
    %v574 = vadd.f32 0.0, %v573
    %575 = vmatmul.f32.gmra.mxu0 %v109
    %v576 = vpop.f32.mrf.mxu0
    %v577 = vadd.f32 0.0, %v576
    %578 = vmatmul.f32.gmra.mxu0 %v112
    %v579 = vpop.f32.mrf.mxu0
    %v580 = vadd.f32 0.0, %v579
    %581 = vmatmul.f32.gmra.mxu0 %v115
    %v582 = vpop.f32.mrf.mxu0
    %v583 = vadd.f32 0.0, %v582
    %584 = vmatmul.f32.gmra.mxu0 %v118
    %v585 = vpop.f32.mrf.mxu0
    %v586 = vadd.f32 0.0, %v585
    %587 = vmatmul.f32.gmra.mxu0 %v121
    %v588 = vpop.f32.mrf.mxu0
    %v589 = vadd.f32 0.0, %v588
    %590 = vmatmul.f32.gmra.mxu0 %v124
    %v591 = vpop.f32.mrf.mxu0
    %v592 = vadd.f32 0.0, %v591
    %593 = vmatmul.f32.gmra.mxu0 %v127
    %v594 = vpop.f32.mrf.mxu0
    %v595 = vadd.f32 0.0, %v594
    %596 = vmatmul.f32.gmra.mxu0 %v130
    %v597 = vpop.f32.mrf.mxu0
    %v598 = vadd.f32 0.0, %v597
    %599 = vmatmul.f32.gmra.mxu0 %v133
    %v600 = vpop.f32.mrf.mxu0
    %v601 = vadd.f32 0.0, %v600
    %602 = vmatmul.f32.gmra.mxu0 %v136
    %v603 = vpop.f32.mrf.mxu0
    %v604 = vadd.f32 0.0, %v603
    %605 = vmatmul.f32.gmra.mxu0 %v139
    %v606 = vpop.f32.mrf.mxu0
    %v607 = vadd.f32 0.0, %v606
    %608 = vmatmul.f32.gmra.mxu0 %v142
    %v609 = vpop.f32.mrf.mxu0
    %v610 = vadd.f32 0.0, %v609
    %611 = vmatmul.f32.gmra.mxu0 %v145
    %v612 = vpop.f32.mrf.mxu0
    %v613 = vadd.f32 0.0, %v612
    %614 = vmatmul.f32.gmra.mxu0 %v148
    %v615 = vpop.f32.mrf.mxu0
    %v616 = vadd.f32 0.0, %v615
    %617 = vmatmul.f32.gmra.mxu0 %v151
    %v618 = vpop.f32.mrf.mxu0
    %v619 = vadd.f32 0.0, %v618
    %620 = vmatmul.f32.gmra.mxu0 %v154
    %v621 = vpop.f32.mrf.mxu0
    %v622 = vadd.f32 0.0, %v621
    %623 = vmatmul.f32.gmra.mxu0 %v157
    %v624 = vpop.f32.mrf.mxu0
    %v625 = vadd.f32 0.0, %v624
    %626 = vmatmul.f32.gmra.mxu0 %v160
    %v627 = vpop.f32.mrf.mxu0
    %v628 = vadd.f32 0.0, %v627
    %629 = vmatmul.f32.gmra.mxu0 %v163
    %v630 = vpop.f32.mrf.mxu0
    %v631 = vadd.f32 0.0, %v630
    %632 = vmatmul.f32.gmra.mxu0 %v166
    %v633 = vpop.f32.mrf.mxu0
    %v634 = vadd.f32 0.0, %v633
    %635 = vmatmul.f32.gmra.mxu0 %v169
    %v636 = vpop.f32.mrf.mxu0
    %v637 = vadd.f32 0.0, %v636
    %638 = vmatmul.f32.gmra.mxu0 %v172
    %v639 = vpop.f32.mrf.mxu0
    %v640 = vadd.f32 0.0, %v639
    %641 = vmatmul.f32.gmra.mxu0 %v175
    %v642 = vpop.f32.mrf.mxu0
    %v643 = vadd.f32 0.0, %v642
    %644 = vmatmul.f32.gmra.mxu0 %v178
    %v645 = vpop.f32.mrf.mxu0
    %v646 = vadd.f32 0.0, %v645
    %647 = vmatmul.f32.gmra.mxu0 %v181
    %v648 = vpop.f32.mrf.mxu0
    %v649 = vadd.f32 0.0, %v648
    %650 = vmatmul.f32.gmra.mxu0 %v184
    %v651 = vpop.f32.mrf.mxu0
    %v652 = vadd.f32 0.0, %v651
    %653 = vmatmul.f32.gmra.mxu0 %v187
    %v654 = vpop.f32.mrf.mxu0
    %v655 = vadd.f32 0.0, %v654
    %656 = vmatmul.f32.gmra.mxu0 %v190
    %v657 = vpop.f32.mrf.mxu0
    %v658 = vadd.f32 0.0, %v657
    %659 = vmatmul.f32.gmra.mxu0 %v193
    %v660 = vpop.f32.mrf.mxu0
    %v661 = vadd.f32 0.0, %v660
    %662 = vmatmul.f32.gmra.mxu0 %v196
    %v663 = vpop.f32.mrf.mxu0
    %v664 = vadd.f32 0.0, %v663
    %665 = vmatmul.f32.gmra.mxu0 %v199
    %v666 = vpop.f32.mrf.mxu0
    %v667 = vadd.f32 0.0, %v666
    %668 = vdwg.mxu0
    %669 = vmatpush.msra.mxu0 0.0
    %670 = vmatpush.msra.mxu0 0.0
    %671 = vmatpush.msra.mxu0 0.0
    %672 = vmatpush.msra.mxu0 0.0
    %673 = vmatpush.msra.mxu0 0.0
    %674 = vmatpush.msra.mxu0 0.0
    %675 = vmatpush.msra.mxu0 0.0
    %676 = vmatpush.msra.mxu0 0.0
    %677 = vmatpush.msra.mxu0 0.0
    %678 = vmatpush.msra.mxu0 0.0
    %679 = vmatpush.msra.mxu0 0.0
    %680 = vmatpush.msra.mxu0 0.0
    %681 = vmatpush.msra.mxu0 0.0
    %682 = vmatpush.msra.mxu0 %v215
    %683 = vmatpush.msra.mxu0 %v98
    %684 = vmatpush.msra.mxu0 %v93
    %685 = vmatmul.f32.gmra.mxu0 %v106
    %v686 = vpop.f32.mrf.mxu0
    %v687 = vadd.f32 0.0, %v686
    %688 = vmatmul.f32.gmra.mxu0 %v109
    %v689 = vpop.f32.mrf.mxu0
    %v690 = vadd.f32 0.0, %v689
    %691 = vmatmul.f32.gmra.mxu0 %v112
    %v692 = vpop.f32.mrf.mxu0
    %v693 = vadd.f32 0.0, %v692
    %694 = vmatmul.f32.gmra.mxu0 %v115
    %v695 = vpop.f32.mrf.mxu0
    %v696 = vadd.f32 0.0, %v695
    %697 = vmatmul.f32.gmra.mxu0 %v118
    %v698 = vpop.f32.mrf.mxu0
    %v699 = vadd.f32 0.0, %v698
    %700 = vmatmul.f32.gmra.mxu0 %v121
    %v701 = vpop.f32.mrf.mxu0
    %v702 = vadd.f32 0.0, %v701
    %703 = vmatmul.f32.gmra.mxu0 %v124
    %v704 = vpop.f32.mrf.mxu0
    %v705 = vadd.f32 0.0, %v704
    %706 = vmatmul.f32.gmra.mxu0 %v127
    %v707 = vpop.f32.mrf.mxu0
    %v708 = vadd.f32 0.0, %v707
    %709 = vmatmul.f32.gmra.mxu0 %v130
    %v710 = vpop.f32.mrf.mxu0
    %v711 = vadd.f32 0.0, %v710
    %712 = vmatmul.f32.gmra.mxu0 %v133
    %v713 = vpop.f32.mrf.mxu0
    %v714 = vadd.f32 0.0, %v713
    %715 = vmatmul.f32.gmra.mxu0 %v136
    %v716 = vpop.f32.mrf.mxu0
    %v717 = vadd.f32 0.0, %v716
    %718 = vmatmul.f32.gmra.mxu0 %v139
    %v719 = vpop.f32.mrf.mxu0
    %v720 = vadd.f32 0.0, %v719
    %721 = vmatmul.f32.gmra.mxu0 %v142
    %v722 = vpop.f32.mrf.mxu0
    %v723 = vadd.f32 0.0, %v722
    %724 = vmatmul.f32.gmra.mxu0 %v145
    %v725 = vpop.f32.mrf.mxu0
    %v726 = vadd.f32 0.0, %v725
    %727 = vmatmul.f32.gmra.mxu0 %v148
    %v728 = vpop.f32.mrf.mxu0
    %v729 = vadd.f32 0.0, %v728
    %730 = vmatmul.f32.gmra.mxu0 %v151
    %v731 = vpop.f32.mrf.mxu0
    %v732 = vadd.f32 0.0, %v731
    %733 = vmatmul.f32.gmra.mxu0 %v154
    %v734 = vpop.f32.mrf.mxu0
    %v735 = vadd.f32 0.0, %v734
    %736 = vmatmul.f32.gmra.mxu0 %v157
    %v737 = vpop.f32.mrf.mxu0
    %v738 = vadd.f32 0.0, %v737
    %739 = vmatmul.f32.gmra.mxu0 %v160
    %v740 = vpop.f32.mrf.mxu0
    %v741 = vadd.f32 0.0, %v740
    %742 = vmatmul.f32.gmra.mxu0 %v163
    %v743 = vpop.f32.mrf.mxu0
    %v744 = vadd.f32 0.0, %v743
    %745 = vmatmul.f32.gmra.mxu0 %v166
    %v746 = vpop.f32.mrf.mxu0
    %v747 = vadd.f32 0.0, %v746
    %748 = vmatmul.f32.gmra.mxu0 %v169
    %v749 = vpop.f32.mrf.mxu0
    %v750 = vadd.f32 0.0, %v749
    %751 = vmatmul.f32.gmra.mxu0 %v172
    %v752 = vpop.f32.mrf.mxu0
    %v753 = vadd.f32 0.0, %v752
    %754 = vmatmul.f32.gmra.mxu0 %v175
    %v755 = vpop.f32.mrf.mxu0
    %v756 = vadd.f32 0.0, %v755
    %757 = vmatmul.f32.gmra.mxu0 %v178
    %v758 = vpop.f32.mrf.mxu0
    %v759 = vadd.f32 0.0, %v758
    %760 = vmatmul.f32.gmra.mxu0 %v181
    %v761 = vpop.f32.mrf.mxu0
    %v762 = vadd.f32 0.0, %v761
    %763 = vmatmul.f32.gmra.mxu0 %v184
    %v764 = vpop.f32.mrf.mxu0
    %v765 = vadd.f32 0.0, %v764
    %766 = vmatmul.f32.gmra.mxu0 %v187
    %v767 = vpop.f32.mrf.mxu0
    %v768 = vadd.f32 0.0, %v767
    %769 = vmatmul.f32.gmra.mxu0 %v190
    %v770 = vpop.f32.mrf.mxu0
    %v771 = vadd.f32 0.0, %v770
    %772 = vmatmul.f32.gmra.mxu0 %v193
    %v773 = vpop.f32.mrf.mxu0
    %v774 = vadd.f32 0.0, %v773
    %775 = vmatmul.f32.gmra.mxu0 %v196
    %v776 = vpop.f32.mrf.mxu0
    %v777 = vadd.f32 0.0, %v776
    %778 = vmatmul.f32.gmra.mxu0 %v199
    %v779 = vpop.f32.mrf.mxu0
    %v780 = vadd.f32 0.0, %v779
    %781 = vdwg.mxu0
    %v782 = vld [vmem:[%s2] sm:$0xf]
    %v784 = vperm.slane %v782, 0
    %v785 = vperm.slane %v782, 1
    %v786 = vperm.slane %v782, 2
    %v787 = vperm.slane %v782, 3
    %v792 = vadd.f32 %v235, %v784
    %v793 = vadd.f32 %v348, %v785
    %v794 = vadd.f32 %v461, %v786
    %v795 = vadd.f32 %v574, %v787
    %v796 = vadd.f32 %v238, %v784
    %v797 = vadd.f32 %v351, %v785
    %v798 = vadd.f32 %v464, %v786
    %v799 = vadd.f32 %v577, %v787
    %v800 = vadd.f32 %v241, %v784
    %v801 = vadd.f32 %v354, %v785
    %v802 = vadd.f32 %v467, %v786
    %v803 = vadd.f32 %v580, %v787
    %v804 = vadd.f32 %v244, %v784
    %v805 = vadd.f32 %v357, %v785
    %v806 = vadd.f32 %v470, %v786
    %v807 = vadd.f32 %v583, %v787
    %v808 = vadd.f32 %v247, %v784
    %v809 = vadd.f32 %v360, %v785
    %v810 = vadd.f32 %v473, %v786
    %v811 = vadd.f32 %v586, %v787
    %v812 = vadd.f32 %v250, %v784
    %v813 = vadd.f32 %v363, %v785
    %v814 = vadd.f32 %v476, %v786
    %v815 = vadd.f32 %v589, %v787
    %v816 = vadd.f32 %v253, %v784
    %v817 = vadd.f32 %v366, %v785
    %v818 = vadd.f32 %v479, %v786
    %v819 = vadd.f32 %v592, %v787
    %v820 = vadd.f32 %v256, %v784
    %v821 = vadd.f32 %v369, %v785
    %v822 = vadd.f32 %v482, %v786
    %v823 = vadd.f32 %v595, %v787
    %v824 = vadd.f32 %v259, %v784
    %v825 = vadd.f32 %v372, %v785
    %v826 = vadd.f32 %v485, %v786
    %v827 = vadd.f32 %v598, %v787
    %v828 = vadd.f32 %v262, %v784
    %v829 = vadd.f32 %v375, %v785
    %v830 = vadd.f32 %v488, %v786
    %v831 = vadd.f32 %v601, %v787
    %v832 = vadd.f32 %v265, %v784
    %v833 = vadd.f32 %v378, %v785
    %v834 = vadd.f32 %v491, %v786
    %v835 = vadd.f32 %v604, %v787
    %v836 = vadd.f32 %v268, %v784
    %v837 = vadd.f32 %v381, %v785
    %v838 = vadd.f32 %v494, %v786
    %v839 = vadd.f32 %v607, %v787
    %v840 = vadd.f32 %v271, %v784
    %v841 = vadd.f32 %v384, %v785
    %v842 = vadd.f32 %v497, %v786
    %v843 = vadd.f32 %v610, %v787
    %v844 = vadd.f32 %v274, %v784
    %v845 = vadd.f32 %v387, %v785
    %v846 = vadd.f32 %v500, %v786
    %v847 = vadd.f32 %v613, %v787
    %v848 = vadd.f32 %v277, %v784
    %v849 = vadd.f32 %v390, %v785
    %v850 = vadd.f32 %v503, %v786
    %v851 = vadd.f32 %v616, %v787
    %v852 = vadd.f32 %v280, %v784
    %v853 = vadd.f32 %v393, %v785
    %v854 = vadd.f32 %v506, %v786
    %v855 = vadd.f32 %v619, %v787
    %v856 = vadd.f32 %v283, %v784
    %v857 = vadd.f32 %v396, %v785
    %v858 = vadd.f32 %v509, %v786
    %v859 = vadd.f32 %v622, %v787
    %v860 = vadd.f32 %v286, %v784
    %v861 = vadd.f32 %v399, %v785
    %v862 = vadd.f32 %v512, %v786
    %v863 = vadd.f32 %v625, %v787
    %v864 = vadd.f32 %v289, %v784
    %v865 = vadd.f32 %v402, %v785
    %v866 = vadd.f32 %v515, %v786
    %v867 = vadd.f32 %v628, %v787
    %v868 = vadd.f32 %v292, %v784
    %v869 = vadd.f32 %v405, %v785
    %v870 = vadd.f32 %v518, %v786
    %v871 = vadd.f32 %v631, %v787
    %v872 = vadd.f32 %v295, %v784
    %v873 = vadd.f32 %v408, %v785
    %v874 = vadd.f32 %v521, %v786
    %v875 = vadd.f32 %v634, %v787
    %v876 = vadd.f32 %v298, %v784
    %v877 = vadd.f32 %v411, %v785
    %v878 = vadd.f32 %v524, %v786
    %v879 = vadd.f32 %v637, %v787
    %v880 = vadd.f32 %v301, %v784
    %v881 = vadd.f32 %v414, %v785
    %v882 = vadd.f32 %v527, %v786
    %v883 = vadd.f32 %v640, %v787
    %v884 = vadd.f32 %v304, %v784
    %v885 = vadd.f32 %v417, %v785
    %v886 = vadd.f32 %v530, %v786
    %v887 = vadd.f32 %v643, %v787
    %v888 = vadd.f32 %v307, %v784
    %v889 = vadd.f32 %v420, %v785
    %v890 = vadd.f32 %v533, %v786
    %v891 = vadd.f32 %v646, %v787
    %v892 = vadd.f32 %v310, %v784
    %v893 = vadd.f32 %v423, %v785
    %v894 = vadd.f32 %v536, %v786
    %v895 = vadd.f32 %v649, %v787
    %v896 = vadd.f32 %v313, %v784
    %v897 = vadd.f32 %v426, %v785
    %v898 = vadd.f32 %v539, %v786
    %v899 = vadd.f32 %v652, %v787
    %v900 = vadd.f32 %v316, %v784
    %v901 = vadd.f32 %v429, %v785
    %v902 = vadd.f32 %v542, %v786
    %v903 = vadd.f32 %v655, %v787
    %v904 = vadd.f32 %v319, %v784
    %v905 = vadd.f32 %v432, %v785
    %v906 = vadd.f32 %v545, %v786
    %v907 = vadd.f32 %v658, %v787
    %v908 = vadd.f32 %v322, %v784
    %v909 = vadd.f32 %v435, %v785
    %v910 = vadd.f32 %v548, %v786
    %v911 = vadd.f32 %v661, %v787
    %v912 = vadd.f32 %v325, %v784
    %v913 = vadd.f32 %v438, %v785
    %v914 = vadd.f32 %v551, %v786
    %v915 = vadd.f32 %v664, %v787
    %v916 = vadd.f32 %v328, %v784
    %v917 = vadd.f32 %v441, %v785
    %v918 = vadd.f32 %v554, %v786
    %v919 = vadd.f32 %v667, %v787
    %v920 = vmax.f32 %v792, 0.0
    %v921 = vmax.f32 %v793, 0.0
    %v922 = vmax.f32 %v794, 0.0
    %v923 = vmax.f32 %v795, 0.0
    %v924 = vmax.f32 %v796, 0.0
    %v925 = vmax.f32 %v797, 0.0
    %v926 = vmax.f32 %v798, 0.0
    %v927 = vmax.f32 %v799, 0.0
    %v928 = vmax.f32 %v800, 0.0
    %v929 = vmax.f32 %v801, 0.0
    %v930 = vmax.f32 %v802, 0.0
    %v931 = vmax.f32 %v803, 0.0
    %v932 = vmax.f32 %v804, 0.0
    %v933 = vmax.f32 %v805, 0.0
    %v934 = vmax.f32 %v806, 0.0
    %v935 = vmax.f32 %v807, 0.0
    %v936 = vmax.f32 %v808, 0.0
    %v937 = vmax.f32 %v809, 0.0
    %v938 = vmax.f32 %v810, 0.0
    %v939 = vmax.f32 %v811, 0.0
    %v940 = vmax.f32 %v812, 0.0
    %v941 = vmax.f32 %v813, 0.0
    %v942 = vmax.f32 %v814, 0.0
    %v943 = vmax.f32 %v815, 0.0
    %v944 = vmax.f32 %v816, 0.0
    %v945 = vmax.f32 %v817, 0.0
    %v946 = vmax.f32 %v818, 0.0
    %v947 = vmax.f32 %v819, 0.0
    %v948 = vmax.f32 %v820, 0.0
    %v949 = vmax.f32 %v821, 0.0
    %v950 = vmax.f32 %v822, 0.0
    %v951 = vmax.f32 %v823, 0.0
    %v952 = vmax.f32 %v824, 0.0
    %v953 = vmax.f32 %v825, 0.0
    %v954 = vmax.f32 %v826, 0.0
    %v955 = vmax.f32 %v827, 0.0
    %v956 = vmax.f32 %v828, 0.0
    %v957 = vmax.f32 %v829, 0.0
    %v958 = vmax.f32 %v830, 0.0
    %v959 = vmax.f32 %v831, 0.0
    %v960 = vmax.f32 %v832, 0.0
    %v961 = vmax.f32 %v833, 0.0
    %v962 = vmax.f32 %v834, 0.0
    %v963 = vmax.f32 %v835, 0.0
    %v964 = vmax.f32 %v836, 0.0
    %v965 = vmax.f32 %v837, 0.0
    %v966 = vmax.f32 %v838, 0.0
    %v967 = vmax.f32 %v839, 0.0
    %v968 = vmax.f32 %v840, 0.0
    %v969 = vmax.f32 %v841, 0.0
    %v970 = vmax.f32 %v842, 0.0
    %v971 = vmax.f32 %v843, 0.0
    %v972 = vmax.f32 %v844, 0.0
    %v973 = vmax.f32 %v845, 0.0
    %v974 = vmax.f32 %v846, 0.0
    %v975 = vmax.f32 %v847, 0.0
    %v976 = vmax.f32 %v848, 0.0
    %v977 = vmax.f32 %v849, 0.0
    %v978 = vmax.f32 %v850, 0.0
    %v979 = vmax.f32 %v851, 0.0
    %v980 = vmax.f32 %v852, 0.0
    %v981 = vmax.f32 %v853, 0.0
    %v982 = vmax.f32 %v854, 0.0
    %v983 = vmax.f32 %v855, 0.0
    %v984 = vmax.f32 %v856, 0.0
    %v985 = vmax.f32 %v857, 0.0
    %v986 = vmax.f32 %v858, 0.0
    %v987 = vmax.f32 %v859, 0.0
    %v988 = vmax.f32 %v860, 0.0
    %v989 = vmax.f32 %v861, 0.0
    %v990 = vmax.f32 %v862, 0.0
    %v991 = vmax.f32 %v863, 0.0
    %v992 = vmax.f32 %v864, 0.0
    %v993 = vmax.f32 %v865, 0.0
    %v994 = vmax.f32 %v866, 0.0
    %v995 = vmax.f32 %v867, 0.0
    %v996 = vmax.f32 %v868, 0.0
    %v997 = vmax.f32 %v869, 0.0
    %v998 = vmax.f32 %v870, 0.0
    %v999 = vmax.f32 %v871, 0.0
    %v1000 = vmax.f32 %v872, 0.0
    %v1001 = vmax.f32 %v873, 0.0
    %v1002 = vmax.f32 %v874, 0.0
    %v1003 = vmax.f32 %v875, 0.0
    %v1004 = vmax.f32 %v876, 0.0
    %v1005 = vmax.f32 %v877, 0.0
    %v1006 = vmax.f32 %v878, 0.0
    %v1007 = vmax.f32 %v879, 0.0
    %v1008 = vmax.f32 %v880, 0.0
    %v1009 = vmax.f32 %v881, 0.0
    %v1010 = vmax.f32 %v882, 0.0
    %v1011 = vmax.f32 %v883, 0.0
    %v1012 = vmax.f32 %v884, 0.0
    %v1013 = vmax.f32 %v885, 0.0
    %v1014 = vmax.f32 %v886, 0.0
    %v1015 = vmax.f32 %v887, 0.0
    %v1016 = vmax.f32 %v888, 0.0
    %v1017 = vmax.f32 %v889, 0.0
    %v1018 = vmax.f32 %v890, 0.0
    %v1019 = vmax.f32 %v891, 0.0
    %v1020 = vmax.f32 %v892, 0.0
    %v1021 = vmax.f32 %v893, 0.0
    %v1022 = vmax.f32 %v894, 0.0
    %v1023 = vmax.f32 %v895, 0.0
    %v1024 = vmax.f32 %v896, 0.0
    %v1025 = vmax.f32 %v897, 0.0
    %v1026 = vmax.f32 %v898, 0.0
    %v1027 = vmax.f32 %v899, 0.0
    %v1028 = vmax.f32 %v900, 0.0
    %v1029 = vmax.f32 %v901, 0.0
    %v1030 = vmax.f32 %v902, 0.0
    %v1031 = vmax.f32 %v903, 0.0
    %v1032 = vmax.f32 %v904, 0.0
    %v1033 = vmax.f32 %v905, 0.0
    %v1034 = vmax.f32 %v906, 0.0
    %v1035 = vmax.f32 %v907, 0.0
    %v1036 = vmax.f32 %v908, 0.0
    %v1037 = vmax.f32 %v909, 0.0
    %v1038 = vmax.f32 %v910, 0.0
    %v1039 = vmax.f32 %v911, 0.0
    %v1040 = vmax.f32 %v912, 0.0
    %v1041 = vmax.f32 %v913, 0.0
    %v1042 = vmax.f32 %v914, 0.0
    %v1043 = vmax.f32 %v915, 0.0
    %v1044 = vmax.f32 %v916, 0.0
    %v1045 = vmax.f32 %v917, 0.0
    %v1046 = vmax.f32 %v918, 0.0
    %v1047 = vmax.f32 %v919, 0.0
    %v1048 = vld [vmem:[#allocation3] sm:$0xff]
    %v1049 = vld [vmem:[#allocation3 + $0x8] sm:$0xff]
    %v1050 = vld [vmem:[#allocation3 + $0x10] sm:$0xff]
    %v1051 = vld [vmem:[#allocation3 + $0x18] sm:$0xff]
    %v1052 = vld [vmem:[#allocation3 + $0x20] sm:$0xff]
    %v1053 = vld [vmem:[#allocation3 + $0x28] sm:$0xff]
    %v1054 = vld [vmem:[#allocation3 + $0x30] sm:$0xff]
    %v1055 = vld [vmem:[#allocation3 + $0x38] sm:$0xff]
    %v1056 = vld [vmem:[#allocation3 + $0x40] sm:$0xff]
    %v1057 = vld [vmem:[#allocation3 + $0x48] sm:$0xff]
    %v1058 = vld [vmem:[#allocation3 + $0x50] sm:$0xff]
    %v1059 = vld [vmem:[#allocation3 + $0x58] sm:$0xff]
    %v1060 = vld [vmem:[#allocation3 + $0x60] sm:$0xff]
    %v1061 = vld [vmem:[#allocation3 + $0x68] sm:$0xff]
    %v1062 = vld [vmem:[#allocation3 + $0x70] sm:$0xff]
    %v1063 = vld [vmem:[#allocation3 + $0x78] sm:$0xff]
    %v1064 = vld [vmem:[#allocation3 + $0x80] sm:$0xff]
    %v1065 = vld [vmem:[#allocation3 + $0x88] sm:$0xff]
    %v1066 = vld [vmem:[#allocation3 + $0x90] sm:$0xff]
    %v1067 = vld [vmem:[#allocation3 + $0x98] sm:$0xff]
    %v1068 = vld [vmem:[#allocation3 + $0xa0] sm:$0xff]
    %v1069 = vld [vmem:[#allocation3 + $0xa8] sm:$0xff]
    %v1070 = vld [vmem:[#allocation3 + $0xb0] sm:$0xff]
    %v1071 = vld [vmem:[#allocation3 + $0xb8] sm:$0xff]
    %v1072 = vld [vmem:[#allocation3 + $0xc0] sm:$0xff]
    %v1073 = vld [vmem:[#allocation3 + $0xc8] sm:$0xff]
    %v1074 = vld [vmem:[#allocation3 + $0xd0] sm:$0xff]
    %v1075 = vld [vmem:[#allocation3 + $0xd8] sm:$0xff]
    %v1076 = vld [vmem:[#allocation3 + $0xe0] sm:$0xff]
    %v1077 = vld [vmem:[#allocation3 + $0xe8] sm:$0xff]
    %v1078 = vld [vmem:[#allocation3 + $0xf0] sm:$0xff]
    %v1079 = vld [vmem:[#allocation3 + $0xf8] sm:$0xff]
    %v1080 = vld [vmem:[#allocation3 + $0x100] sm:$0xff]
    %v1081 = vld [vmem:[#allocation3 + $0x108] sm:$0xff]
    %v1082 = vld [vmem:[#allocation3 + $0x110] sm:$0xff]
    %v1083 = vld [vmem:[#allocation3 + $0x118] sm:$0xff]
    %v1084 = vld [vmem:[#allocation3 + $0x120] sm:$0xff]
    %v1085 = vld [vmem:[#allocation3 + $0x128] sm:$0xff]
    %v1086 = vld [vmem:[#allocation3 + $0x130] sm:$0xff]
    %v1087 = vld [vmem:[#allocation3 + $0x138] sm:$0xff]
    %v1088 = vld [vmem:[#allocation3 + $0x140] sm:$0xff]
    %v1089 = vld [vmem:[#allocation3 + $0x148] sm:$0xff]
    %v1090 = vld [vmem:[#allocation3 + $0x150] sm:$0xff]
    %v1091 = vld [vmem:[#allocation3 + $0x158] sm:$0xff]
    %v1092 = vld [vmem:[#allocation3 + $0x160] sm:$0xff]
    %v1093 = vld [vmem:[#allocation3 + $0x168] sm:$0xff]
    %v1094 = vld [vmem:[#allocation3 + $0x170] sm:$0xff]
    %v1095 = vld [vmem:[#allocation3 + $0x178] sm:$0xff]
    %v1096 = vld [vmem:[#allocation3 + $0x180] sm:$0xff]
    %v1097 = vld [vmem:[#allocation3 + $0x188] sm:$0xff]
    %v1098 = vld [vmem:[#allocation3 + $0x190] sm:$0xff]
    %v1099 = vld [vmem:[#allocation3 + $0x198] sm:$0xff]
    %v1100 = vld [vmem:[#allocation3 + $0x1a0] sm:$0xff]
    %v1101 = vld [vmem:[#allocation3 + $0x1a8] sm:$0xff]
    %v1102 = vld [vmem:[#allocation3 + $0x1b0] sm:$0xff]
    %v1103 = vld [vmem:[#allocation3 + $0x1b8] sm:$0xff]
    %v1104 = vld [vmem:[#allocation3 + $0x1c0] sm:$0xff]
    %v1105 = vld [vmem:[#allocation3 + $0x1c8] sm:$0xff]
    %v1106 = vld [vmem:[#allocation3 + $0x1d0] sm:$0xff]
    %v1107 = vld [vmem:[#allocation3 + $0x1d8] sm:$0xff]
    %v1108 = vld [vmem:[#allocation3 + $0x1e0] sm:$0xff]
    %v1109 = vld [vmem:[#allocation3 + $0x1e8] sm:$0xff]
    %v1110 = vld [vmem:[#allocation3 + $0x1f0] sm:$0xff]
    %v1111 = vld [vmem:[#allocation3 + $0x1f8] sm:$0xff]
    %v1112 = vld [vmem:[#allocation3 + $0x200] sm:$0xff]
    %v1113 = vld [vmem:[#allocation3 + $0x208] sm:$0xff]
    %v1114 = vld [vmem:[#allocation3 + $0x210] sm:$0xff]
    %v1115 = vld [vmem:[#allocation3 + $0x218] sm:$0xff]
    %v1116 = vld [vmem:[#allocation3 + $0x220] sm:$0xff]
    %v1117 = vld [vmem:[#allocation3 + $0x228] sm:$0xff]
    %v1118 = vld [vmem:[#allocation3 + $0x230] sm:$0xff]
    %v1119 = vld [vmem:[#allocation3 + $0x238] sm:$0xff]
    %v1120 = vld [vmem:[#allocation3 + $0x240] sm:$0xff]
    %v1121 = vld [vmem:[#allocation3 + $0x248] sm:$0xff]
    %v1122 = vld [vmem:[#allocation3 + $0x250] sm:$0xff]
    %v1123 = vld [vmem:[#allocation3 + $0x258] sm:$0xff]
    %v1124 = vld [vmem:[#allocation3 + $0x260] sm:$0xff]
    %v1125 = vld [vmem:[#allocation3 + $0x268] sm:$0xff]
    %v1126 = vld [vmem:[#allocation3 + $0x270] sm:$0xff]
    %v1127 = vld [vmem:[#allocation3 + $0x278] sm:$0xff]
    %v1128 = vld [vmem:[#allocation3 + $0x280] sm:$0xff]
    %v1129 = vld [vmem:[#allocation3 + $0x288] sm:$0xff]
    %v1130 = vld [vmem:[#allocation3 + $0x290] sm:$0xff]
    %v1131 = vld [vmem:[#allocation3 + $0x298] sm:$0xff]
    %v1132 = vld [vmem:[#allocation3 + $0x2a0] sm:$0xff]
    %v1133 = vld [vmem:[#allocation3 + $0x2a8] sm:$0xff]
    %v1134 = vld [vmem:[#allocation3 + $0x2b0] sm:$0xff]
    %v1135 = vld [vmem:[#allocation3 + $0x2b8] sm:$0xff]
    %v1136 = vld [vmem:[#allocation3 + $0x2c0] sm:$0xff]
    %v1137 = vld [vmem:[#allocation3 + $0x2c8] sm:$0xff]
    %v1138 = vld [vmem:[#allocation3 + $0x2d0] sm:$0xff]
    %v1139 = vld [vmem:[#allocation3 + $0x2d8] sm:$0xff]
    %v1140 = vld [vmem:[#allocation3 + $0x2e0] sm:$0xff]
    %v1141 = vld [vmem:[#allocation3 + $0x2e8] sm:$0xff]
    %v1142 = vld [vmem:[#allocation3 + $0x2f0] sm:$0xff]
    %v1143 = vld [vmem:[#allocation3 + $0x2f8] sm:$0xff]
    %v1144 = vld [vmem:[#allocation3 + $0x300] sm:$0xff]
    %v1145 = vld [vmem:[#allocation3 + $0x308] sm:$0xff]
    %v1146 = vld [vmem:[#allocation3 + $0x310] sm:$0xff]
    %v1147 = vld [vmem:[#allocation3 + $0x318] sm:$0xff]
    %v1148 = vld [vmem:[#allocation3 + $0x320] sm:$0xff]
    %v1149 = vld [vmem:[#allocation3 + $0x328] sm:$0xff]
    %v1150 = vld [vmem:[#allocation3 + $0x330] sm:$0xff]
    %v1151 = vld [vmem:[#allocation3 + $0x338] sm:$0xff]
    %v1152 = vld [vmem:[#allocation3 + $0x340] sm:$0xff]
    %v1153 = vld [vmem:[#allocation3 + $0x348] sm:$0xff]
    %v1154 = vld [vmem:[#allocation3 + $0x350] sm:$0xff]
    %v1155 = vld [vmem:[#allocation3 + $0x358] sm:$0xff]
    %v1156 = vld [vmem:[#allocation3 + $0x360] sm:$0xff]
    %v1157 = vld [vmem:[#allocation3 + $0x368] sm:$0xff]
    %v1158 = vld [vmem:[#allocation3 + $0x370] sm:$0xff]
    %v1159 = vld [vmem:[#allocation3 + $0x378] sm:$0xff]
    %v1160 = vld [vmem:[#allocation3 + $0x380] sm:$0xff]
    %v1161 = vld [vmem:[#allocation3 + $0x388] sm:$0xff]
    %v1162 = vld [vmem:[#allocation3 + $0x390] sm:$0xff]
    %v1163 = vld [vmem:[#allocation3 + $0x398] sm:$0xff]
    %v1164 = vld [vmem:[#allocation3 + $0x3a0] sm:$0xff]
    %v1165 = vld [vmem:[#allocation3 + $0x3a8] sm:$0xff]
    %v1166 = vld [vmem:[#allocation3 + $0x3b0] sm:$0xff]
    %v1167 = vld [vmem:[#allocation3 + $0x3b8] sm:$0xff]
    %v1168 = vld [vmem:[#allocation3 + $0x3c0] sm:$0xff]
    %v1169 = vld [vmem:[#allocation3 + $0x3c8] sm:$0xff]
    %v1170 = vld [vmem:[#allocation3 + $0x3d0] sm:$0xff]
    %v1171 = vld [vmem:[#allocation3 + $0x3d8] sm:$0xff]
    %v1172 = vld [vmem:[#allocation3 + $0x3e0] sm:$0xff]
    %v1173 = vld [vmem:[#allocation3 + $0x3e8] sm:$0xff]
    %v1174 = vld [vmem:[#allocation3 + $0x3f0] sm:$0xff]
    %v1175 = vld [vmem:[#allocation3 + $0x3f8] sm:$0xff]
    %v1176 = vld [vmem:[%s4] sm:$0x3]
    %v1178 = vperm.slane %v1176, 0
    %v1179 = vperm.slane %v1176, 1
    %1182 = vmatpush.msra.mxu0 %v1078
    %1183 = vmatpush.msra.mxu0 %v1076
    %1184 = vmatpush.msra.mxu0 %v1074
    %1185 = vmatpush.msra.mxu0 %v1072
    %1186 = vmatpush.msra.mxu0 %v1070
    %1187 = vmatpush.msra.mxu0 %v1068
    %1188 = vmatpush.msra.mxu0 %v1066
    %1189 = vmatpush.msra.mxu0 %v1064
    %1190 = vmatpush.msra.mxu0 %v1062
    %1191 = vmatpush.msra.mxu0 %v1060
    %1192 = vmatpush.msra.mxu0 %v1058
    %1193 = vmatpush.msra.mxu0 %v1056
    %1194 = vmatpush.msra.mxu0 %v1054
    %1195 = vmatpush.msra.mxu0 %v1052
    %1196 = vmatpush.msra.mxu0 %v1050
    %1197 = vmatpush.msra.mxu0 %v1048
    %1198 = vmatmul.f32.gmra.mxu0 %v920
    %v1199 = vpop.f32.mrf.mxu0
    %v1200 = vadd.f32 %v1178, %v1199
    %1201 = vmatmul.f32.gmra.mxu0 %v924
    %v1202 = vpop.f32.mrf.mxu0
    %v1203 = vadd.f32 %v1178, %v1202
    %1204 = vmatmul.f32.gmra.mxu0 %v928
    %v1205 = vpop.f32.mrf.mxu0
    %v1206 = vadd.f32 %v1178, %v1205
    %1207 = vmatmul.f32.gmra.mxu0 %v932
    %v1208 = vpop.f32.mrf.mxu0
    %v1209 = vadd.f32 %v1178, %v1208
    %1210 = vmatmul.f32.gmra.mxu0 %v936
    %v1211 = vpop.f32.mrf.mxu0
    %v1212 = vadd.f32 %v1178, %v1211
    %1213 = vmatmul.f32.gmra.mxu0 %v940
    %v1214 = vpop.f32.mrf.mxu0
    %v1215 = vadd.f32 %v1178, %v1214
    %1216 = vmatmul.f32.gmra.mxu0 %v944
    %v1217 = vpop.f32.mrf.mxu0
    %v1218 = vadd.f32 %v1178, %v1217
    %1219 = vmatmul.f32.gmra.mxu0 %v948
    %v1220 = vpop.f32.mrf.mxu0
    %v1221 = vadd.f32 %v1178, %v1220
    %1222 = vmatmul.f32.gmra.mxu0 %v952
    %v1223 = vpop.f32.mrf.mxu0
    %v1224 = vadd.f32 %v1178, %v1223
    %1225 = vmatmul.f32.gmra.mxu0 %v956
    %v1226 = vpop.f32.mrf.mxu0
    %v1227 = vadd.f32 %v1178, %v1226
    %1228 = vmatmul.f32.gmra.mxu0 %v960
    %v1229 = vpop.f32.mrf.mxu0
    %v1230 = vadd.f32 %v1178, %v1229
    %1231 = vmatmul.f32.gmra.mxu0 %v964
    %v1232 = vpop.f32.mrf.mxu0
    %v1233 = vadd.f32 %v1178, %v1232
    %1234 = vmatmul.f32.gmra.mxu0 %v968
    %v1235 = vpop.f32.mrf.mxu0
    %v1236 = vadd.f32 %v1178, %v1235
    %1237 = vmatmul.f32.gmra.mxu0 %v972
    %v1238 = vpop.f32.mrf.mxu0
    %v1239 = vadd.f32 %v1178, %v1238
    %1240 = vmatmul.f32.gmra.mxu0 %v976
    %v1241 = vpop.f32.mrf.mxu0
    %v1242 = vadd.f32 %v1178, %v1241
    %1243 = vmatmul.f32.gmra.mxu0 %v980
    %v1244 = vpop.f32.mrf.mxu0
    %v1245 = vadd.f32 %v1178, %v1244
    %1246 = vmatmul.f32.gmra.mxu0 %v984
    %v1247 = vpop.f32.mrf.mxu0
    %v1248 = vadd.f32 %v1178, %v1247
    %1249 = vmatmul.f32.gmra.mxu0 %v988
    %v1250 = vpop.f32.mrf.mxu0
    %v1251 = vadd.f32 %v1178, %v1250
    %1252 = vmatmul.f32.gmra.mxu0 %v992
    %v1253 = vpop.f32.mrf.mxu0
    %v1254 = vadd.f32 %v1178, %v1253
    %1255 = vmatmul.f32.gmra.mxu0 %v996
    %v1256 = vpop.f32.mrf.mxu0
    %v1257 = vadd.f32 %v1178, %v1256
    %1258 = vmatmul.f32.gmra.mxu0 %v1000
    %v1259 = vpop.f32.mrf.mxu0
    %v1260 = vadd.f32 %v1178, %v1259
    %1261 = vmatmul.f32.gmra.mxu0 %v1004
    %v1262 = vpop.f32.mrf.mxu0
    %v1263 = vadd.f32 %v1178, %v1262
    %1264 = vmatmul.f32.gmra.mxu0 %v1008
    %v1265 = vpop.f32.mrf.mxu0
    %v1266 = vadd.f32 %v1178, %v1265
    %1267 = vmatmul.f32.gmra.mxu0 %v1012
    %v1268 = vpop.f32.mrf.mxu0
    %v1269 = vadd.f32 %v1178, %v1268
    %1270 = vmatmul.f32.gmra.mxu0 %v1016
    %v1271 = vpop.f32.mrf.mxu0
    %v1272 = vadd.f32 %v1178, %v1271
    %1273 = vmatmul.f32.gmra.mxu0 %v1020
    %v1274 = vpop.f32.mrf.mxu0
    %v1275 = vadd.f32 %v1178, %v1274
    %1276 = vmatmul.f32.gmra.mxu0 %v1024
    %v1277 = vpop.f32.mrf.mxu0
    %v1278 = vadd.f32 %v1178, %v1277
    %1279 = vmatmul.f32.gmra.mxu0 %v1028
    %v1280 = vpop.f32.mrf.mxu0
    %v1281 = vadd.f32 %v1178, %v1280
    %1282 = vmatmul.f32.gmra.mxu0 %v1032
    %v1283 = vpop.f32.mrf.mxu0
    %v1284 = vadd.f32 %v1178, %v1283
    %1285 = vmatmul.f32.gmra.mxu0 %v1036
    %v1286 = vpop.f32.mrf.mxu0
    %v1287 = vadd.f32 %v1178, %v1286
    %1288 = vmatmul.f32.gmra.mxu0 %v1040
    %v1289 = vpop.f32.mrf.mxu0
    %v1290 = vadd.f32 %v1178, %v1289
    %1291 = vmatmul.f32.gmra.mxu0 %v1044
    %v1292 = vpop.f32.mrf.mxu0
    %v1293 = vadd.f32 %v1178, %v1292
    %1294 = vdwg.mxu0
    %1295 = vmatpush.msra.mxu0 %v1110
    %1296 = vmatpush.msra.mxu0 %v1108
    %1297 = vmatpush.msra.mxu0 %v1106
    %1298 = vmatpush.msra.mxu0 %v1104
    %1299 = vmatpush.msra.mxu0 %v1102
    %1300 = vmatpush.msra.mxu0 %v1100
    %1301 = vmatpush.msra.mxu0 %v1098
    %1302 = vmatpush.msra.mxu0 %v1096
    %1303 = vmatpush.msra.mxu0 %v1094
    %1304 = vmatpush.msra.mxu0 %v1092
    %1305 = vmatpush.msra.mxu0 %v1090
    %1306 = vmatpush.msra.mxu0 %v1088
    %1307 = vmatpush.msra.mxu0 %v1086
    %1308 = vmatpush.msra.mxu0 %v1084
    %1309 = vmatpush.msra.mxu0 %v1082
    %1310 = vmatpush.msra.mxu0 %v1080
    %1311 = vmatmul.f32.gmra.mxu0 %v921
    %v1312 = vpop.f32.mrf.mxu0
    %v1313 = vadd.f32 %v1200, %v1312
    %1314 = vmatmul.f32.gmra.mxu0 %v925
    %v1315 = vpop.f32.mrf.mxu0
    %v1316 = vadd.f32 %v1203, %v1315
    %1317 = vmatmul.f32.gmra.mxu0 %v929
    %v1318 = vpop.f32.mrf.mxu0
    %v1319 = vadd.f32 %v1206, %v1318
    %1320 = vmatmul.f32.gmra.mxu0 %v933
    %v1321 = vpop.f32.mrf.mxu0
    %v1322 = vadd.f32 %v1209, %v1321
    %1323 = vmatmul.f32.gmra.mxu0 %v937
    %v1324 = vpop.f32.mrf.mxu0
    %v1325 = vadd.f32 %v1212, %v1324
    %1326 = vmatmul.f32.gmra.mxu0 %v941
    %v1327 = vpop.f32.mrf.mxu0
    %v1328 = vadd.f32 %v1215, %v1327
    %1329 = vmatmul.f32.gmra.mxu0 %v945
    %v1330 = vpop.f32.mrf.mxu0
    %v1331 = vadd.f32 %v1218, %v1330
    %1332 = vmatmul.f32.gmra.mxu0 %v949
    %v1333 = vpop.f32.mrf.mxu0
    %v1334 = vadd.f32 %v1221, %v1333
    %1335 = vmatmul.f32.gmra.mxu0 %v953
    %v1336 = vpop.f32.mrf.mxu0
    %v1337 = vadd.f32 %v1224, %v1336
    %1338 = vmatmul.f32.gmra.mxu0 %v957
    %v1339 = vpop.f32.mrf.mxu0
    %v1340 = vadd.f32 %v1227, %v1339
    %1341 = vmatmul.f32.gmra.mxu0 %v961
    %v1342 = vpop.f32.mrf.mxu0
    %v1343 = vadd.f32 %v1230, %v1342
    %1344 = vmatmul.f32.gmra.mxu0 %v965
    %v1345 = vpop.f32.mrf.mxu0
    %v1346 = vadd.f32 %v1233, %v1345
    %1347 = vmatmul.f32.gmra.mxu0 %v969
    %v1348 = vpop.f32.mrf.mxu0
    %v1349 = vadd.f32 %v1236, %v1348
    %1350 = vmatmul.f32.gmra.mxu0 %v973
    %v1351 = vpop.f32.mrf.mxu0
    %v1352 = vadd.f32 %v1239, %v1351
    %1353 = vmatmul.f32.gmra.mxu0 %v977
    %v1354 = vpop.f32.mrf.mxu0
    %v1355 = vadd.f32 %v1242, %v1354
    %1356 = vmatmul.f32.gmra.mxu0 %v981
    %v1357 = vpop.f32.mrf.mxu0
    %v1358 = vadd.f32 %v1245, %v1357
    %1359 = vmatmul.f32.gmra.mxu0 %v985
    %v1360 = vpop.f32.mrf.mxu0
    %v1361 = vadd.f32 %v1248, %v1360
    %1362 = vmatmul.f32.gmra.mxu0 %v989
    %v1363 = vpop.f32.mrf.mxu0
    %v1364 = vadd.f32 %v1251, %v1363
    %1365 = vmatmul.f32.gmra.mxu0 %v993
    %v1366 = vpop.f32.mrf.mxu0
    %v1367 = vadd.f32 %v1254, %v1366
    %1368 = vmatmul.f32.gmra.mxu0 %v997
    %v1369 = vpop.f32.mrf.mxu0
    %v1370 = vadd.f32 %v1257, %v1369
    %1371 = vmatmul.f32.gmra.mxu0 %v1001
    %v1372 = vpop.f32.mrf.mxu0
    %v1373 = vadd.f32 %v1260, %v1372
    %1374 = vmatmul.f32.gmra.mxu0 %v1005
    %v1375 = vpop.f32.mrf.mxu0
    %v1376 = vadd.f32 %v1263, %v1375
    %1377 = vmatmul.f32.gmra.mxu0 %v1009
    %v1378 = vpop.f32.mrf.mxu0
    %v1379 = vadd.f32 %v1266, %v1378
    %1380 = vmatmul.f32.gmra.mxu0 %v1013
    %v1381 = vpop.f32.mrf.mxu0
    %v1382 = vadd.f32 %v1269, %v1381
    %1383 = vmatmul.f32.gmra.mxu0 %v1017
    %v1384 = vpop.f32.mrf.mxu0
    %v1385 = vadd.f32 %v1272, %v1384
    %1386 = vmatmul.f32.gmra.mxu0 %v1021
    %v1387 = vpop.f32.mrf.mxu0
    %v1388 = vadd.f32 %v1275, %v1387
    %1389 = vmatmul.f32.gmra.mxu0 %v1025
    %v1390 = vpop.f32.mrf.mxu0
    %v1391 = vadd.f32 %v1278, %v1390
    %1392 = vmatmul.f32.gmra.mxu0 %v1029
    %v1393 = vpop.f32.mrf.mxu0
    %v1394 = vadd.f32 %v1281, %v1393
    %1395 = vmatmul.f32.gmra.mxu0 %v1033
    %v1396 = vpop.f32.mrf.mxu0
    %v1397 = vadd.f32 %v1284, %v1396
    %1398 = vmatmul.f32.gmra.mxu0 %v1037
    %v1399 = vpop.f32.mrf.mxu0
    %v1400 = vadd.f32 %v1287, %v1399
    %1401 = vmatmul.f32.gmra.mxu0 %v1041
    %v1402 = vpop.f32.mrf.mxu0
    %v1403 = vadd.f32 %v1290, %v1402
    %1404 = vmatmul.f32.gmra.mxu0 %v1045
    %v1405 = vpop.f32.mrf.mxu0
    %v1406 = vadd.f32 %v1293, %v1405
    %1407 = vdwg.mxu0
    %1408 = vmatpush.msra.mxu0 %v1142
    %1409 = vmatpush.msra.mxu0 %v1140
    %1410 = vmatpush.msra.mxu0 %v1138
    %1411 = vmatpush.msra.mxu0 %v1136
    %1412 = vmatpush.msra.mxu0 %v1134
    %1413 = vmatpush.msra.mxu0 %v1132
    %1414 = vmatpush.msra.mxu0 %v1130
    %1415 = vmatpush.msra.mxu0 %v1128
    %1416 = vmatpush.msra.mxu0 %v1126
    %1417 = vmatpush.msra.mxu0 %v1124
    %1418 = vmatpush.msra.mxu0 %v1122
    %1419 = vmatpush.msra.mxu0 %v1120
    %1420 = vmatpush.msra.mxu0 %v1118
    %1421 = vmatpush.msra.mxu0 %v1116
    %1422 = vmatpush.msra.mxu0 %v1114
    %1423 = vmatpush.msra.mxu0 %v1112
    %1424 = vmatmul.f32.gmra.mxu0 %v922
    %v1425 = vpop.f32.mrf.mxu0
    %v1426 = vadd.f32 %v1313, %v1425
    %1427 = vmatmul.f32.gmra.mxu0 %v926
    %v1428 = vpop.f32.mrf.mxu0
    %v1429 = vadd.f32 %v1316, %v1428
    %1430 = vmatmul.f32.gmra.mxu0 %v930
    %v1431 = vpop.f32.mrf.mxu0
    %v1432 = vadd.f32 %v1319, %v1431
    %1433 = vmatmul.f32.gmra.mxu0 %v934
    %v1434 = vpop.f32.mrf.mxu0
    %v1435 = vadd.f32 %v1322, %v1434
    %1436 = vmatmul.f32.gmra.mxu0 %v938
    %v1437 = vpop.f32.mrf.mxu0
    %v1438 = vadd.f32 %v1325, %v1437
    %1439 = vmatmul.f32.gmra.mxu0 %v942
    %v1440 = vpop.f32.mrf.mxu0
    %v1441 = vadd.f32 %v1328, %v1440
    %1442 = vmatmul.f32.gmra.mxu0 %v946
    %v1443 = vpop.f32.mrf.mxu0
    %v1444 = vadd.f32 %v1331, %v1443
    %1445 = vmatmul.f32.gmra.mxu0 %v950
    %v1446 = vpop.f32.mrf.mxu0
    %v1447 = vadd.f32 %v1334, %v1446
    %1448 = vmatmul.f32.gmra.mxu0 %v954
    %v1449 = vpop.f32.mrf.mxu0
    %v1450 = vadd.f32 %v1337, %v1449
    %1451 = vmatmul.f32.gmra.mxu0 %v958
    %v1452 = vpop.f32.mrf.mxu0
    %v1453 = vadd.f32 %v1340, %v1452
    %1454 = vmatmul.f32.gmra.mxu0 %v962
    %v1455 = vpop.f32.mrf.mxu0
    %v1456 = vadd.f32 %v1343, %v1455
    %1457 = vmatmul.f32.gmra.mxu0 %v966
    %v1458 = vpop.f32.mrf.mxu0
    %v1459 = vadd.f32 %v1346, %v1458
    %1460 = vmatmul.f32.gmra.mxu0 %v970
    %v1461 = vpop.f32.mrf.mxu0
    %v1462 = vadd.f32 %v1349, %v1461
    %1463 = vmatmul.f32.gmra.mxu0 %v974
    %v1464 = vpop.f32.mrf.mxu0
    %v1465 = vadd.f32 %v1352, %v1464
    %1466 = vmatmul.f32.gmra.mxu0 %v978
    %v1467 = vpop.f32.mrf.mxu0
    %v1468 = vadd.f32 %v1355, %v1467
    %1469 = vmatmul.f32.gmra.mxu0 %v982
    %v1470 = vpop.f32.mrf.mxu0
    %v1471 = vadd.f32 %v1358, %v1470
    %1472 = vmatmul.f32.gmra.mxu0 %v986
    %v1473 = vpop.f32.mrf.mxu0
    %v1474 = vadd.f32 %v1361, %v1473
    %1475 = vmatmul.f32.gmra.mxu0 %v990
    %v1476 = vpop.f32.mrf.mxu0
    %v1477 = vadd.f32 %v1364, %v1476
    %1478 = vmatmul.f32.gmra.mxu0 %v994
    %v1479 = vpop.f32.mrf.mxu0
    %v1480 = vadd.f32 %v1367, %v1479
    %1481 = vmatmul.f32.gmra.mxu0 %v998
    %v1482 = vpop.f32.mrf.mxu0
    %v1483 = vadd.f32 %v1370, %v1482
    %1484 = vmatmul.f32.gmra.mxu0 %v1002
    %v1485 = vpop.f32.mrf.mxu0
    %v1486 = vadd.f32 %v1373, %v1485
    %1487 = vmatmul.f32.gmra.mxu0 %v1006
    %v1488 = vpop.f32.mrf.mxu0
    %v1489 = vadd.f32 %v1376, %v1488
    %1490 = vmatmul.f32.gmra.mxu0 %v1010
    %v1491 = vpop.f32.mrf.mxu0
    %v1492 = vadd.f32 %v1379, %v1491
    %1493 = vmatmul.f32.gmra.mxu0 %v1014
    %v1494 = vpop.f32.mrf.mxu0
    %v1495 = vadd.f32 %v1382, %v1494
    %1496 = vmatmul.f32.gmra.mxu0 %v1018
    %v1497 = vpop.f32.mrf.mxu0
    %v1498 = vadd.f32 %v1385, %v1497
    %1499 = vmatmul.f32.gmra.mxu0 %v1022
    %v1500 = vpop.f32.mrf.mxu0
    %v1501 = vadd.f32 %v1388, %v1500
    %1502 = vmatmul.f32.gmra.mxu0 %v1026
    %v1503 = vpop.f32.mrf.mxu0
    %v1504 = vadd.f32 %v1391, %v1503
    %1505 = vmatmul.f32.gmra.mxu0 %v1030
    %v1506 = vpop.f32.mrf.mxu0
    %v1507 = vadd.f32 %v1394, %v1506
    %1508 = vmatmul.f32.gmra.mxu0 %v1034
    %v1509 = vpop.f32.mrf.mxu0
    %v1510 = vadd.f32 %v1397, %v1509
    %1511 = vmatmul.f32.gmra.mxu0 %v1038
    %v1512 = vpop.f32.mrf.mxu0
    %v1513 = vadd.f32 %v1400, %v1512
    %1514 = vmatmul.f32.gmra.mxu0 %v1042
    %v1515 = vpop.f32.mrf.mxu0
    %v1516 = vadd.f32 %v1403, %v1515
    %1517 = vmatmul.f32.gmra.mxu0 %v1046
    %v1518 = vpop.f32.mrf.mxu0
    %v1519 = vadd.f32 %v1406, %v1518
    %1520 = vdwg.mxu0
    %1521 = vmatpush.msra.mxu0 %v1174
    %1522 = vmatpush.msra.mxu0 %v1172
    %1523 = vmatpush.msra.mxu0 %v1170
    %1524 = vmatpush.msra.mxu0 %v1168
    %1525 = vmatpush.msra.mxu0 %v1166
    %1526 = vmatpush.msra.mxu0 %v1164
    %1527 = vmatpush.msra.mxu0 %v1162
    %1528 = vmatpush.msra.mxu0 %v1160
    %1529 = vmatpush.msra.mxu0 %v1158
    %1530 = vmatpush.msra.mxu0 %v1156
    %1531 = vmatpush.msra.mxu0 %v1154
    %1532 = vmatpush.msra.mxu0 %v1152
    %1533 = vmatpush.msra.mxu0 %v1150
    %1534 = vmatpush.msra.mxu0 %v1148
    %1535 = vmatpush.msra.mxu0 %v1146
    %1536 = vmatpush.msra.mxu0 %v1144
    %1537 = vmatmul.f32.gmra.mxu0 %v923
    %v1538 = vpop.f32.mrf.mxu0
    %v1539 = vadd.f32 %v1426, %v1538
    %1540 = vmatmul.f32.gmra.mxu0 %v927
    %v1541 = vpop.f32.mrf.mxu0
    %v1542 = vadd.f32 %v1429, %v1541
    %1543 = vmatmul.f32.gmra.mxu0 %v931
    %v1544 = vpop.f32.mrf.mxu0
    %v1545 = vadd.f32 %v1432, %v1544
    %1546 = vmatmul.f32.gmra.mxu0 %v935
    %v1547 = vpop.f32.mrf.mxu0
    %v1548 = vadd.f32 %v1435, %v1547
    %1549 = vmatmul.f32.gmra.mxu0 %v939
    %v1550 = vpop.f32.mrf.mxu0
    %v1551 = vadd.f32 %v1438, %v1550
    %1552 = vmatmul.f32.gmra.mxu0 %v943
    %v1553 = vpop.f32.mrf.mxu0
    %v1554 = vadd.f32 %v1441, %v1553
    %1555 = vmatmul.f32.gmra.mxu0 %v947
    %v1556 = vpop.f32.mrf.mxu0
    %v1557 = vadd.f32 %v1444, %v1556
    %1558 = vmatmul.f32.gmra.mxu0 %v951
    %v1559 = vpop.f32.mrf.mxu0
    %v1560 = vadd.f32 %v1447, %v1559
    %1561 = vmatmul.f32.gmra.mxu0 %v955
    %v1562 = vpop.f32.mrf.mxu0
    %v1563 = vadd.f32 %v1450, %v1562
    %1564 = vmatmul.f32.gmra.mxu0 %v959
    %v1565 = vpop.f32.mrf.mxu0
    %v1566 = vadd.f32 %v1453, %v1565
    %1567 = vmatmul.f32.gmra.mxu0 %v963
    %v1568 = vpop.f32.mrf.mxu0
    %v1569 = vadd.f32 %v1456, %v1568
    %1570 = vmatmul.f32.gmra.mxu0 %v967
    %v1571 = vpop.f32.mrf.mxu0
    %v1572 = vadd.f32 %v1459, %v1571
    %1573 = vmatmul.f32.gmra.mxu0 %v971
    %v1574 = vpop.f32.mrf.mxu0
    %v1575 = vadd.f32 %v1462, %v1574
    %1576 = vmatmul.f32.gmra.mxu0 %v975
    %v1577 = vpop.f32.mrf.mxu0
    %v1578 = vadd.f32 %v1465, %v1577
    %1579 = vmatmul.f32.gmra.mxu0 %v979
    %v1580 = vpop.f32.mrf.mxu0
    %v1581 = vadd.f32 %v1468, %v1580
    %1582 = vmatmul.f32.gmra.mxu0 %v983
    %v1583 = vpop.f32.mrf.mxu0
    %v1584 = vadd.f32 %v1471, %v1583
    %1585 = vmatmul.f32.gmra.mxu0 %v987
    %v1586 = vpop.f32.mrf.mxu0
    %v1587 = vadd.f32 %v1474, %v1586
    %1588 = vmatmul.f32.gmra.mxu0 %v991
    %v1589 = vpop.f32.mrf.mxu0
    %v1590 = vadd.f32 %v1477, %v1589
    %1591 = vmatmul.f32.gmra.mxu0 %v995
    %v1592 = vpop.f32.mrf.mxu0
    %v1593 = vadd.f32 %v1480, %v1592
    %1594 = vmatmul.f32.gmra.mxu0 %v999
    %v1595 = vpop.f32.mrf.mxu0
    %v1596 = vadd.f32 %v1483, %v1595
    %1597 = vmatmul.f32.gmra.mxu0 %v1003
    %v1598 = vpop.f32.mrf.mxu0
    %v1599 = vadd.f32 %v1486, %v1598
    %1600 = vmatmul.f32.gmra.mxu0 %v1007
    %v1601 = vpop.f32.mrf.mxu0
    %v1602 = vadd.f32 %v1489, %v1601
    %1603 = vmatmul.f32.gmra.mxu0 %v1011
    %v1604 = vpop.f32.mrf.mxu0
    %v1605 = vadd.f32 %v1492, %v1604
    %1606 = vmatmul.f32.gmra.mxu0 %v1015
    %v1607 = vpop.f32.mrf.mxu0
    %v1608 = vadd.f32 %v1495, %v1607
    %1609 = vmatmul.f32.gmra.mxu0 %v1019
    %v1610 = vpop.f32.mrf.mxu0
    %v1611 = vadd.f32 %v1498, %v1610
    %1612 = vmatmul.f32.gmra.mxu0 %v1023
    %v1613 = vpop.f32.mrf.mxu0
    %v1614 = vadd.f32 %v1501, %v1613
    %1615 = vmatmul.f32.gmra.mxu0 %v1027
    %v1616 = vpop.f32.mrf.mxu0
    %v1617 = vadd.f32 %v1504, %v1616
    %1618 = vmatmul.f32.gmra.mxu0 %v1031
    %v1619 = vpop.f32.mrf.mxu0
    %v1620 = vadd.f32 %v1507, %v1619
    %1621 = vmatmul.f32.gmra.mxu0 %v1035
    %v1622 = vpop.f32.mrf.mxu0
    %v1623 = vadd.f32 %v1510, %v1622
    %1624 = vmatmul.f32.gmra.mxu0 %v1039
    %v1625 = vpop.f32.mrf.mxu0
    %v1626 = vadd.f32 %v1513, %v1625
    %1627 = vmatmul.f32.gmra.mxu0 %v1043
    %v1628 = vpop.f32.mrf.mxu0
    %v1629 = vadd.f32 %v1516, %v1628
    %1630 = vmatmul.f32.gmra.mxu0 %v1047
    %v1631 = vpop.f32.mrf.mxu0
    %v1632 = vadd.f32 %v1519, %v1631
    %1633 = vdwg.mxu0
    %1634 = vmatpush.msra.mxu0 %v1079
    %1635 = vmatpush.msra.mxu0 %v1077
    %1636 = vmatpush.msra.mxu0 %v1075
    %1637 = vmatpush.msra.mxu0 %v1073
    %1638 = vmatpush.msra.mxu0 %v1071
    %1639 = vmatpush.msra.mxu0 %v1069
    %1640 = vmatpush.msra.mxu0 %v1067
    %1641 = vmatpush.msra.mxu0 %v1065
    %1642 = vmatpush.msra.mxu0 %v1063
    %1643 = vmatpush.msra.mxu0 %v1061
    %1644 = vmatpush.msra.mxu0 %v1059
    %1645 = vmatpush.msra.mxu0 %v1057
    %1646 = vmatpush.msra.mxu0 %v1055
    %1647 = vmatpush.msra.mxu0 %v1053
    %1648 = vmatpush.msra.mxu0 %v1051
    %1649 = vmatpush.msra.mxu0 %v1049
    %1650 = vmatmul.f32.gmra.mxu0 %v920
    %v1651 = vpop.f32.mrf.mxu0
    %v1652 = vadd.f32 %v1179, %v1651
    %1653 = vmatmul.f32.gmra.mxu0 %v924
    %v1654 = vpop.f32.mrf.mxu0
    %v1655 = vadd.f32 %v1179, %v1654
    %1656 = vmatmul.f32.gmra.mxu0 %v928
    %v1657 = vpop.f32.mrf.mxu0
    %v1658 = vadd.f32 %v1179, %v1657
    %1659 = vmatmul.f32.gmra.mxu0 %v932
    %v1660 = vpop.f32.mrf.mxu0
    %v1661 = vadd.f32 %v1179, %v1660
    %1662 = vmatmul.f32.gmra.mxu0 %v936
    %v1663 = vpop.f32.mrf.mxu0
    %v1664 = vadd.f32 %v1179, %v1663
    %1665 = vmatmul.f32.gmra.mxu0 %v940
    %v1666 = vpop.f32.mrf.mxu0
    %v1667 = vadd.f32 %v1179, %v1666
    %1668 = vmatmul.f32.gmra.mxu0 %v944
    %v1669 = vpop.f32.mrf.mxu0
    %v1670 = vadd.f32 %v1179, %v1669
    %1671 = vmatmul.f32.gmra.mxu0 %v948
    %v1672 = vpop.f32.mrf.mxu0
    %v1673 = vadd.f32 %v1179, %v1672
    %1674 = vmatmul.f32.gmra.mxu0 %v952
    %v1675 = vpop.f32.mrf.mxu0
    %v1676 = vadd.f32 %v1179, %v1675
    %1677 = vmatmul.f32.gmra.mxu0 %v956
    %v1678 = vpop.f32.mrf.mxu0
    %v1679 = vadd.f32 %v1179, %v1678
    %1680 = vmatmul.f32.gmra.mxu0 %v960
    %v1681 = vpop.f32.mrf.mxu0
    %v1682 = vadd.f32 %v1179, %v1681
    %1683 = vmatmul.f32.gmra.mxu0 %v964
    %v1684 = vpop.f32.mrf.mxu0
    %v1685 = vadd.f32 %v1179, %v1684
    %1686 = vmatmul.f32.gmra.mxu0 %v968
    %v1687 = vpop.f32.mrf.mxu0
    %v1688 = vadd.f32 %v1179, %v1687
    %1689 = vmatmul.f32.gmra.mxu0 %v972
    %v1690 = vpop.f32.mrf.mxu0
    %v1691 = vadd.f32 %v1179, %v1690
    %1692 = vmatmul.f32.gmra.mxu0 %v976
    %v1693 = vpop.f32.mrf.mxu0
    %v1694 = vadd.f32 %v1179, %v1693
    %1695 = vmatmul.f32.gmra.mxu0 %v980
    %v1696 = vpop.f32.mrf.mxu0
    %v1697 = vadd.f32 %v1179, %v1696
    %1698 = vmatmul.f32.gmra.mxu0 %v984
    %v1699 = vpop.f32.mrf.mxu0
    %v1700 = vadd.f32 %v1179, %v1699
    %1701 = vmatmul.f32.gmra.mxu0 %v988
    %v1702 = vpop.f32.mrf.mxu0
    %v1703 = vadd.f32 %v1179, %v1702
    %1704 = vmatmul.f32.gmra.mxu0 %v992
    %v1705 = vpop.f32.mrf.mxu0
    %v1706 = vadd.f32 %v1179, %v1705
    %1707 = vmatmul.f32.gmra.mxu0 %v996
    %v1708 = vpop.f32.mrf.mxu0
    %v1709 = vadd.f32 %v1179, %v1708
    %1710 = vmatmul.f32.gmra.mxu0 %v1000
    %v1711 = vpop.f32.mrf.mxu0
    %v1712 = vadd.f32 %v1179, %v1711
    %1713 = vmatmul.f32.gmra.mxu0 %v1004
    %v1714 = vpop.f32.mrf.mxu0
    %v1715 = vadd.f32 %v1179, %v1714
    %1716 = vmatmul.f32.gmra.mxu0 %v1008
    %v1717 = vpop.f32.mrf.mxu0
    %v1718 = vadd.f32 %v1179, %v1717
    %1719 = vmatmul.f32.gmra.mxu0 %v1012
    %v1720 = vpop.f32.mrf.mxu0
    %v1721 = vadd.f32 %v1179, %v1720
    %1722 = vmatmul.f32.gmra.mxu0 %v1016
    %v1723 = vpop.f32.mrf.mxu0
    %v1724 = vadd.f32 %v1179, %v1723
    %1725 = vmatmul.f32.gmra.mxu0 %v1020
    %v1726 = vpop.f32.mrf.mxu0
    %v1727 = vadd.f32 %v1179, %v1726
    %1728 = vmatmul.f32.gmra.mxu0 %v1024
    %v1729 = vpop.f32.mrf.mxu0
    %v1730 = vadd.f32 %v1179, %v1729
    %1731 = vmatmul.f32.gmra.mxu0 %v1028
    %v1732 = vpop.f32.mrf.mxu0
    %v1733 = vadd.f32 %v1179, %v1732
    %1734 = vmatmul.f32.gmra.mxu0 %v1032
    %v1735 = vpop.f32.mrf.mxu0
    %v1736 = vadd.f32 %v1179, %v1735
    %1737 = vmatmul.f32.gmra.mxu0 %v1036
    %v1738 = vpop.f32.mrf.mxu0
    %v1739 = vadd.f32 %v1179, %v1738
    %1740 = vmatmul.f32.gmra.mxu0 %v1040
    %v1741 = vpop.f32.mrf.mxu0
    %v1742 = vadd.f32 %v1179, %v1741
    %1743 = vmatmul.f32.gmra.mxu0 %v1044
    %v1744 = vpop.f32.mrf.mxu0
    %v1745 = vadd.f32 %v1179, %v1744
    %1746 = vdwg.mxu0
    %1747 = vmatpush.msra.mxu0 %v1111
    %1748 = vmatpush.msra.mxu0 %v1109
    %1749 = vmatpush.msra.mxu0 %v1107
    %1750 = vmatpush.msra.mxu0 %v1105
    %1751 = vmatpush.msra.mxu0 %v1103
    %1752 = vmatpush.msra.mxu0 %v1101
    %1753 = vmatpush.msra.mxu0 %v1099
    %1754 = vmatpush.msra.mxu0 %v1097
    %1755 = vmatpush.msra.mxu0 %v1095
    %1756 = vmatpush.msra.mxu0 %v1093
    %1757 = vmatpush.msra.mxu0 %v1091
    %1758 = vmatpush.msra.mxu0 %v1089
    %1759 = vmatpush.msra.mxu0 %v1087
    %1760 = vmatpush.msra.mxu0 %v1085
    %1761 = vmatpush.msra.mxu0 %v1083
    %1762 = vmatpush.msra.mxu0 %v1081
    %1763 = vmatmul.f32.gmra.mxu0 %v921
    %v1764 = vpop.f32.mrf.mxu0
    %v1765 = vadd.f32 %v1652, %v1764
    %1766 = vmatmul.f32.gmra.mxu0 %v925
    %v1767 = vpop.f32.mrf.mxu0
    %v1768 = vadd.f32 %v1655, %v1767
    %1769 = vmatmul.f32.gmra.mxu0 %v929
    %v1770 = vpop.f32.mrf.mxu0
    %v1771 = vadd.f32 %v1658, %v1770
    %1772 = vmatmul.f32.gmra.mxu0 %v933
    %v1773 = vpop.f32.mrf.mxu0
    %v1774 = vadd.f32 %v1661, %v1773
    %1775 = vmatmul.f32.gmra.mxu0 %v937
    %v1776 = vpop.f32.mrf.mxu0
    %v1777 = vadd.f32 %v1664, %v1776
    %1778 = vmatmul.f32.gmra.mxu0 %v941
    %v1779 = vpop.f32.mrf.mxu0
    %v1780 = vadd.f32 %v1667, %v1779
    %1781 = vmatmul.f32.gmra.mxu0 %v945
    %v1782 = vpop.f32.mrf.mxu0
    %v1783 = vadd.f32 %v1670, %v1782
    %1784 = vmatmul.f32.gmra.mxu0 %v949
    %v1785 = vpop.f32.mrf.mxu0
    %v1786 = vadd.f32 %v1673, %v1785
    %1787 = vmatmul.f32.gmra.mxu0 %v953
    %v1788 = vpop.f32.mrf.mxu0
    %v1789 = vadd.f32 %v1676, %v1788
    %1790 = vmatmul.f32.gmra.mxu0 %v957
    %v1791 = vpop.f32.mrf.mxu0
    %v1792 = vadd.f32 %v1679, %v1791
    %1793 = vmatmul.f32.gmra.mxu0 %v961
    %v1794 = vpop.f32.mrf.mxu0
    %v1795 = vadd.f32 %v1682, %v1794
    %1796 = vmatmul.f32.gmra.mxu0 %v965
    %v1797 = vpop.f32.mrf.mxu0
    %v1798 = vadd.f32 %v1685, %v1797
    %1799 = vmatmul.f32.gmra.mxu0 %v969
    %v1800 = vpop.f32.mrf.mxu0
    %v1801 = vadd.f32 %v1688, %v1800
    %1802 = vmatmul.f32.gmra.mxu0 %v973
    %v1803 = vpop.f32.mrf.mxu0
    %v1804 = vadd.f32 %v1691, %v1803
    %1805 = vmatmul.f32.gmra.mxu0 %v977
    %v1806 = vpop.f32.mrf.mxu0
    %v1807 = vadd.f32 %v1694, %v1806
    %1808 = vmatmul.f32.gmra.mxu0 %v981
    %v1809 = vpop.f32.mrf.mxu0
    %v1810 = vadd.f32 %v1697, %v1809
    %1811 = vmatmul.f32.gmra.mxu0 %v985
    %v1812 = vpop.f32.mrf.mxu0
    %v1813 = vadd.f32 %v1700, %v1812
    %1814 = vmatmul.f32.gmra.mxu0 %v989
    %v1815 = vpop.f32.mrf.mxu0
    %v1816 = vadd.f32 %v1703, %v1815
    %1817 = vmatmul.f32.gmra.mxu0 %v993
    %v1818 = vpop.f32.mrf.mxu0
    %v1819 = vadd.f32 %v1706, %v1818
    %1820 = vmatmul.f32.gmra.mxu0 %v997
    %v1821 = vpop.f32.mrf.mxu0
    %v1822 = vadd.f32 %v1709, %v1821
    %1823 = vmatmul.f32.gmra.mxu0 %v1001
    %v1824 = vpop.f32.mrf.mxu0
    %v1825 = vadd.f32 %v1712, %v1824
    %1826 = vmatmul.f32.gmra.mxu0 %v1005
    %v1827 = vpop.f32.mrf.mxu0
    %v1828 = vadd.f32 %v1715, %v1827
    %1829 = vmatmul.f32.gmra.mxu0 %v1009
    %v1830 = vpop.f32.mrf.mxu0
    %v1831 = vadd.f32 %v1718, %v1830
    %1832 = vmatmul.f32.gmra.mxu0 %v1013
    %v1833 = vpop.f32.mrf.mxu0
    %v1834 = vadd.f32 %v1721, %v1833
    %1835 = vmatmul.f32.gmra.mxu0 %v1017
    %v1836 = vpop.f32.mrf.mxu0
    %v1837 = vadd.f32 %v1724, %v1836
    %1838 = vmatmul.f32.gmra.mxu0 %v1021
    %v1839 = vpop.f32.mrf.mxu0
    %v1840 = vadd.f32 %v1727, %v1839
    %1841 = vmatmul.f32.gmra.mxu0 %v1025
    %v1842 = vpop.f32.mrf.mxu0
    %v1843 = vadd.f32 %v1730, %v1842
    %1844 = vmatmul.f32.gmra.mxu0 %v1029
    %v1845 = vpop.f32.mrf.mxu0
    %v1846 = vadd.f32 %v1733, %v1845
    %1847 = vmatmul.f32.gmra.mxu0 %v1033
    %v1848 = vpop.f32.mrf.mxu0
    %v1849 = vadd.f32 %v1736, %v1848
    %1850 = vmatmul.f32.gmra.mxu0 %v1037
    %v1851 = vpop.f32.mrf.mxu0
    %v1852 = vadd.f32 %v1739, %v1851
    %1853 = vmatmul.f32.gmra.mxu0 %v1041
    %v1854 = vpop.f32.mrf.mxu0
    %v1855 = vadd.f32 %v1742, %v1854
    %1856 = vmatmul.f32.gmra.mxu0 %v1045
    %v1857 = vpop.f32.mrf.mxu0
    %v1858 = vadd.f32 %v1745, %v1857
    %1859 = vdwg.mxu0
    %1860 = vmatpush.msra.mxu0 %v1143
    %1861 = vmatpush.msra.mxu0 %v1141
    %1862 = vmatpush.msra.mxu0 %v1139
    %1863 = vmatpush.msra.mxu0 %v1137
    %1864 = vmatpush.msra.mxu0 %v1135
    %1865 = vmatpush.msra.mxu0 %v1133
    %1866 = vmatpush.msra.mxu0 %v1131
    %1867 = vmatpush.msra.mxu0 %v1129
    %1868 = vmatpush.msra.mxu0 %v1127
    %1869 = vmatpush.msra.mxu0 %v1125
    %1870 = vmatpush.msra.mxu0 %v1123
    %1871 = vmatpush.msra.mxu0 %v1121
    %1872 = vmatpush.msra.mxu0 %v1119
    %1873 = vmatpush.msra.mxu0 %v1117
    %1874 = vmatpush.msra.mxu0 %v1115
    %1875 = vmatpush.msra.mxu0 %v1113
    %1876 = vmatmul.f32.gmra.mxu0 %v922
    %v1877 = vpop.f32.mrf.mxu0
    %v1878 = vadd.f32 %v1765, %v1877
    %1879 = vmatmul.f32.gmra.mxu0 %v926
    %v1880 = vpop.f32.mrf.mxu0
    %v1881 = vadd.f32 %v1768, %v1880
    %1882 = vmatmul.f32.gmra.mxu0 %v930
    %v1883 = vpop.f32.mrf.mxu0
    %v1884 = vadd.f32 %v1771, %v1883
    %1885 = vmatmul.f32.gmra.mxu0 %v934
    %v1886 = vpop.f32.mrf.mxu0
    %v1887 = vadd.f32 %v1774, %v1886
    %1888 = vmatmul.f32.gmra.mxu0 %v938
    %v1889 = vpop.f32.mrf.mxu0
    %v1890 = vadd.f32 %v1777, %v1889
    %1891 = vmatmul.f32.gmra.mxu0 %v942
    %v1892 = vpop.f32.mrf.mxu0
    %v1893 = vadd.f32 %v1780, %v1892
    %1894 = vmatmul.f32.gmra.mxu0 %v946
    %v1895 = vpop.f32.mrf.mxu0
    %v1896 = vadd.f32 %v1783, %v1895
    %1897 = vmatmul.f32.gmra.mxu0 %v950
    %v1898 = vpop.f32.mrf.mxu0
    %v1899 = vadd.f32 %v1786, %v1898
    %1900 = vmatmul.f32.gmra.mxu0 %v954
    %v1901 = vpop.f32.mrf.mxu0
    %v1902 = vadd.f32 %v1789, %v1901
    %1903 = vmatmul.f32.gmra.mxu0 %v958
    %v1904 = vpop.f32.mrf.mxu0
    %v1905 = vadd.f32 %v1792, %v1904
    %1906 = vmatmul.f32.gmra.mxu0 %v962
    %v1907 = vpop.f32.mrf.mxu0
    %v1908 = vadd.f32 %v1795, %v1907
    %1909 = vmatmul.f32.gmra.mxu0 %v966
    %v1910 = vpop.f32.mrf.mxu0
    %v1911 = vadd.f32 %v1798, %v1910
    %1912 = vmatmul.f32.gmra.mxu0 %v970
    %v1913 = vpop.f32.mrf.mxu0
    %v1914 = vadd.f32 %v1801, %v1913
    %1915 = vmatmul.f32.gmra.mxu0 %v974
    %v1916 = vpop.f32.mrf.mxu0
    %v1917 = vadd.f32 %v1804, %v1916
    %1918 = vmatmul.f32.gmra.mxu0 %v978
    %v1919 = vpop.f32.mrf.mxu0
    %v1920 = vadd.f32 %v1807, %v1919
    %1921 = vmatmul.f32.gmra.mxu0 %v982
    %v1922 = vpop.f32.mrf.mxu0
    %v1923 = vadd.f32 %v1810, %v1922
    %1924 = vmatmul.f32.gmra.mxu0 %v986
    %v1925 = vpop.f32.mrf.mxu0
    %v1926 = vadd.f32 %v1813, %v1925
    %1927 = vmatmul.f32.gmra.mxu0 %v990
    %v1928 = vpop.f32.mrf.mxu0
    %v1929 = vadd.f32 %v1816, %v1928
    %1930 = vmatmul.f32.gmra.mxu0 %v994
    %v1931 = vpop.f32.mrf.mxu0
    %v1932 = vadd.f32 %v1819, %v1931
    %1933 = vmatmul.f32.gmra.mxu0 %v998
    %v1934 = vpop.f32.mrf.mxu0
    %v1935 = vadd.f32 %v1822, %v1934
    %1936 = vmatmul.f32.gmra.mxu0 %v1002
    %v1937 = vpop.f32.mrf.mxu0
    %v1938 = vadd.f32 %v1825, %v1937
    %1939 = vmatmul.f32.gmra.mxu0 %v1006
    %v1940 = vpop.f32.mrf.mxu0
    %v1941 = vadd.f32 %v1828, %v1940
    %1942 = vmatmul.f32.gmra.mxu0 %v1010
    %v1943 = vpop.f32.mrf.mxu0
    %v1944 = vadd.f32 %v1831, %v1943
    %1945 = vmatmul.f32.gmra.mxu0 %v1014
    %v1946 = vpop.f32.mrf.mxu0
    %v1947 = vadd.f32 %v1834, %v1946
    %1948 = vmatmul.f32.gmra.mxu0 %v1018
    %v1949 = vpop.f32.mrf.mxu0
    %v1950 = vadd.f32 %v1837, %v1949
    %1951 = vmatmul.f32.gmra.mxu0 %v1022
    %v1952 = vpop.f32.mrf.mxu0
    %v1953 = vadd.f32 %v1840, %v1952
    %1954 = vmatmul.f32.gmra.mxu0 %v1026
    %v1955 = vpop.f32.mrf.mxu0
    %v1956 = vadd.f32 %v1843, %v1955
    %1957 = vmatmul.f32.gmra.mxu0 %v1030
    %v1958 = vpop.f32.mrf.mxu0
    %v1959 = vadd.f32 %v1846, %v1958
    %1960 = vmatmul.f32.gmra.mxu0 %v1034
    %v1961 = vpop.f32.mrf.mxu0
    %v1962 = vadd.f32 %v1849, %v1961
    %1963 = vmatmul.f32.gmra.mxu0 %v1038
    %v1964 = vpop.f32.mrf.mxu0
    %v1965 = vadd.f32 %v1852, %v1964
    %1966 = vmatmul.f32.gmra.mxu0 %v1042
    %v1967 = vpop.f32.mrf.mxu0
    %v1968 = vadd.f32 %v1855, %v1967
    %1969 = vmatmul.f32.gmra.mxu0 %v1046
    %v1970 = vpop.f32.mrf.mxu0
    %v1971 = vadd.f32 %v1858, %v1970
    %1972 = vdwg.mxu0
    %1973 = vmatpush.msra.mxu0 %v1175
    %1974 = vmatpush.msra.mxu0 %v1173
    %1975 = vmatpush.msra.mxu0 %v1171
    %1976 = vmatpush.msra.mxu0 %v1169
    %1977 = vmatpush.msra.mxu0 %v1167
    %1978 = vmatpush.msra.mxu0 %v1165
    %1979 = vmatpush.msra.mxu0 %v1163
    %1980 = vmatpush.msra.mxu0 %v1161
    %1981 = vmatpush.msra.mxu0 %v1159
    %1982 = vmatpush.msra.mxu0 %v1157
    %1983 = vmatpush.msra.mxu0 %v1155
    %1984 = vmatpush.msra.mxu0 %v1153
    %1985 = vmatpush.msra.mxu0 %v1151
    %1986 = vmatpush.msra.mxu0 %v1149
    %1987 = vmatpush.msra.mxu0 %v1147
    %1988 = vmatpush.msra.mxu0 %v1145
    %1989 = vmatmul.f32.gmra.mxu0 %v923
    %v1990 = vpop.f32.mrf.mxu0
    %v1991 = vadd.f32 %v1878, %v1990
    %1992 = vmatmul.f32.gmra.mxu0 %v927
    %v1993 = vpop.f32.mrf.mxu0
    %v1994 = vadd.f32 %v1881, %v1993
    %1995 = vmatmul.f32.gmra.mxu0 %v931
    %v1996 = vpop.f32.mrf.mxu0
    %v1997 = vadd.f32 %v1884, %v1996
    %1998 = vmatmul.f32.gmra.mxu0 %v935
    %v1999 = vpop.f32.mrf.mxu0
    %v2000 = vadd.f32 %v1887, %v1999
    %2001 = vmatmul.f32.gmra.mxu0 %v939
    %v2002 = vpop.f32.mrf.mxu0
    %v2003 = vadd.f32 %v1890, %v2002
    %2004 = vmatmul.f32.gmra.mxu0 %v943
    %v2005 = vpop.f32.mrf.mxu0
    %v2006 = vadd.f32 %v1893, %v2005
    %2007 = vmatmul.f32.gmra.mxu0 %v947
    %v2008 = vpop.f32.mrf.mxu0
    %v2009 = vadd.f32 %v1896, %v2008
    %2010 = vmatmul.f32.gmra.mxu0 %v951
    %v2011 = vpop.f32.mrf.mxu0
    %v2012 = vadd.f32 %v1899, %v2011
    %2013 = vmatmul.f32.gmra.mxu0 %v955
    %v2014 = vpop.f32.mrf.mxu0
    %v2015 = vadd.f32 %v1902, %v2014
    %2016 = vmatmul.f32.gmra.mxu0 %v959
    %v2017 = vpop.f32.mrf.mxu0
    %v2018 = vadd.f32 %v1905, %v2017
    %2019 = vmatmul.f32.gmra.mxu0 %v963
    %v2020 = vpop.f32.mrf.mxu0
    %v2021 = vadd.f32 %v1908, %v2020
    %2022 = vmatmul.f32.gmra.mxu0 %v967
    %v2023 = vpop.f32.mrf.mxu0
    %v2024 = vadd.f32 %v1911, %v2023
    %2025 = vmatmul.f32.gmra.mxu0 %v971
    %v2026 = vpop.f32.mrf.mxu0
    %v2027 = vadd.f32 %v1914, %v2026
    %2028 = vmatmul.f32.gmra.mxu0 %v975
    %v2029 = vpop.f32.mrf.mxu0
    %v2030 = vadd.f32 %v1917, %v2029
    %2031 = vmatmul.f32.gmra.mxu0 %v979
    %v2032 = vpop.f32.mrf.mxu0
    %v2033 = vadd.f32 %v1920, %v2032
    %2034 = vmatmul.f32.gmra.mxu0 %v983
    %v2035 = vpop.f32.mrf.mxu0
    %v2036 = vadd.f32 %v1923, %v2035
    %2037 = vmatmul.f32.gmra.mxu0 %v987
    %v2038 = vpop.f32.mrf.mxu0
    %v2039 = vadd.f32 %v1926, %v2038
    %2040 = vmatmul.f32.gmra.mxu0 %v991
    %v2041 = vpop.f32.mrf.mxu0
    %v2042 = vadd.f32 %v1929, %v2041
    %2043 = vmatmul.f32.gmra.mxu0 %v995
    %v2044 = vpop.f32.mrf.mxu0
    %v2045 = vadd.f32 %v1932, %v2044
    %2046 = vmatmul.f32.gmra.mxu0 %v999
    %v2047 = vpop.f32.mrf.mxu0
    %v2048 = vadd.f32 %v1935, %v2047
    %2049 = vmatmul.f32.gmra.mxu0 %v1003
    %v2050 = vpop.f32.mrf.mxu0
    %v2051 = vadd.f32 %v1938, %v2050
    %2052 = vmatmul.f32.gmra.mxu0 %v1007
    %v2053 = vpop.f32.mrf.mxu0
    %v2054 = vadd.f32 %v1941, %v2053
    %2055 = vmatmul.f32.gmra.mxu0 %v1011
    %v2056 = vpop.f32.mrf.mxu0
    %v2057 = vadd.f32 %v1944, %v2056
    %2058 = vmatmul.f32.gmra.mxu0 %v1015
    %v2059 = vpop.f32.mrf.mxu0
    %v2060 = vadd.f32 %v1947, %v2059
    %2061 = vmatmul.f32.gmra.mxu0 %v1019
    %v2062 = vpop.f32.mrf.mxu0
    %v2063 = vadd.f32 %v1950, %v2062
    %2064 = vmatmul.f32.gmra.mxu0 %v1023
    %v2065 = vpop.f32.mrf.mxu0
    %v2066 = vadd.f32 %v1953, %v2065
    %2067 = vmatmul.f32.gmra.mxu0 %v1027
    %v2068 = vpop.f32.mrf.mxu0
    %v2069 = vadd.f32 %v1956, %v2068
    %2070 = vmatmul.f32.gmra.mxu0 %v1031
    %v2071 = vpop.f32.mrf.mxu0
    %v2072 = vadd.f32 %v1959, %v2071
    %2073 = vmatmul.f32.gmra.mxu0 %v1035
    %v2074 = vpop.f32.mrf.mxu0
    %v2075 = vadd.f32 %v1962, %v2074
    %2076 = vmatmul.f32.gmra.mxu0 %v1039
    %v2077 = vpop.f32.mrf.mxu0
    %v2078 = vadd.f32 %v1965, %v2077
    %2079 = vmatmul.f32.gmra.mxu0 %v1043
    %v2080 = vpop.f32.mrf.mxu0
    %v2081 = vadd.f32 %v1968, %v2080
    %2082 = vmatmul.f32.gmra.mxu0 %v1047
    %v2083 = vpop.f32.mrf.mxu0
    %v2084 = vadd.f32 %v1971, %v2083
    %2085 = vdwg.mxu0
    %v2086 = vmax.f32 %v1539, 0.0
    %v2087 = vmax.f32 %v1991, 0.0
    %v2088 = vmax.f32 %v1542, 0.0
    %v2089 = vmax.f32 %v1994, 0.0
    %v2090 = vmax.f32 %v1545, 0.0
    %v2091 = vmax.f32 %v1997, 0.0
    %v2092 = vmax.f32 %v1548, 0.0
    %v2093 = vmax.f32 %v2000, 0.0
    %v2094 = vmax.f32 %v1551, 0.0
    %v2095 = vmax.f32 %v2003, 0.0
    %v2096 = vmax.f32 %v1554, 0.0
    %v2097 = vmax.f32 %v2006, 0.0
    %v2098 = vmax.f32 %v1557, 0.0
    %v2099 = vmax.f32 %v2009, 0.0
    %v2100 = vmax.f32 %v1560, 0.0
    %v2101 = vmax.f32 %v2012, 0.0
    %v2102 = vmax.f32 %v1563, 0.0
    %v2103 = vmax.f32 %v2015, 0.0
    %v2104 = vmax.f32 %v1566, 0.0
    %v2105 = vmax.f32 %v2018, 0.0
    %v2106 = vmax.f32 %v1569, 0.0
    %v2107 = vmax.f32 %v2021, 0.0
    %v2108 = vmax.f32 %v1572, 0.0
    %v2109 = vmax.f32 %v2024, 0.0
    %v2110 = vmax.f32 %v1575, 0.0
    %v2111 = vmax.f32 %v2027, 0.0
    %v2112 = vmax.f32 %v1578, 0.0
    %v2113 = vmax.f32 %v2030, 0.0
    %v2114 = vmax.f32 %v1581, 0.0
    %v2115 = vmax.f32 %v2033, 0.0
    %v2116 = vmax.f32 %v1584, 0.0
    %v2117 = vmax.f32 %v2036, 0.0
    %v2118 = vmax.f32 %v1587, 0.0
    %v2119 = vmax.f32 %v2039, 0.0
    %v2120 = vmax.f32 %v1590, 0.0
    %v2121 = vmax.f32 %v2042, 0.0
    %v2122 = vmax.f32 %v1593, 0.0
    %v2123 = vmax.f32 %v2045, 0.0
    %v2124 = vmax.f32 %v1596, 0.0
    %v2125 = vmax.f32 %v2048, 0.0
    %v2126 = vmax.f32 %v1599, 0.0
    %v2127 = vmax.f32 %v2051, 0.0
    %v2128 = vmax.f32 %v1602, 0.0
    %v2129 = vmax.f32 %v2054, 0.0
    %v2130 = vmax.f32 %v1605, 0.0
    %v2131 = vmax.f32 %v2057, 0.0
    %v2132 = vmax.f32 %v1608, 0.0
    %v2133 = vmax.f32 %v2060, 0.0
    %v2134 = vmax.f32 %v1611, 0.0
    %v2135 = vmax.f32 %v2063, 0.0
    %v2136 = vmax.f32 %v1614, 0.0
    %v2137 = vmax.f32 %v2066, 0.0
    %v2138 = vmax.f32 %v1617, 0.0
    %v2139 = vmax.f32 %v2069, 0.0
    %v2140 = vmax.f32 %v1620, 0.0
    %v2141 = vmax.f32 %v2072, 0.0
    %v2142 = vmax.f32 %v1623, 0.0
    %v2143 = vmax.f32 %v2075, 0.0
    %v2144 = vmax.f32 %v1626, 0.0
    %v2145 = vmax.f32 %v2078, 0.0
    %v2146 = vmax.f32 %v1629, 0.0
    %v2147 = vmax.f32 %v2081, 0.0
    %v2148 = vmax.f32 %v1632, 0.0
    %v2149 = vmax.f32 %v2084, 0.0
    %v2150 = vld [vmem:[%s5] sm:$0xff]
    %v2151 = vld [vmem:[%s5 + $0x8] sm:$0xff]
    %v2152 = vld [vmem:[%s5 + $0x10] sm:$0xff]
    %v2153 = vld [vmem:[%s5 + $0x18] sm:$0xff]
    %v2154 = vld [vmem:[%s5 + $0x20] sm:$0xff]
    %v2155 = vld [vmem:[%s5 + $0x28] sm:$0xff]
    %v2156 = vld [vmem:[%s5 + $0x30] sm:$0xff]
    %v2157 = vld [vmem:[%s5 + $0x38] sm:$0xff]
    %v2158 = vld [vmem:[%s5 + $0x40] sm:$0xff]
    %v2159 = vld [vmem:[%s5 + $0x48] sm:$0xff]
    %v2160 = vld [vmem:[%s5 + $0x50] sm:$0xff]
    %v2161 = vld [vmem:[%s5 + $0x58] sm:$0xff]
    %v2162 = vld [vmem:[%s5 + $0x60] sm:$0xff]
    %v2163 = vld [vmem:[%s5 + $0x68] sm:$0xff]
    %v2164 = vld [vmem:[%s5 + $0x70] sm:$0xff]
    %v2165 = vld [vmem:[%s5 + $0x78] sm:$0xff]
    %v2166 = vld [vmem:[%s5 + $0x80] sm:$0xff]
    %v2167 = vld [vmem:[%s5 + $0x88] sm:$0xff]
    %v2168 = vld [vmem:[%s5 + $0x90] sm:$0xff]
    %v2169 = vld [vmem:[%s5 + $0x98] sm:$0xff]
    %v2170 = vld [vmem:[%s5 + $0xa0] sm:$0xff]
    %v2171 = vld [vmem:[%s5 + $0xa8] sm:$0xff]
    %v2172 = vld [vmem:[%s5 + $0xb0] sm:$0xff]
    %v2173 = vld [vmem:[%s5 + $0xb8] sm:$0xff]
    %v2174 = vld [vmem:[%s5 + $0xc0] sm:$0xff]
    %v2175 = vld [vmem:[%s5 + $0xc8] sm:$0xff]
    %v2176 = vld [vmem:[%s5 + $0xd0] sm:$0xff]
    %v2177 = vld [vmem:[%s5 + $0xd8] sm:$0xff]
    %v2178 = vld [vmem:[%s5 + $0xe0] sm:$0xff]
    %v2179 = vld [vmem:[%s5 + $0xe8] sm:$0xff]
    %v2180 = vld [vmem:[%s5 + $0xf0] sm:$0xff]
    %v2181 = vld [vmem:[%s5 + $0xf8] sm:$0xff]
    %2182 = vmatpush.msra.mxu0 %v2165
    %2183 = vmatpush.msra.mxu0 %v2164
    %2184 = vmatpush.msra.mxu0 %v2163
    %2185 = vmatpush.msra.mxu0 %v2162
    %2186 = vmatpush.msra.mxu0 %v2161
    %2187 = vmatpush.msra.mxu0 %v2160
    %2188 = vmatpush.msra.mxu0 %v2159
    %2189 = vmatpush.msra.mxu0 %v2158
    %2190 = vmatpush.msra.mxu0 %v2157
    %2191 = vmatpush.msra.mxu0 %v2156
    %2192 = vmatpush.msra.mxu0 %v2155
    %2193 = vmatpush.msra.mxu0 %v2154
    %2194 = vmatpush.msra.mxu0 %v2153
    %2195 = vmatpush.msra.mxu0 %v2152
    %2196 = vmatpush.msra.mxu0 %v2151
    %2197 = vmatpush.msra.mxu0 %v2150
    %2198 = vmatmul.f32.gmra.mxu0 %v2086
    %v2199 = vpop.f32.mrf.mxu0
    %v2200 = vadd.f32 %v687, %v2199
    %2201 = vmatmul.f32.gmra.mxu0 %v2088
    %v2202 = vpop.f32.mrf.mxu0
    %v2203 = vadd.f32 %v690, %v2202
    %2204 = vmatmul.f32.gmra.mxu0 %v2090
    %v2205 = vpop.f32.mrf.mxu0
    %v2206 = vadd.f32 %v693, %v2205
    %2207 = vmatmul.f32.gmra.mxu0 %v2092
    %v2208 = vpop.f32.mrf.mxu0
    %v2209 = vadd.f32 %v696, %v2208
    %2210 = vmatmul.f32.gmra.mxu0 %v2094
    %v2211 = vpop.f32.mrf.mxu0
    %v2212 = vadd.f32 %v699, %v2211
    %2213 = vmatmul.f32.gmra.mxu0 %v2096
    %v2214 = vpop.f32.mrf.mxu0
    %v2215 = vadd.f32 %v702, %v2214
    %2216 = vmatmul.f32.gmra.mxu0 %v2098
    %v2217 = vpop.f32.mrf.mxu0
    %v2218 = vadd.f32 %v705, %v2217
    %2219 = vmatmul.f32.gmra.mxu0 %v2100
    %v2220 = vpop.f32.mrf.mxu0
    %v2221 = vadd.f32 %v708, %v2220
    %2222 = vmatmul.f32.gmra.mxu0 %v2102
    %v2223 = vpop.f32.mrf.mxu0
    %v2224 = vadd.f32 %v711, %v2223
    %2225 = vmatmul.f32.gmra.mxu0 %v2104
    %v2226 = vpop.f32.mrf.mxu0
    %v2227 = vadd.f32 %v714, %v2226
    %2228 = vmatmul.f32.gmra.mxu0 %v2106
    %v2229 = vpop.f32.mrf.mxu0
    %v2230 = vadd.f32 %v717, %v2229
    %2231 = vmatmul.f32.gmra.mxu0 %v2108
    %v2232 = vpop.f32.mrf.mxu0
    %v2233 = vadd.f32 %v720, %v2232
    %2234 = vmatmul.f32.gmra.mxu0 %v2110
    %v2235 = vpop.f32.mrf.mxu0
    %v2236 = vadd.f32 %v723, %v2235
    %2237 = vmatmul.f32.gmra.mxu0 %v2112
    %v2238 = vpop.f32.mrf.mxu0
    %v2239 = vadd.f32 %v726, %v2238
    %2240 = vmatmul.f32.gmra.mxu0 %v2114
    %v2241 = vpop.f32.mrf.mxu0
    %v2242 = vadd.f32 %v729, %v2241
    %2243 = vmatmul.f32.gmra.mxu0 %v2116
    %v2244 = vpop.f32.mrf.mxu0
    %v2245 = vadd.f32 %v732, %v2244
    %2246 = vmatmul.f32.gmra.mxu0 %v2118
    %v2247 = vpop.f32.mrf.mxu0
    %v2248 = vadd.f32 %v735, %v2247
    %2249 = vmatmul.f32.gmra.mxu0 %v2120
    %v2250 = vpop.f32.mrf.mxu0
    %v2251 = vadd.f32 %v738, %v2250
    %2252 = vmatmul.f32.gmra.mxu0 %v2122
    %v2253 = vpop.f32.mrf.mxu0
    %v2254 = vadd.f32 %v741, %v2253
    %2255 = vmatmul.f32.gmra.mxu0 %v2124
    %v2256 = vpop.f32.mrf.mxu0
    %v2257 = vadd.f32 %v744, %v2256
    %2258 = vmatmul.f32.gmra.mxu0 %v2126
    %v2259 = vpop.f32.mrf.mxu0
    %v2260 = vadd.f32 %v747, %v2259
    %2261 = vmatmul.f32.gmra.mxu0 %v2128
    %v2262 = vpop.f32.mrf.mxu0
    %v2263 = vadd.f32 %v750, %v2262
    %2264 = vmatmul.f32.gmra.mxu0 %v2130
    %v2265 = vpop.f32.mrf.mxu0
    %v2266 = vadd.f32 %v753, %v2265
    %2267 = vmatmul.f32.gmra.mxu0 %v2132
    %v2268 = vpop.f32.mrf.mxu0
    %v2269 = vadd.f32 %v756, %v2268
    %2270 = vmatmul.f32.gmra.mxu0 %v2134
    %v2271 = vpop.f32.mrf.mxu0
    %v2272 = vadd.f32 %v759, %v2271
    %2273 = vmatmul.f32.gmra.mxu0 %v2136
    %v2274 = vpop.f32.mrf.mxu0
    %v2275 = vadd.f32 %v762, %v2274
    %2276 = vmatmul.f32.gmra.mxu0 %v2138
    %v2277 = vpop.f32.mrf.mxu0
    %v2278 = vadd.f32 %v765, %v2277
    %2279 = vmatmul.f32.gmra.mxu0 %v2140
    %v2280 = vpop.f32.mrf.mxu0
    %v2281 = vadd.f32 %v768, %v2280
    %2282 = vmatmul.f32.gmra.mxu0 %v2142
    %v2283 = vpop.f32.mrf.mxu0
    %v2284 = vadd.f32 %v771, %v2283
    %2285 = vmatmul.f32.gmra.mxu0 %v2144
    %v2286 = vpop.f32.mrf.mxu0
    %v2287 = vadd.f32 %v774, %v2286
    %2288 = vmatmul.f32.gmra.mxu0 %v2146
    %v2289 = vpop.f32.mrf.mxu0
    %v2290 = vadd.f32 %v777, %v2289
    %2291 = vmatmul.f32.gmra.mxu0 %v2148
    %v2292 = vpop.f32.mrf.mxu0
    %v2293 = vadd.f32 %v780, %v2292
    %2294 = vdwg.mxu0
    %2295 = vmatpush.msra.mxu0 %v2181
    %2296 = vmatpush.msra.mxu0 %v2180
    %2297 = vmatpush.msra.mxu0 %v2179
    %2298 = vmatpush.msra.mxu0 %v2178
    %2299 = vmatpush.msra.mxu0 %v2177
    %2300 = vmatpush.msra.mxu0 %v2176
    %2301 = vmatpush.msra.mxu0 %v2175
    %2302 = vmatpush.msra.mxu0 %v2174
    %2303 = vmatpush.msra.mxu0 %v2173
    %2304 = vmatpush.msra.mxu0 %v2172
    %2305 = vmatpush.msra.mxu0 %v2171
    %2306 = vmatpush.msra.mxu0 %v2170
    %2307 = vmatpush.msra.mxu0 %v2169
    %2308 = vmatpush.msra.mxu0 %v2168
    %2309 = vmatpush.msra.mxu0 %v2167
    %2310 = vmatpush.msra.mxu0 %v2166
    %2311 = vmatmul.f32.gmra.mxu0 %v2087
    %v2312 = vpop.f32.mrf.mxu0
    %v2313 = vadd.f32 %v2200, %v2312
    %2314 = vmatmul.f32.gmra.mxu0 %v2089
    %v2315 = vpop.f32.mrf.mxu0
    %v2316 = vadd.f32 %v2203, %v2315
    %2317 = vmatmul.f32.gmra.mxu0 %v2091
    %v2318 = vpop.f32.mrf.mxu0
    %v2319 = vadd.f32 %v2206, %v2318
    %2320 = vmatmul.f32.gmra.mxu0 %v2093
    %v2321 = vpop.f32.mrf.mxu0
    %v2322 = vadd.f32 %v2209, %v2321
    %2323 = vmatmul.f32.gmra.mxu0 %v2095
    %v2324 = vpop.f32.mrf.mxu0
    %v2325 = vadd.f32 %v2212, %v2324
    %2326 = vmatmul.f32.gmra.mxu0 %v2097
    %v2327 = vpop.f32.mrf.mxu0
    %v2328 = vadd.f32 %v2215, %v2327
    %2329 = vmatmul.f32.gmra.mxu0 %v2099
    %v2330 = vpop.f32.mrf.mxu0
    %v2331 = vadd.f32 %v2218, %v2330
    %2332 = vmatmul.f32.gmra.mxu0 %v2101
    %v2333 = vpop.f32.mrf.mxu0
    %v2334 = vadd.f32 %v2221, %v2333
    %2335 = vmatmul.f32.gmra.mxu0 %v2103
    %v2336 = vpop.f32.mrf.mxu0
    %v2337 = vadd.f32 %v2224, %v2336
    %2338 = vmatmul.f32.gmra.mxu0 %v2105
    %v2339 = vpop.f32.mrf.mxu0
    %v2340 = vadd.f32 %v2227, %v2339
    %2341 = vmatmul.f32.gmra.mxu0 %v2107
    %v2342 = vpop.f32.mrf.mxu0
    %v2343 = vadd.f32 %v2230, %v2342
    %2344 = vmatmul.f32.gmra.mxu0 %v2109
    %v2345 = vpop.f32.mrf.mxu0
    %v2346 = vadd.f32 %v2233, %v2345
    %2347 = vmatmul.f32.gmra.mxu0 %v2111
    %v2348 = vpop.f32.mrf.mxu0
    %v2349 = vadd.f32 %v2236, %v2348
    %2350 = vmatmul.f32.gmra.mxu0 %v2113
    %v2351 = vpop.f32.mrf.mxu0
    %v2352 = vadd.f32 %v2239, %v2351
    %2353 = vmatmul.f32.gmra.mxu0 %v2115
    %v2354 = vpop.f32.mrf.mxu0
    %v2355 = vadd.f32 %v2242, %v2354
    %2356 = vmatmul.f32.gmra.mxu0 %v2117
    %v2357 = vpop.f32.mrf.mxu0
    %v2358 = vadd.f32 %v2245, %v2357
    %2359 = vmatmul.f32.gmra.mxu0 %v2119
    %v2360 = vpop.f32.mrf.mxu0
    %v2361 = vadd.f32 %v2248, %v2360
    %2362 = vmatmul.f32.gmra.mxu0 %v2121
    %v2363 = vpop.f32.mrf.mxu0
    %v2364 = vadd.f32 %v2251, %v2363
    %2365 = vmatmul.f32.gmra.mxu0 %v2123
    %v2366 = vpop.f32.mrf.mxu0
    %v2367 = vadd.f32 %v2254, %v2366
    %2368 = vmatmul.f32.gmra.mxu0 %v2125
    %v2369 = vpop.f32.mrf.mxu0
    %v2370 = vadd.f32 %v2257, %v2369
    %2371 = vmatmul.f32.gmra.mxu0 %v2127
    %v2372 = vpop.f32.mrf.mxu0
    %v2373 = vadd.f32 %v2260, %v2372
    %2374 = vmatmul.f32.gmra.mxu0 %v2129
    %v2375 = vpop.f32.mrf.mxu0
    %v2376 = vadd.f32 %v2263, %v2375
    %2377 = vmatmul.f32.gmra.mxu0 %v2131
    %v2378 = vpop.f32.mrf.mxu0
    %v2379 = vadd.f32 %v2266, %v2378
    %2380 = vmatmul.f32.gmra.mxu0 %v2133
    %v2381 = vpop.f32.mrf.mxu0
    %v2382 = vadd.f32 %v2269, %v2381
    %2383 = vmatmul.f32.gmra.mxu0 %v2135
    %v2384 = vpop.f32.mrf.mxu0
    %v2385 = vadd.f32 %v2272, %v2384
    %2386 = vmatmul.f32.gmra.mxu0 %v2137
    %v2387 = vpop.f32.mrf.mxu0
    %v2388 = vadd.f32 %v2275, %v2387
    %2389 = vmatmul.f32.gmra.mxu0 %v2139
    %v2390 = vpop.f32.mrf.mxu0
    %v2391 = vadd.f32 %v2278, %v2390
    %2392 = vmatmul.f32.gmra.mxu0 %v2141
    %v2393 = vpop.f32.mrf.mxu0
    %v2394 = vadd.f32 %v2281, %v2393
    %2395 = vmatmul.f32.gmra.mxu0 %v2143
    %v2396 = vpop.f32.mrf.mxu0
    %v2397 = vadd.f32 %v2284, %v2396
    %2398 = vmatmul.f32.gmra.mxu0 %v2145
    %v2399 = vpop.f32.mrf.mxu0
    %v2400 = vadd.f32 %v2287, %v2399
    %2401 = vmatmul.f32.gmra.mxu0 %v2147
    %v2402 = vpop.f32.mrf.mxu0
    %v2403 = vadd.f32 %v2290, %v2402
    %2404 = vmatmul.f32.gmra.mxu0 %v2149
    %v2405 = vpop.f32.mrf.mxu0
    %v2406 = vadd.f32 %v2293, %v2405
    %2407 = vdwg.mxu0
    %v2408 = vld [vmem:[%s6] sm:$0x1]
    %v2410 = vperm.slane %v2408, 0
    %v2412 = vadd.f32 %v2313, %v2410
    %v2413 = vadd.f32 %v2316, %v2410
    %v2414 = vadd.f32 %v2319, %v2410
    %v2415 = vadd.f32 %v2322, %v2410
    %v2416 = vadd.f32 %v2325, %v2410
    %v2417 = vadd.f32 %v2328, %v2410
    %v2418 = vadd.f32 %v2331, %v2410
    %v2419 = vadd.f32 %v2334, %v2410
    %v2420 = vadd.f32 %v2337, %v2410
    %v2421 = vadd.f32 %v2340, %v2410
    %v2422 = vadd.f32 %v2343, %v2410
    %v2423 = vadd.f32 %v2346, %v2410
    %v2424 = vadd.f32 %v2349, %v2410
    %v2425 = vadd.f32 %v2352, %v2410
    %v2426 = vadd.f32 %v2355, %v2410
    %v2427 = vadd.f32 %v2358, %v2410
    %v2428 = vadd.f32 %v2361, %v2410
    %v2429 = vadd.f32 %v2364, %v2410
    %v2430 = vadd.f32 %v2367, %v2410
    %v2431 = vadd.f32 %v2370, %v2410
    %v2432 = vadd.f32 %v2373, %v2410
    %v2433 = vadd.f32 %v2376, %v2410
    %v2434 = vadd.f32 %v2379, %v2410
    %v2435 = vadd.f32 %v2382, %v2410
    %v2436 = vadd.f32 %v2385, %v2410
    %v2437 = vadd.f32 %v2388, %v2410
    %v2438 = vadd.f32 %v2391, %v2410
    %v2439 = vadd.f32 %v2394, %v2410
    %v2440 = vadd.f32 %v2397, %v2410
    %v2441 = vadd.f32 %v2400, %v2410
    %v2442 = vadd.f32 %v2403, %v2410
    %v2443 = vadd.f32 %v2406, %v2410
    %v2444 = vmax.f32 %v2412, 0.0
    %v2445 = vmax.f32 %v2413, 0.0
    %v2446 = vmax.f32 %v2414, 0.0
    %v2447 = vmax.f32 %v2415, 0.0
    %v2448 = vmax.f32 %v2416, 0.0
    %v2449 = vmax.f32 %v2417, 0.0
    %v2450 = vmax.f32 %v2418, 0.0
    %v2451 = vmax.f32 %v2419, 0.0
    %v2452 = vmax.f32 %v2420, 0.0
    %v2453 = vmax.f32 %v2421, 0.0
    %v2454 = vmax.f32 %v2422, 0.0
    %v2455 = vmax.f32 %v2423, 0.0
    %v2456 = vmax.f32 %v2424, 0.0
    %v2457 = vmax.f32 %v2425, 0.0
    %v2458 = vmax.f32 %v2426, 0.0
    %v2459 = vmax.f32 %v2427, 0.0
    %v2460 = vmax.f32 %v2428, 0.0
    %v2461 = vmax.f32 %v2429, 0.0
    %v2462 = vmax.f32 %v2430, 0.0
    %v2463 = vmax.f32 %v2431, 0.0
    %v2464 = vmax.f32 %v2432, 0.0
    %v2465 = vmax.f32 %v2433, 0.0
    %v2466 = vmax.f32 %v2434, 0.0
    %v2467 = vmax.f32 %v2435, 0.0
    %v2468 = vmax.f32 %v2436, 0.0
    %v2469 = vmax.f32 %v2437, 0.0
    %v2470 = vmax.f32 %v2438, 0.0
    %v2471 = vmax.f32 %v2439, 0.0
    %v2472 = vmax.f32 %v2440, 0.0
    %v2473 = vmax.f32 %v2441, 0.0
    %v2474 = vmax.f32 %v2442, 0.0
    %v2475 = vmax.f32 %v2443, 0.0
    %v2476 = vld [vmem:[%s7] sm:$0xff]
    %v2477 = vld [vmem:[%s7 + $0x8] sm:$0xff]
    %v2478 = vld [vmem:[%s7 + $0x10] sm:$0xff]
    %v2479 = vld [vmem:[%s7 + $0x18] sm:$0xff]
    %v2480 = vld [vmem:[%s7 + $0x20] sm:$0xff]
    %v2481 = vld [vmem:[%s7 + $0x28] sm:$0xff]
    %v2482 = vld [vmem:[%s7 + $0x30] sm:$0xff]
    %v2483 = vld [vmem:[%s7 + $0x38] sm:$0xff]
    %v2484 = vld [vmem:[%s7 + $0x40] sm:$0xff]
    %v2485 = vld [vmem:[%s7 + $0x48] sm:$0xff]
    %v2486 = vld [vmem:[%s7 + $0x50] sm:$0xff]
    %v2487 = vld [vmem:[%s7 + $0x58] sm:$0xff]
    %v2488 = vld [vmem:[%s7 + $0x60] sm:$0xff]
    %v2489 = vld [vmem:[%s7 + $0x68] sm:$0xff]
    %v2490 = vld [vmem:[%s7 + $0x70] sm:$0xff]
    %v2491 = vld [vmem:[%s7 + $0x78] sm:$0xff]
    %v2492 = vld [vmem:[%s8] sm:$0x1]
    %v2494 = vperm.slane %v2492, 0
    %2496 = vmatpush.msra.mxu0 %v2491
    %2497 = vmatpush.msra.mxu0 %v2490
    %2498 = vmatpush.msra.mxu0 %v2489
    %2499 = vmatpush.msra.mxu0 %v2488
    %2500 = vmatpush.msra.mxu0 %v2487
    %2501 = vmatpush.msra.mxu0 %v2486
    %2502 = vmatpush.msra.mxu0 %v2485
    %2503 = vmatpush.msra.mxu0 %v2484
    %2504 = vmatpush.msra.mxu0 %v2483
    %2505 = vmatpush.msra.mxu0 %v2482
    %2506 = vmatpush.msra.mxu0 %v2481
    %2507 = vmatpush.msra.mxu0 %v2480
    %2508 = vmatpush.msra.mxu0 %v2479
    %2509 = vmatpush.msra.mxu0 %v2478
    %2510 = vmatpush.msra.mxu0 %v2477
    %2511 = vmatpush.msra.mxu0 %v2476
    %2512 = vmatmul.f32.gmra.mxu0 %v2444
    %v2513 = vpop.f32.mrf.mxu0
    %v2514 = vadd.f32 %v2494, %v2513
    %2515 = vmatmul.f32.gmra.mxu0 %v2445
    %v2516 = vpop.f32.mrf.mxu0
    %v2517 = vadd.f32 %v2494, %v2516
    %2518 = vmatmul.f32.gmra.mxu0 %v2446
    %v2519 = vpop.f32.mrf.mxu0
    %v2520 = vadd.f32 %v2494, %v2519
    %2521 = vmatmul.f32.gmra.mxu0 %v2447
    %v2522 = vpop.f32.mrf.mxu0
    %v2523 = vadd.f32 %v2494, %v2522
    %2524 = vmatmul.f32.gmra.mxu0 %v2448
    %v2525 = vpop.f32.mrf.mxu0
    %v2526 = vadd.f32 %v2494, %v2525
    %2527 = vmatmul.f32.gmra.mxu0 %v2449
    %v2528 = vpop.f32.mrf.mxu0
    %v2529 = vadd.f32 %v2494, %v2528
    %2530 = vmatmul.f32.gmra.mxu0 %v2450
    %v2531 = vpop.f32.mrf.mxu0
    %v2532 = vadd.f32 %v2494, %v2531
    %2533 = vmatmul.f32.gmra.mxu0 %v2451
    %v2534 = vpop.f32.mrf.mxu0
    %v2535 = vadd.f32 %v2494, %v2534
    %2536 = vmatmul.f32.gmra.mxu0 %v2452
    %v2537 = vpop.f32.mrf.mxu0
    %v2538 = vadd.f32 %v2494, %v2537
    %2539 = vmatmul.f32.gmra.mxu0 %v2453
    %v2540 = vpop.f32.mrf.mxu0
    %v2541 = vadd.f32 %v2494, %v2540
    %2542 = vmatmul.f32.gmra.mxu0 %v2454
    %v2543 = vpop.f32.mrf.mxu0
    %v2544 = vadd.f32 %v2494, %v2543
    %2545 = vmatmul.f32.gmra.mxu0 %v2455
    %v2546 = vpop.f32.mrf.mxu0
    %v2547 = vadd.f32 %v2494, %v2546
    %2548 = vmatmul.f32.gmra.mxu0 %v2456
    %v2549 = vpop.f32.mrf.mxu0
    %v2550 = vadd.f32 %v2494, %v2549
    %2551 = vmatmul.f32.gmra.mxu0 %v2457
    %v2552 = vpop.f32.mrf.mxu0
    %v2553 = vadd.f32 %v2494, %v2552
    %2554 = vmatmul.f32.gmra.mxu0 %v2458
    %v2555 = vpop.f32.mrf.mxu0
    %v2556 = vadd.f32 %v2494, %v2555
    %2557 = vmatmul.f32.gmra.mxu0 %v2459
    %v2558 = vpop.f32.mrf.mxu0
    %v2559 = vadd.f32 %v2494, %v2558
    %2560 = vmatmul.f32.gmra.mxu0 %v2460
    %v2561 = vpop.f32.mrf.mxu0
    %v2562 = vadd.f32 %v2494, %v2561
    %2563 = vmatmul.f32.gmra.mxu0 %v2461
    %v2564 = vpop.f32.mrf.mxu0
    %v2565 = vadd.f32 %v2494, %v2564
    %2566 = vmatmul.f32.gmra.mxu0 %v2462
    %v2567 = vpop.f32.mrf.mxu0
    %v2568 = vadd.f32 %v2494, %v2567
    %2569 = vmatmul.f32.gmra.mxu0 %v2463
    %v2570 = vpop.f32.mrf.mxu0
    %v2571 = vadd.f32 %v2494, %v2570
    %2572 = vmatmul.f32.gmra.mxu0 %v2464
    %v2573 = vpop.f32.mrf.mxu0
    %v2574 = vadd.f32 %v2494, %v2573
    %2575 = vmatmul.f32.gmra.mxu0 %v2465
    %v2576 = vpop.f32.mrf.mxu0
    %v2577 = vadd.f32 %v2494, %v2576
    %2578 = vmatmul.f32.gmra.mxu0 %v2466
    %v2579 = vpop.f32.mrf.mxu0
    %v2580 = vadd.f32 %v2494, %v2579
    %2581 = vmatmul.f32.gmra.mxu0 %v2467
    %v2582 = vpop.f32.mrf.mxu0
    %v2583 = vadd.f32 %v2494, %v2582
    %2584 = vmatmul.f32.gmra.mxu0 %v2468
    %v2585 = vpop.f32.mrf.mxu0
    %v2586 = vadd.f32 %v2494, %v2585
    %2587 = vmatmul.f32.gmra.mxu0 %v2469
    %v2588 = vpop.f32.mrf.mxu0
    %v2589 = vadd.f32 %v2494, %v2588
    %2590 = vmatmul.f32.gmra.mxu0 %v2470
    %v2591 = vpop.f32.mrf.mxu0
    %v2592 = vadd.f32 %v2494, %v2591
    %2593 = vmatmul.f32.gmra.mxu0 %v2471
    %v2594 = vpop.f32.mrf.mxu0
    %v2595 = vadd.f32 %v2494, %v2594
    %2596 = vmatmul.f32.gmra.mxu0 %v2472
    %v2597 = vpop.f32.mrf.mxu0
    %v2598 = vadd.f32 %v2494, %v2597
    %2599 = vmatmul.f32.gmra.mxu0 %v2473
    %v2600 = vpop.f32.mrf.mxu0
    %v2601 = vadd.f32 %v2494, %v2600
    %2602 = vmatmul.f32.gmra.mxu0 %v2474
    %v2603 = vpop.f32.mrf.mxu0
    %v2604 = vadd.f32 %v2494, %v2603
    %2605 = vmatmul.f32.gmra.mxu0 %v2475
    %v2606 = vpop.f32.mrf.mxu0
    %v2607 = vadd.f32 %v2494, %v2606
    %2608 = vdwg.mxu0
    %v2609 = vmax.f32 %v2514, 0.0
    %v2610 = vmax.f32 %v2517, 0.0
    %v2611 = vmax.f32 %v2520, 0.0
    %v2612 = vmax.f32 %v2523, 0.0
    %v2613 = vmax.f32 %v2526, 0.0
    %v2614 = vmax.f32 %v2529, 0.0
    %v2615 = vmax.f32 %v2532, 0.0
    %v2616 = vmax.f32 %v2535, 0.0
    %v2617 = vmax.f32 %v2538, 0.0
    %v2618 = vmax.f32 %v2541, 0.0
    %v2619 = vmax.f32 %v2544, 0.0
    %v2620 = vmax.f32 %v2547, 0.0
    %v2621 = vmax.f32 %v2550, 0.0
    %v2622 = vmax.f32 %v2553, 0.0
    %v2623 = vmax.f32 %v2556, 0.0
    %v2624 = vmax.f32 %v2559, 0.0
    %v2625 = vmax.f32 %v2562, 0.0
    %v2626 = vmax.f32 %v2565, 0.0
    %v2627 = vmax.f32 %v2568, 0.0
    %v2628 = vmax.f32 %v2571, 0.0
    %v2629 = vmax.f32 %v2574, 0.0
    %v2630 = vmax.f32 %v2577, 0.0
    %v2631 = vmax.f32 %v2580, 0.0
    %v2632 = vmax.f32 %v2583, 0.0
    %v2633 = vmax.f32 %v2586, 0.0
    %v2634 = vmax.f32 %v2589, 0.0
    %v2635 = vmax.f32 %v2592, 0.0
    %v2636 = vmax.f32 %v2595, 0.0
    %v2637 = vmax.f32 %v2598, 0.0
    %v2638 = vmax.f32 %v2601, 0.0
    %v2639 = vmax.f32 %v2604, 0.0
    %v2640 = vmax.f32 %v2607, 0.0
    %v2641 = vld [vmem:[%s9] sm:$0x1]
    %v2642 = vld [vmem:[#allocation2] sm:$0x1]
    %2644 = vset.pattern.permute.xlu0 0
    %2645 = vperm.xlu0 %2644, %v2642
    %v2646 = vpop.permute.xlu0 %2645
    %v2648 = vperm.slane %v2646, 0
    %vm2649 = vcmask 523264
    %v2651 = vsel %vm2649, %v2641, 0
    %v2654 = vsel %vm2649, %v2609, 0
    %v2657 = vsel %vm2649, %v2610, 0
    %v2660 = vsel %vm2649, %v2611, 0
    %v2663 = vsel %vm2649, %v2612, 0
    %v2666 = vsel %vm2649, %v2613, 0
    %v2669 = vsel %vm2649, %v2614, 0
    %v2672 = vsel %vm2649, %v2615, 0
    %v2675 = vsel %vm2649, %v2616, 0
    %v2678 = vsel %vm2649, %v2617, 0
    %v2681 = vsel %vm2649, %v2618, 0
    %v2684 = vsel %vm2649, %v2619, 0
    %v2687 = vsel %vm2649, %v2620, 0
    %v2690 = vsel %vm2649, %v2621, 0
    %v2693 = vsel %vm2649, %v2622, 0
    %v2696 = vsel %vm2649, %v2623, 0
    %v2699 = vsel %vm2649, %v2624, 0
    %v2702 = vsel %vm2649, %v2625, 0
    %v2705 = vsel %vm2649, %v2626, 0
    %v2708 = vsel %vm2649, %v2627, 0
    %v2711 = vsel %vm2649, %v2628, 0
    %v2714 = vsel %vm2649, %v2629, 0
    %v2717 = vsel %vm2649, %v2630, 0
    %v2720 = vsel %vm2649, %v2631, 0
    %v2723 = vsel %vm2649, %v2632, 0
    %v2726 = vsel %vm2649, %v2633, 0
    %v2729 = vsel %vm2649, %v2634, 0
    %v2732 = vsel %vm2649, %v2635, 0
    %v2735 = vsel %vm2649, %v2636, 0
    %v2738 = vsel %vm2649, %v2637, 0
    %v2741 = vsel %vm2649, %v2638, 0
    %v2744 = vsel %vm2649, %v2639, 0
    %v2747 = vsel %vm2649, %v2640, 0
    %2749 = vmatpush.xpose.msra.mxu0 %v2699
    %2750 = vmatpush.xpose.msra.mxu0 %v2696
    %2751 = vmatpush.xpose.msra.mxu0 %v2693
    %2752 = vmatpush.xpose.msra.mxu0 %v2690
    %2753 = vmatpush.xpose.msra.mxu0 %v2687
    %2754 = vmatpush.xpose.msra.mxu0 %v2684
    %2755 = vmatpush.xpose.msra.mxu0 %v2681
    %2756 = vmatpush.xpose.msra.mxu0 %v2678
    %2757 = vmatpush.xpose.msra.mxu0 %v2675
    %2758 = vmatpush.xpose.msra.mxu0 %v2672
    %2759 = vmatpush.xpose.msra.mxu0 %v2669
    %2760 = vmatpush.xpose.msra.mxu0 %v2666
    %2761 = vmatpush.xpose.msra.mxu0 %v2663
    %2762 = vmatpush.xpose.msra.mxu0 %v2660
    %2763 = vmatpush.xpose.msra.mxu0 %v2657
    %2764 = vmatpush.xpose.msra.mxu0 %v2654
    %2765 = vmatmul.f32.gmra.mxu0 %v2651
    %v2766 = vpop.f32.mrf.mxu0
    %v2767 = vadd.f32 %v2648, %v2766
    %2768 = vdwg.mxu0
    %2769 = vmatpush.xpose.msra.mxu0 %v2747
    %2770 = vmatpush.xpose.msra.mxu0 %v2744
    %2771 = vmatpush.xpose.msra.mxu0 %v2741
    %2772 = vmatpush.xpose.msra.mxu0 %v2738
    %2773 = vmatpush.xpose.msra.mxu0 %v2735
    %2774 = vmatpush.xpose.msra.mxu0 %v2732
    %2775 = vmatpush.xpose.msra.mxu0 %v2729
    %2776 = vmatpush.xpose.msra.mxu0 %v2726
    %2777 = vmatpush.xpose.msra.mxu0 %v2723
    %2778 = vmatpush.xpose.msra.mxu0 %v2720
    %2779 = vmatpush.xpose.msra.mxu0 %v2717
    %2780 = vmatpush.xpose.msra.mxu0 %v2714
    %2781 = vmatpush.xpose.msra.mxu0 %v2711
    %2782 = vmatpush.xpose.msra.mxu0 %v2708
    %2783 = vmatpush.xpose.msra.mxu0 %v2705
    %2784 = vmatpush.xpose.msra.mxu0 %v2702
    %2785 = vmatmul.f32.gmra.mxu0 %v2651
    %v2786 = vpop.f32.mrf.mxu0
    %v2787 = vadd.f32 %v2648, %v2786
    %2788 = vdwg.mxu0
    %v2789 = vand.u32 2147483647, %v2767
    %v2790 = vand.u32 2147483647, %v2787
    %v2793 = vrot.slane %v2790, 7
    %vm2794 = vcmask 1040384
    %v2795 = vsel %vm2794, %v2789, %v2793
    %v2797 = vlaneseq
    %vm2798 = vcmp.ge.s32.totalorder %v2797, 0
    %vm2799 = vcmp.lt.s32.totalorder %v2797, 256
    %vm2800 = vmand %vm2798, %vm2799
    %2801 = vst.msk [vmem:[#allocation6] sm:$0x3] %vm2800, %v2795
    // Predicated region
    $region50: #{tpu_custom_call.1} parent=1 // pred_check
      _
    $region51: #{tpu_custom_call.1} parent=1 // pred_check_branch
      %2803 = sbr.rel (0) target = $region53
    $region52: #{tpu_custom_call.1} parent=1 // pred_region
      %2805 = vsyncadd [#allocation5], 0
      %s2807 = sshll.u32 [#allocation6], 4
      %s2808 = int_to_ptr.vmem [resolvable:$true] %s2807
      %s2809 = sshll.u32 %s11, 4
      %s2810 = int_to_ptr.hbm [resolvable:$true] %s2809
      %2812 = dma.vmem_to_hbm [thread:$0]  %s2808, 32, %s2810, [#allocation5]
    $region53: #{tpu_custom_call.1} parent=1 // pred_fallthru
      _
    // Predicated region
    $region54: #{tpu_custom_call.1} parent=1 // pred_check
      _
    $region55: #{tpu_custom_call.1} parent=1 // pred_check_branch
      %2814 = sbr.rel (0) target = $region57
    $region56: #{tpu_custom_call.1} parent=1 // pred_region
      %2816 = dma.done [#allocation5], 32
    $region57: #{tpu_custom_call.1} parent=1 // pred_fallthru
      _
    %2817 = vsyncpa [#allocation4], 1
    %2818 = vsyncpa [#allocation5], 1

// kernel: tpu_custom_call.1
$region0: #{tpu_custom_call.1}
  #allocation0 [shape = 'u32[]', space=smem, size = 0x4, offset = 0x4, fixed_abs, tag = 'smem constant byte address 0x4 - core index']
  #allocation1 [shape = 'u32[72,128]{1,0:T(1,128)}', space=vmem, size = 0x9000, scoped, tag = 'internal scratch']
  #allocation2 [shape = 'f32[1,1]{1,0:T(1,128)S(1)}', space=vmem, size = 0x200, scoped, tag = 'scoped memory for tpu_custom_call.1']
  %s0 = inlined_call_operand.vmem [shape: f32[256,18], index: 0, kind: input, shape index: {}]
  %s1 = inlined_call_operand.vmem [shape: f32[18,640], index: 1, kind: input, shape index: {}]
  %s2 = inlined_call_operand.vmem [shape: f32[1,512], index: 2, kind: input, shape index: {}]
  %s3 = inlined_call_operand.hbm [shape: f32[512,256], index: 3, kind: input, shape index: {}]
  %s4 = inlined_call_operand.vmem [shape: f32[1,256], index: 4, kind: input, shape index: {}]
  %s5 = inlined_call_operand.vmem [shape: f32[256,128], index: 5, kind: input, shape index: {}]
  %s6 = inlined_call_operand.vmem [shape: f32[1,128], index: 6, kind: input, shape index: {}]
  %s7 = inlined_call_operand.vmem [shape: f32[128,64], index: 7, kind: input, shape index: {}]
  %s8 = inlined_call_operand.vmem [shape: f32[1,64], index: 8, kind: input, shape index: {}]
  %s9 = inlined_call_operand.vmem [shape: f32[1,64], index: 9, kind: input, shape index: {}]
  %s10 = inlined_call_operand.<no memory space> [shape: f32[1,1], index: 10, kind: input, shape index: {}]
  %s11 = inlined_call_operand.hbm [shape: f32[1,1,256], index: 11, kind: output, shape index: {}]
  %s12 = sld [smem:[#allocation0]]
  $region58: #{tpu_custom_call.1} parent=0
    _
  %s14 = ssub.s32 1, %s12
  %s15 = scalar_select 0, %s14, %s12
  %v16 = vstv %s10
  %17 = vst [vmem:[#allocation2] sm:$0x1] %v16
  $region1: #{tpu_custom_call.1} parent=0
    #allocation3 [shape = 'u8[524288]{0}', space=vmem, size = 0x80000, scoped, tag = 'input window, operand 3, single buffered']
    #allocation4 [shape = 's32[1]{0}', space=sflag, size = 0x4, scoped, tag = 'scoped memory for tpu_custom_call.1']
    #allocation5 [shape = 's32[1]{0}', space=sflag, size = 0x4, scoped, tag = 'scoped memory for tpu_custom_call.1']
    #allocation6 [shape = 'u8[1024]{0}', space=vmem, size = 0x400, scoped, tag = 'output window, operand 0, single buffered']
    %18 = vsyncpa [#allocation4], 0
    %19 = vsyncpa [#allocation5], 0
    // Predicated region
    $region2: #{tpu_custom_call.1} parent=1 // pred_check
      _
    $region3: #{tpu_custom_call.1} parent=1 // pred_check_branch
      %21 = sbr.rel (0) target = $region5
    $region4: #{tpu_custom_call.1} parent=1 // pred_region
      _
    $region5: #{tpu_custom_call.1} parent=1 // pred_fallthru
      _
    // Predicated region
    $region6: #{tpu_custom_call.1} parent=1 // pred_check
      _
    $region7: #{tpu_custom_call.1} parent=1 // pred_check_branch
      %23 = sbr.rel (0) target = $region9
    $region8: #{tpu_custom_call.1} parent=1 // pred_region
      _
    $region9: #{tpu_custom_call.1} parent=1 // pred_fallthru
      _
    // Predicated region
    $region10: #{tpu_custom_call.1} parent=1 // pred_check
      _
    $region11: #{tpu_custom_call.1} parent=1 // pred_check_branch
      %25 = sbr.rel (0) target = $region13
    $region12: #{tpu_custom_call.1} parent=1 // pred_region
      _
    $region13: #{tpu_custom_call.1} parent=1 // pred_fallthru
      _
    // Predicated region
    $region14: #{tpu_custom_call.1} parent=1 // pred_check
      _
    $region15: #{tpu_custom_call.1} parent=1 // pred_check_branch
      %27 = sbr.rel (0) target = $region17
    $region16: #{tpu_custom_call.1} parent=1 // pred_region
      %29 = vsyncadd [#allocation4], 0
      %s30 = sshll.u32 %s3, 4
      %s31 = int_to_ptr.hbm [resolvable:$true] %s30
      %s32 = sshll.u32 [#allocation3], 4
      %s33 = int_to_ptr.vmem [resolvable:$true] %s32
      %38 = dma.hbm_to_vmem [thread:$0]  %s31, 16384, %s33, [#allocation4], 256, 256, 16
    $region17: #{tpu_custom_call.1} parent=1 // pred_fallthru
      _
    // Predicated region
    $region18: #{tpu_custom_call.1} parent=1 // pred_check
      _
    $region19: #{tpu_custom_call.1} parent=1 // pred_check_branch
      %40 = sbr.rel (0) target = $region21
    $region20: #{tpu_custom_call.1} parent=1 // pred_region
      _
    $region21: #{tpu_custom_call.1} parent=1 // pred_fallthru
      _
    // Predicated region
    $region22: #{tpu_custom_call.1} parent=1 // pred_check
      _
    $region23: #{tpu_custom_call.1} parent=1 // pred_check_branch
      %42 = sbr.rel (0) target = $region25
    $region24: #{tpu_custom_call.1} parent=1 // pred_region
      _
    $region25: #{tpu_custom_call.1} parent=1 // pred_fallthru
      _
    // Predicated region
    $region26: #{tpu_custom_call.1} parent=1 // pred_check
      _
    $region27: #{tpu_custom_call.1} parent=1 // pred_check_branch
      %44 = sbr.rel (0) target = $region29
    $region28: #{tpu_custom_call.1} parent=1 // pred_region
      _
    $region29: #{tpu_custom_call.1} parent=1 // pred_fallthru
      _
    // Predicated region
    $region30: #{tpu_custom_call.1} parent=1 // pred_check
      _
    $region31: #{tpu_custom_call.1} parent=1 // pred_check_branch
      %46 = sbr.rel (0) target = $region33
    $region32: #{tpu_custom_call.1} parent=1 // pred_region
      _
    $region33: #{tpu_custom_call.1} parent=1 // pred_fallthru
      _
    // Predicated region
    $region34: #{tpu_custom_call.1} parent=1 // pred_check
      _
    $region35: #{tpu_custom_call.1} parent=1 // pred_check_branch
      %48 = sbr.rel (0) target = $region37
    $region36: #{tpu_custom_call.1} parent=1 // pred_region
      _
    $region37: #{tpu_custom_call.1} parent=1 // pred_fallthru
      _
    // Predicated region
    $region38: #{tpu_custom_call.1} parent=1 // pred_check
      _
    $region39: #{tpu_custom_call.1} parent=1 // pred_check_branch
      %50 = sbr.rel (0) target = $region41
    $region40: #{tpu_custom_call.1} parent=1 // pred_region
      _
    $region41: #{tpu_custom_call.1} parent=1 // pred_fallthru
      _
    // Predicated region
    $region42: #{tpu_custom_call.1} parent=1 // pred_check
      _
    $region43: #{tpu_custom_call.1} parent=1 // pred_check_branch
      %52 = sbr.rel (0) target = $region45
    $region44: #{tpu_custom_call.1} parent=1 // pred_region
      _
    $region45: #{tpu_custom_call.1} parent=1 // pred_fallthru
      _
    // Predicated region
    $region46: #{tpu_custom_call.1} parent=1 // pred_check
      _
    $region47: #{tpu_custom_call.1} parent=1 // pred_check_branch
      %54 = sbr.rel (0) target = $region49
    $region48: #{tpu_custom_call.1} parent=1 // pred_region
      %56 = dma.done [#allocation4], 16384
    $region49: #{tpu_custom_call.1} parent=1 // pred_fallthru
      _
    %v57 = vld [vmem:[%s0] sm:$0xff]
    %v58 = vld [vmem:[%s0 + $0x8] sm:$0xff]
    %v59 = vld [vmem:[%s0 + $0x10] sm:$0xff]
    %v60 = vld [vmem:[%s0 + $0x18] sm:$0xff]
    %v61 = vld [vmem:[%s0 + $0x20] sm:$0xff]
    %v62 = vld [vmem:[%s0 + $0x28] sm:$0xff]
    %v63 = vld [vmem:[%s0 + $0x30] sm:$0xff]
    %v64 = vld [vmem:[%s0 + $0x38] sm:$0xff]
    %v65 = vld [vmem:[%s0 + $0x40] sm:$0xff]
    %v66 = vld [vmem:[%s0 + $0x48] sm:$0xff]
    %v67 = vld [vmem:[%s0 + $0x50] sm:$0xff]
    %v68 = vld [vmem:[%s0 + $0x58] sm:$0xff]
    %v69 = vld [vmem:[%s0 + $0x60] sm:$0xff]
    %v70 = vld [vmem:[%s0 + $0x68] sm:$0xff]
    %v71 = vld [vmem:[%s0 + $0x70] sm:$0xff]
    %v72 = vld [vmem:[%s0 + $0x78] sm:$0xff]
    %v73 = vld [vmem:[%s0 + $0x80] sm:$0xff]
    %v74 = vld [vmem:[%s0 + $0x88] sm:$0xff]
    %v75 = vld [vmem:[%s0 + $0x90] sm:$0xff]
    %v76 = vld [vmem:[%s0 + $0x98] sm:$0xff]
    %v77 = vld [vmem:[%s0 + $0xa0] sm:$0xff]
    %v78 = vld [vmem:[%s0 + $0xa8] sm:$0xff]
    %v79 = vld [vmem:[%s0 + $0xb0] sm:$0xff]
    %v80 = vld [vmem:[%s0 + $0xb8] sm:$0xff]
    %v81 = vld [vmem:[%s0 + $0xc0] sm:$0xff]
    %v82 = vld [vmem:[%s0 + $0xc8] sm:$0xff]
    %v83 = vld [vmem:[%s0 + $0xd0] sm:$0xff]
    %v84 = vld [vmem:[%s0 + $0xd8] sm:$0xff]
    %v85 = vld [vmem:[%s0 + $0xe0] sm:$0xff]
    %v86 = vld [vmem:[%s0 + $0xe8] sm:$0xff]
    %v87 = vld [vmem:[%s0 + $0xf0] sm:$0xff]
    %v88 = vld [vmem:[%s0 + $0xf8] sm:$0xff]
    %v89 = vld [vmem:[%s1] sm:$0xff]
    %v90 = vld [vmem:[%s1 + $0x8] sm:$0xff]
    %v91 = vld [vmem:[%s1 + $0x10] sm:$0xff]
    %v92 = vld [vmem:[%s1 + $0x18] sm:$0xff]
    %v93 = vld [vmem:[%s1 + $0x20] sm:$0xff]
    %v94 = vld [vmem:[%s1 + $0x28] sm:$0xff]
    %v95 = vld [vmem:[%s1 + $0x30] sm:$0xff]
    %v96 = vld [vmem:[%s1 + $0x38] sm:$0xff]
    %v97 = vld [vmem:[%s1 + $0x40] sm:$0xff]
    %v98 = vld [vmem:[%s1 + $0x48] sm:$0xff]
    %v99 = vld [vmem:[%s1 + $0x50] sm:$0x3]
    %v100 = vld [vmem:[%s1 + $0x58] sm:$0x3]
    %v101 = vld [vmem:[%s1 + $0x60] sm:$0x3]
    %v102 = vld [vmem:[%s1 + $0x68] sm:$0x3]
    %v103 = vld [vmem:[%s1 + $0x70] sm:$0x3]
    %vm104 = vcmask 146432
    %v106 = vsel %vm104, %v57, 0
    %v109 = vsel %vm104, %v58, 0
    %v112 = vsel %vm104, %v59, 0
    %v115 = vsel %vm104, %v60, 0
    %v118 = vsel %vm104, %v61, 0
    %v121 = vsel %vm104, %v62, 0
    %v124 = vsel %vm104, %v63, 0
    %v127 = vsel %vm104, %v64, 0
    %v130 = vsel %vm104, %v65, 0
    %v133 = vsel %vm104, %v66, 0
    %v136 = vsel %vm104, %v67, 0
    %v139 = vsel %vm104, %v68, 0
    %v142 = vsel %vm104, %v69, 0
    %v145 = vsel %vm104, %v70, 0
    %v148 = vsel %vm104, %v71, 0
    %v151 = vsel %vm104, %v72, 0
    %v154 = vsel %vm104, %v73, 0
    %v157 = vsel %vm104, %v74, 0
    %v160 = vsel %vm104, %v75, 0
    %v163 = vsel %vm104, %v76, 0
    %v166 = vsel %vm104, %v77, 0
    %v169 = vsel %vm104, %v78, 0
    %v172 = vsel %vm104, %v79, 0
    %v175 = vsel %vm104, %v80, 0
    %v178 = vsel %vm104, %v81, 0
    %v181 = vsel %vm104, %v82, 0
    %v184 = vsel %vm104, %v83, 0
    %v187 = vsel %vm104, %v84, 0
    %v190 = vsel %vm104, %v85, 0
    %v193 = vsel %vm104, %v86, 0
    %v196 = vsel %vm104, %v87, 0
    %v199 = vsel %vm104, %v88, 0
    %vm201 = vcmask 1041408
    %v203 = vsel %vm201, %v99, 0
    %v206 = vsel %vm201, %v100, 0
    %v209 = vsel %vm201, %v101, 0
    %v212 = vsel %vm201, %v102, 0
    %v215 = vsel %vm201, %v103, 0
    %217 = vmatpush.msra.mxu0 0.0
    %218 = vmatpush.msra.mxu0 0.0
    %219 = vmatpush.msra.mxu0 0.0
    %220 = vmatpush.msra.mxu0 0.0
    %221 = vmatpush.msra.mxu0 0.0
    %222 = vmatpush.msra.mxu0 0.0
    %223 = vmatpush.msra.mxu0 0.0
    %224 = vmatpush.msra.mxu0 0.0
    %225 = vmatpush.msra.mxu0 0.0
    %226 = vmatpush.msra.mxu0 0.0
    %227 = vmatpush.msra.mxu0 0.0
    %228 = vmatpush.msra.mxu0 0.0
    %229 = vmatpush.msra.mxu0 0.0
    %230 = vmatpush.msra.mxu0 %v203
    %231 = vmatpush.msra.mxu0 %v94
    %232 = vmatpush.msra.mxu0 %v89
    %233 = vmatmul.f32.gmra.mxu0 %v106
    %v234 = vpop.f32.mrf.mxu0
    %v235 = vadd.f32 0.0, %v234
    %236 = vmatmul.f32.gmra.mxu0 %v109
    %v237 = vpop.f32.mrf.mxu0
    %v238 = vadd.f32 0.0, %v237
    %239 = vmatmul.f32.gmra.mxu0 %v112
    %v240 = vpop.f32.mrf.mxu0
    %v241 = vadd.f32 0.0, %v240
    %242 = vmatmul.f32.gmra.mxu0 %v115
    %v243 = vpop.f32.mrf.mxu0
    %v244 = vadd.f32 0.0, %v243
    %245 = vmatmul.f32.gmra.mxu0 %v118
    %v246 = vpop.f32.mrf.mxu0
    %v247 = vadd.f32 0.0, %v246
    %248 = vmatmul.f32.gmra.mxu0 %v121
    %v249 = vpop.f32.mrf.mxu0
    %v250 = vadd.f32 0.0, %v249
    %251 = vmatmul.f32.gmra.mxu0 %v124
    %v252 = vpop.f32.mrf.mxu0
    %v253 = vadd.f32 0.0, %v252
    %254 = vmatmul.f32.gmra.mxu0 %v127
    %v255 = vpop.f32.mrf.mxu0
    %v256 = vadd.f32 0.0, %v255
    %257 = vmatmul.f32.gmra.mxu0 %v130
    %v258 = vpop.f32.mrf.mxu0
    %v259 = vadd.f32 0.0, %v258
    %260 = vmatmul.f32.gmra.mxu0 %v133
    %v261 = vpop.f32.mrf.mxu0
    %v262 = vadd.f32 0.0, %v261
    %263 = vmatmul.f32.gmra.mxu0 %v136
    %v264 = vpop.f32.mrf.mxu0
    %v265 = vadd.f32 0.0, %v264
    %266 = vmatmul.f32.gmra.mxu0 %v139
    %v267 = vpop.f32.mrf.mxu0
    %v268 = vadd.f32 0.0, %v267
    %269 = vmatmul.f32.gmra.mxu0 %v142
    %v270 = vpop.f32.mrf.mxu0
    %v271 = vadd.f32 0.0, %v270
    %272 = vmatmul.f32.gmra.mxu0 %v145
    %v273 = vpop.f32.mrf.mxu0
    %v274 = vadd.f32 0.0, %v273
    %275 = vmatmul.f32.gmra.mxu0 %v148
    %v276 = vpop.f32.mrf.mxu0
    %v277 = vadd.f32 0.0, %v276
    %278 = vmatmul.f32.gmra.mxu0 %v151
    %v279 = vpop.f32.mrf.mxu0
    %v280 = vadd.f32 0.0, %v279
    %281 = vmatmul.f32.gmra.mxu0 %v154
    %v282 = vpop.f32.mrf.mxu0
    %v283 = vadd.f32 0.0, %v282
    %284 = vmatmul.f32.gmra.mxu0 %v157
    %v285 = vpop.f32.mrf.mxu0
    %v286 = vadd.f32 0.0, %v285
    %287 = vmatmul.f32.gmra.mxu0 %v160
    %v288 = vpop.f32.mrf.mxu0
    %v289 = vadd.f32 0.0, %v288
    %290 = vmatmul.f32.gmra.mxu0 %v163
    %v291 = vpop.f32.mrf.mxu0
    %v292 = vadd.f32 0.0, %v291
    %293 = vmatmul.f32.gmra.mxu0 %v166
    %v294 = vpop.f32.mrf.mxu0
    %v295 = vadd.f32 0.0, %v294
    %296 = vmatmul.f32.gmra.mxu0 %v169
    %v297 = vpop.f32.mrf.mxu0
    %v298 = vadd.f32 0.0, %v297
    %299 = vmatmul.f32.gmra.mxu0 %v172
    %v300 = vpop.f32.mrf.mxu0
    %v301 = vadd.f32 0.0, %v300
    %302 = vmatmul.f32.gmra.mxu0 %v175
    %v303 = vpop.f32.mrf.mxu0
    %v304 = vadd.f32 0.0, %v303
    %305 = vmatmul.f32.gmra.mxu0 %v178
    %v306 = vpop.f32.mrf.mxu0
    %v307 = vadd.f32 0.0, %v306
    %308 = vmatmul.f32.gmra.mxu0 %v181
    %v309 = vpop.f32.mrf.mxu0
    %v310 = vadd.f32 0.0, %v309
    %311 = vmatmul.f32.gmra.mxu0 %v184
    %v312 = vpop.f32.mrf.mxu0
    %v313 = vadd.f32 0.0, %v312
    %314 = vmatmul.f32.gmra.mxu0 %v187
    %v315 = vpop.f32.mrf.mxu0
    %v316 = vadd.f32 0.0, %v315
    %317 = vmatmul.f32.gmra.mxu0 %v190
    %v318 = vpop.f32.mrf.mxu0
    %v319 = vadd.f32 0.0, %v318
    %320 = vmatmul.f32.gmra.mxu0 %v193
    %v321 = vpop.f32.mrf.mxu0
    %v322 = vadd.f32 0.0, %v321
    %323 = vmatmul.f32.gmra.mxu0 %v196
    %v324 = vpop.f32.mrf.mxu0
    %v325 = vadd.f32 0.0, %v324
    %326 = vmatmul.f32.gmra.mxu0 %v199
    %v327 = vpop.f32.mrf.mxu0
    %v328 = vadd.f32 0.0, %v327
    %329 = vdwg.mxu0
    %330 = vmatpush.msra.mxu0 0.0
    %331 = vmatpush.msra.mxu0 0.0
    %332 = vmatpush.msra.mxu0 0.0
    %333 = vmatpush.msra.mxu0 0.0
    %334 = vmatpush.msra.mxu0 0.0
    %335 = vmatpush.msra.mxu0 0.0
    %336 = vmatpush.msra.mxu0 0.0
    %337 = vmatpush.msra.mxu0 0.0
    %338 = vmatpush.msra.mxu0 0.0
    %339 = vmatpush.msra.mxu0 0.0
    %340 = vmatpush.msra.mxu0 0.0
    %341 = vmatpush.msra.mxu0 0.0
    %342 = vmatpush.msra.mxu0 0.0
    %343 = vmatpush.msra.mxu0 %v206
    %344 = vmatpush.msra.mxu0 %v95
    %345 = vmatpush.msra.mxu0 %v90
    %346 = vmatmul.f32.gmra.mxu0 %v106
    %v347 = vpop.f32.mrf.mxu0
    %v348 = vadd.f32 0.0, %v347
    %349 = vmatmul.f32.gmra.mxu0 %v109
    %v350 = vpop.f32.mrf.mxu0
    %v351 = vadd.f32 0.0, %v350
    %352 = vmatmul.f32.gmra.mxu0 %v112
    %v353 = vpop.f32.mrf.mxu0
    %v354 = vadd.f32 0.0, %v353
    %355 = vmatmul.f32.gmra.mxu0 %v115
    %v356 = vpop.f32.mrf.mxu0
    %v357 = vadd.f32 0.0, %v356
    %358 = vmatmul.f32.gmra.mxu0 %v118
    %v359 = vpop.f32.mrf.mxu0
    %v360 = vadd.f32 0.0, %v359
    %361 = vmatmul.f32.gmra.mxu0 %v121
    %v362 = vpop.f32.mrf.mxu0
    %v363 = vadd.f32 0.0, %v362
    %364 = vmatmul.f32.gmra.mxu0 %v124
    %v365 = vpop.f32.mrf.mxu0
    %v366 = vadd.f32 0.0, %v365
    %367 = vmatmul.f32.gmra.mxu0 %v127
    %v368 = vpop.f32.mrf.mxu0
    %v369 = vadd.f32 0.0, %v368
    %370 = vmatmul.f32.gmra.mxu0 %v130
    %v371 = vpop.f32.mrf.mxu0
    %v372 = vadd.f32 0.0, %v371
    %373 = vmatmul.f32.gmra.mxu0 %v133
    %v374 = vpop.f32.mrf.mxu0
    %v375 = vadd.f32 0.0, %v374
    %376 = vmatmul.f32.gmra.mxu0 %v136
    %v377 = vpop.f32.mrf.mxu0
    %v378 = vadd.f32 0.0, %v377
    %379 = vmatmul.f32.gmra.mxu0 %v139
    %v380 = vpop.f32.mrf.mxu0
    %v381 = vadd.f32 0.0, %v380
    %382 = vmatmul.f32.gmra.mxu0 %v142
    %v383 = vpop.f32.mrf.mxu0
    %v384 = vadd.f32 0.0, %v383
    %385 = vmatmul.f32.gmra.mxu0 %v145
    %v386 = vpop.f32.mrf.mxu0
    %v387 = vadd.f32 0.0, %v386
    %388 = vmatmul.f32.gmra.mxu0 %v148
    %v389 = vpop.f32.mrf.mxu0
    %v390 = vadd.f32 0.0, %v389
    %391 = vmatmul.f32.gmra.mxu0 %v151
    %v392 = vpop.f32.mrf.mxu0
    %v393 = vadd.f32 0.0, %v392
    %394 = vmatmul.f32.gmra.mxu0 %v154
    %v395 = vpop.f32.mrf.mxu0
    %v396 = vadd.f32 0.0, %v395
    %397 = vmatmul.f32.gmra.mxu0 %v157
    %v398 = vpop.f32.mrf.mxu0
    %v399 = vadd.f32 0.0, %v398
    %400 = vmatmul.f32.gmra.mxu0 %v160
    %v401 = vpop.f32.mrf.mxu0
    %v402 = vadd.f32 0.0, %v401
    %403 = vmatmul.f32.gmra.mxu0 %v163
    %v404 = vpop.f32.mrf.mxu0
    %v405 = vadd.f32 0.0, %v404
    %406 = vmatmul.f32.gmra.mxu0 %v166
    %v407 = vpop.f32.mrf.mxu0
    %v408 = vadd.f32 0.0, %v407
    %409 = vmatmul.f32.gmra.mxu0 %v169
    %v410 = vpop.f32.mrf.mxu0
    %v411 = vadd.f32 0.0, %v410
    %412 = vmatmul.f32.gmra.mxu0 %v172
    %v413 = vpop.f32.mrf.mxu0
    %v414 = vadd.f32 0.0, %v413
    %415 = vmatmul.f32.gmra.mxu0 %v175
    %v416 = vpop.f32.mrf.mxu0
    %v417 = vadd.f32 0.0, %v416
    %418 = vmatmul.f32.gmra.mxu0 %v178
    %v419 = vpop.f32.mrf.mxu0
    %v420 = vadd.f32 0.0, %v419
    %421 = vmatmul.f32.gmra.mxu0 %v181
    %v422 = vpop.f32.mrf.mxu0
    %v423 = vadd.f32 0.0, %v422
    %424 = vmatmul.f32.gmra.mxu0 %v184
    %v425 = vpop.f32.mrf.mxu0
    %v426 = vadd.f32 0.0, %v425
    %427 = vmatmul.f32.gmra.mxu0 %v187
    %v428 = vpop.f32.mrf.mxu0
    %v429 = vadd.f32 0.0, %v428
    %430 = vmatmul.f32.gmra.mxu0 %v190
    %v431 = vpop.f32.mrf.mxu0
    %v432 = vadd.f32 0.0, %v431
    %433 = vmatmul.f32.gmra.mxu0 %v193
    %v434 = vpop.f32.mrf.mxu0
    %v435 = vadd.f32 0.0, %v434
    %436 = vmatmul.f32.gmra.mxu0 %v196
    %v437 = vpop.f32.mrf.mxu0
    %v438 = vadd.f32 0.0, %v437
    %439 = vmatmul.f32.gmra.mxu0 %v199
    %v440 = vpop.f32.mrf.mxu0
    %v441 = vadd.f32 0.0, %v440
    %442 = vdwg.mxu0
    %443 = vmatpush.msra.mxu0 0.0
    %444 = vmatpush.msra.mxu0 0.0
    %445 = vmatpush.msra.mxu0 0.0
    %446 = vmatpush.msra.mxu0 0.0
    %447 = vmatpush.msra.mxu0 0.0
    %448 = vmatpush.msra.mxu0 0.0
    %449 = vmatpush.msra.mxu0 0.0
    %450 = vmatpush.msra.mxu0 0.0
    %451 = vmatpush.msra.mxu0 0.0
    %452 = vmatpush.msra.mxu0 0.0
    %453 = vmatpush.msra.mxu0 0.0
    %454 = vmatpush.msra.mxu0 0.0
    %455 = vmatpush.msra.mxu0 0.0
    %456 = vmatpush.msra.mxu0 %v209
    %457 = vmatpush.msra.mxu0 %v96
    %458 = vmatpush.msra.mxu0 %v91
    %459 = vmatmul.f32.gmra.mxu0 %v106
    %v460 = vpop.f32.mrf.mxu0
    %v461 = vadd.f32 0.0, %v460
    %462 = vmatmul.f32.gmra.mxu0 %v109
    %v463 = vpop.f32.mrf.mxu0
    %v464 = vadd.f32 0.0, %v463
    %465 = vmatmul.f32.gmra.mxu0 %v112
    %v466 = vpop.f32.mrf.mxu0
    %v467 = vadd.f32 0.0, %v466
    %468 = vmatmul.f32.gmra.mxu0 %v115
    %v469 = vpop.f32.mrf.mxu0
    %v470 = vadd.f32 0.0, %v469
    %471 = vmatmul.f32.gmra.mxu0 %v118
    %v472 = vpop.f32.mrf.mxu0
    %v473 = vadd.f32 0.0, %v472
    %474 = vmatmul.f32.gmra.mxu0 %v121
    %v475 = vpop.f32.mrf.mxu0
    %v476 = vadd.f32 0.0, %v475
    %477 = vmatmul.f32.gmra.mxu0 %v124
    %v478 = vpop.f32.mrf.mxu0
    %v479 = vadd.f32 0.0, %v478
    %480 = vmatmul.f32.gmra.mxu0 %v127
    %v481 = vpop.f32.mrf.mxu0
    %v482 = vadd.f32 0.0, %v481
    %483 = vmatmul.f32.gmra.mxu0 %v130
    %v484 = vpop.f32.mrf.mxu0
    %v485 = vadd.f32 0.0, %v484
    %486 = vmatmul.f32.gmra.mxu0 %v133
    %v487 = vpop.f32.mrf.mxu0
    %v488 = vadd.f32 0.0, %v487
    %489 = vmatmul.f32.gmra.mxu0 %v136
    %v490 = vpop.f32.mrf.mxu0
    %v491 = vadd.f32 0.0, %v490
    %492 = vmatmul.f32.gmra.mxu0 %v139
    %v493 = vpop.f32.mrf.mxu0
    %v494 = vadd.f32 0.0, %v493
    %495 = vmatmul.f32.gmra.mxu0 %v142
    %v496 = vpop.f32.mrf.mxu0
    %v497 = vadd.f32 0.0, %v496
    %498 = vmatmul.f32.gmra.mxu0 %v145
    %v499 = vpop.f32.mrf.mxu0
    %v500 = vadd.f32 0.0, %v499
    %501 = vmatmul.f32.gmra.mxu0 %v148
    %v502 = vpop.f32.mrf.mxu0
    %v503 = vadd.f32 0.0, %v502
    %504 = vmatmul.f32.gmra.mxu0 %v151
    %v505 = vpop.f32.mrf.mxu0
    %v506 = vadd.f32 0.0, %v505
    %507 = vmatmul.f32.gmra.mxu0 %v154
    %v508 = vpop.f32.mrf.mxu0
    %v509 = vadd.f32 0.0, %v508
    %510 = vmatmul.f32.gmra.mxu0 %v157
    %v511 = vpop.f32.mrf.mxu0
    %v512 = vadd.f32 0.0, %v511
    %513 = vmatmul.f32.gmra.mxu0 %v160
    %v514 = vpop.f32.mrf.mxu0
    %v515 = vadd.f32 0.0, %v514
    %516 = vmatmul.f32.gmra.mxu0 %v163
    %v517 = vpop.f32.mrf.mxu0
    %v518 = vadd.f32 0.0, %v517
    %519 = vmatmul.f32.gmra.mxu0 %v166
    %v520 = vpop.f32.mrf.mxu0
    %v521 = vadd.f32 0.0, %v520
    %522 = vmatmul.f32.gmra.mxu0 %v169
    %v523 = vpop.f32.mrf.mxu0
    %v524 = vadd.f32 0.0, %v523
    %525 = vmatmul.f32.gmra.mxu0 %v172
    %v526 = vpop.f32.mrf.mxu0
    %v527 = vadd.f32 0.0, %v526
    %528 = vmatmul.f32.gmra.mxu0 %v175
    %v529 = vpop.f32.mrf.mxu0
    %v530 = vadd.f32 0.0, %v529
    %531 = vmatmul.f32.gmra.mxu0 %v178
    %v532 = vpop.f32.mrf.mxu0
    %v533 = vadd.f32 0.0, %v532
    %534 = vmatmul.f32.gmra.mxu0 %v181
    %v535 = vpop.f32.mrf.mxu0
    %v536 = vadd.f32 0.0, %v535
    %537 = vmatmul.f32.gmra.mxu0 %v184
    %v538 = vpop.f32.mrf.mxu0
    %v539 = vadd.f32 0.0, %v538
    %540 = vmatmul.f32.gmra.mxu0 %v187
    %v541 = vpop.f32.mrf.mxu0
    %v542 = vadd.f32 0.0, %v541
    %543 = vmatmul.f32.gmra.mxu0 %v190
    %v544 = vpop.f32.mrf.mxu0
    %v545 = vadd.f32 0.0, %v544
    %546 = vmatmul.f32.gmra.mxu0 %v193
    %v547 = vpop.f32.mrf.mxu0
    %v548 = vadd.f32 0.0, %v547
    %549 = vmatmul.f32.gmra.mxu0 %v196
    %v550 = vpop.f32.mrf.mxu0
    %v551 = vadd.f32 0.0, %v550
    %552 = vmatmul.f32.gmra.mxu0 %v199
    %v553 = vpop.f32.mrf.mxu0
    %v554 = vadd.f32 0.0, %v553
    %555 = vdwg.mxu0
    %556 = vmatpush.msra.mxu0 0.0
    %557 = vmatpush.msra.mxu0 0.0
    %558 = vmatpush.msra.mxu0 0.0
    %559 = vmatpush.msra.mxu0 0.0
    %560 = vmatpush.msra.mxu0 0.0
    %561 = vmatpush.msra.mxu0 0.0
    %562 = vmatpush.msra.mxu0 0.0
    %563 = vmatpush.msra.mxu0 0.0
    %564 = vmatpush.msra.mxu0 0.0
    %565 = vmatpush.msra.mxu0 0.0
    %566 = vmatpush.msra.mxu0 0.0
    %567 = vmatpush.msra.mxu0 0.0
    %568 = vmatpush.msra.mxu0 0.0
    %569 = vmatpush.msra.mxu0 %v212
    %570 = vmatpush.msra.mxu0 %v97
    %571 = vmatpush.msra.mxu0 %v92
    %572 = vmatmul.f32.gmra.mxu0 %v106
    %v573 = vpop.f32.mrf.mxu0
    %v574 = vadd.f32 0.0, %v573
    %575 = vmatmul.f32.gmra.mxu0 %v109
    %v576 = vpop.f32.mrf.mxu0
    %v577 = vadd.f32 0.0, %v576
    %578 = vmatmul.f32.gmra.mxu0 %v112
    %v579 = vpop.f32.mrf.mxu0
    %v580 = vadd.f32 0.0, %v579
    %581 = vmatmul.f32.gmra.mxu0 %v115
    %v582 = vpop.f32.mrf.mxu0
    %v583 = vadd.f32 0.0, %v582
    %584 = vmatmul.f32.gmra.mxu0 %v118
    %v585 = vpop.f32.mrf.mxu0
    %v586 = vadd.f32 0.0, %v585
    %587 = vmatmul.f32.gmra.mxu0 %v121
    %v588 = vpop.f32.mrf.mxu0
    %v589 = vadd.f32 0.0, %v588
    %590 = vmatmul.f32.gmra.mxu0 %v124
    %v591 = vpop.f32.mrf.mxu0
    %v592 = vadd.f32 0.0, %v591
    %593 = vmatmul.f32.gmra.mxu0 %v127
    %v594 = vpop.f32.mrf.mxu0
    %v595 = vadd.f32 0.0, %v594
    %596 = vmatmul.f32.gmra.mxu0 %v130
    %v597 = vpop.f32.mrf.mxu0
    %v598 = vadd.f32 0.0, %v597
    %599 = vmatmul.f32.gmra.mxu0 %v133
    %v600 = vpop.f32.mrf.mxu0
    %v601 = vadd.f32 0.0, %v600
    %602 = vmatmul.f32.gmra.mxu0 %v136
    %v603 = vpop.f32.mrf.mxu0
    %v604 = vadd.f32 0.0, %v603
    %605 = vmatmul.f32.gmra.mxu0 %v139
    %v606 = vpop.f32.mrf.mxu0
    %v607 = vadd.f32 0.0, %v606
    %608 = vmatmul.f32.gmra.mxu0 %v142
    %v609 = vpop.f32.mrf.mxu0
    %v610 = vadd.f32 0.0, %v609
    %611 = vmatmul.f32.gmra.mxu0 %v145
    %v612 = vpop.f32.mrf.mxu0
    %v613 = vadd.f32 0.0, %v612
    %614 = vmatmul.f32.gmra.mxu0 %v148
    %v615 = vpop.f32.mrf.mxu0
    %v616 = vadd.f32 0.0, %v615
    %617 = vmatmul.f32.gmra.mxu0 %v151
    %v618 = vpop.f32.mrf.mxu0
    %v619 = vadd.f32 0.0, %v618
    %620 = vmatmul.f32.gmra.mxu0 %v154
    %v621 = vpop.f32.mrf.mxu0
    %v622 = vadd.f32 0.0, %v621
    %623 = vmatmul.f32.gmra.mxu0 %v157
    %v624 = vpop.f32.mrf.mxu0
    %v625 = vadd.f32 0.0, %v624
    %626 = vmatmul.f32.gmra.mxu0 %v160
    %v627 = vpop.f32.mrf.mxu0
    %v628 = vadd.f32 0.0, %v627
    %629 = vmatmul.f32.gmra.mxu0 %v163
    %v630 = vpop.f32.mrf.mxu0
    %v631 = vadd.f32 0.0, %v630
    %632 = vmatmul.f32.gmra.mxu0 %v166
    %v633 = vpop.f32.mrf.mxu0
    %v634 = vadd.f32 0.0, %v633
    %635 = vmatmul.f32.gmra.mxu0 %v169
    %v636 = vpop.f32.mrf.mxu0
    %v637 = vadd.f32 0.0, %v636
    %638 = vmatmul.f32.gmra.mxu0 %v172
    %v639 = vpop.f32.mrf.mxu0
    %v640 = vadd.f32 0.0, %v639
    %641 = vmatmul.f32.gmra.mxu0 %v175
    %v642 = vpop.f32.mrf.mxu0
    %v643 = vadd.f32 0.0, %v642
    %644 = vmatmul.f32.gmra.mxu0 %v178
    %v645 = vpop.f32.mrf.mxu0
    %v646 = vadd.f32 0.0, %v645
    %647 = vmatmul.f32.gmra.mxu0 %v181
    %v648 = vpop.f32.mrf.mxu0
    %v649 = vadd.f32 0.0, %v648
    %650 = vmatmul.f32.gmra.mxu0 %v184
    %v651 = vpop.f32.mrf.mxu0
    %v652 = vadd.f32 0.0, %v651
    %653 = vmatmul.f32.gmra.mxu0 %v187
    %v654 = vpop.f32.mrf.mxu0
    %v655 = vadd.f32 0.0, %v654
    %656 = vmatmul.f32.gmra.mxu0 %v190
    %v657 = vpop.f32.mrf.mxu0
    %v658 = vadd.f32 0.0, %v657
    %659 = vmatmul.f32.gmra.mxu0 %v193
    %v660 = vpop.f32.mrf.mxu0
    %v661 = vadd.f32 0.0, %v660
    %662 = vmatmul.f32.gmra.mxu0 %v196
    %v663 = vpop.f32.mrf.mxu0
    %v664 = vadd.f32 0.0, %v663
    %665 = vmatmul.f32.gmra.mxu0 %v199
    %v666 = vpop.f32.mrf.mxu0
    %v667 = vadd.f32 0.0, %v666
    %668 = vdwg.mxu0
    %669 = vmatpush.msra.mxu0 0.0
    %670 = vmatpush.msra.mxu0 0.0
    %671 = vmatpush.msra.mxu0 0.0
    %672 = vmatpush.msra.mxu0 0.0
    %673 = vmatpush.msra.mxu0 0.0
    %674 = vmatpush.msra.mxu0 0.0
    %675 = vmatpush.msra.mxu0 0.0
    %676 = vmatpush.msra.mxu0 0.0
    %677 = vmatpush.msra.mxu0 0.0
    %678 = vmatpush.msra.mxu0 0.0
    %679 = vmatpush.msra.mxu0 0.0
    %680 = vmatpush.msra.mxu0 0.0
    %681 = vmatpush.msra.mxu0 0.0
    %682 = vmatpush.msra.mxu0 %v215
    %683 = vmatpush.msra.mxu0 %v98
    %684 = vmatpush.msra.mxu0 %v93
    %685 = vmatmul.f32.gmra.mxu0 %v106
    %v686 = vpop.f32.mrf.mxu0
    %v687 = vadd.f32 0.0, %v686
    %688 = vmatmul.f32.gmra.mxu0 %v109
    %v689 = vpop.f32.mrf.mxu0
    %v690 = vadd.f32 0.0, %v689
    %691 = vmatmul.f32.gmra.mxu0 %v112
    %v692 = vpop.f32.mrf.mxu0
    %v693 = vadd.f32 0.0, %v692
    %694 = vmatmul.f32.gmra.mxu0 %v115
    %v695 = vpop.f32.mrf.mxu0
    %v696 = vadd.f32 0.0, %v695
    %697 = vmatmul.f32.gmra.mxu0 %v118
    %v698 = vpop.f32.mrf.mxu0
    %v699 = vadd.f32 0.0, %v698
    %700 = vmatmul.f32.gmra.mxu0 %v121
    %v701 = vpop.f32.mrf.mxu0
    %v702 = vadd.f32 0.0, %v701
    %703 = vmatmul.f32.gmra.mxu0 %v124
    %v704 = vpop.f32.mrf.mxu0
    %v705 = vadd.f32 0.0, %v704
    %706 = vmatmul.f32.gmra.mxu0 %v127
    %v707 = vpop.f32.mrf.mxu0
    %v708 = vadd.f32 0.0, %v707
    %709 = vmatmul.f32.gmra.mxu0 %v130
    %v710 = vpop.f32.mrf.mxu0
    %v711 = vadd.f32 0.0, %v710
    %712 = vmatmul.f32.gmra.mxu0 %v133
    %v713 = vpop.f32.mrf.mxu0
    %v714 = vadd.f32 0.0, %v713
    %715 = vmatmul.f32.gmra.mxu0 %v136
    %v716 = vpop.f32.mrf.mxu0
    %v717 = vadd.f32 0.0, %v716
    %718 = vmatmul.f32.gmra.mxu0 %v139
    %v719 = vpop.f32.mrf.mxu0
    %v720 = vadd.f32 0.0, %v719
    %721 = vmatmul.f32.gmra.mxu0 %v142
    %v722 = vpop.f32.mrf.mxu0
    %v723 = vadd.f32 0.0, %v722
    %724 = vmatmul.f32.gmra.mxu0 %v145
    %v725 = vpop.f32.mrf.mxu0
    %v726 = vadd.f32 0.0, %v725
    %727 = vmatmul.f32.gmra.mxu0 %v148
    %v728 = vpop.f32.mrf.mxu0
    %v729 = vadd.f32 0.0, %v728
    %730 = vmatmul.f32.gmra.mxu0 %v151
    %v731 = vpop.f32.mrf.mxu0
    %v732 = vadd.f32 0.0, %v731
    %733 = vmatmul.f32.gmra.mxu0 %v154
    %v734 = vpop.f32.mrf.mxu0
    %v735 = vadd.f32 0.0, %v734
    %736 = vmatmul.f32.gmra.mxu0 %v157
    %v737 = vpop.f32.mrf.mxu0
    %v738 = vadd.f32 0.0, %v737
    %739 = vmatmul.f32.gmra.mxu0 %v160
    %v740 = vpop.f32.mrf.mxu0
    %v741 = vadd.f32 0.0, %v740
    %742 = vmatmul.f32.gmra.mxu0 %v163
    %v743 = vpop.f32.mrf.mxu0
    %v744 = vadd.f32 0.0, %v743
    %745 = vmatmul.f32.gmra.mxu0 %v166
    %v746 = vpop.f32.mrf.mxu0
    %v747 = vadd.f32 0.0, %v746
    %748 = vmatmul.f32.gmra.mxu0 %v169
    %v749 = vpop.f32.mrf.mxu0
    %v750 = vadd.f32 0.0, %v749
    %751 = vmatmul.f32.gmra.mxu0 %v172
    %v752 = vpop.f32.mrf.mxu0
    %v753 = vadd.f32 0.0, %v752
    %754 = vmatmul.f32.gmra.mxu0 %v175
    %v755 = vpop.f32.mrf.mxu0
    %v756 = vadd.f32 0.0, %v755
    %757 = vmatmul.f32.gmra.mxu0 %v178
    %v758 = vpop.f32.mrf.mxu0
    %v759 = vadd.f32 0.0, %v758
    %760 = vmatmul.f32.gmra.mxu0 %v181
    %v761 = vpop.f32.mrf.mxu0
    %v762 = vadd.f32 0.0, %v761
    %763 = vmatmul.f32.gmra.mxu0 %v184
    %v764 = vpop.f32.mrf.mxu0
    %v765 = vadd.f32 0.0, %v764
    %766 = vmatmul.f32.gmra.mxu0 %v187
    %v767 = vpop.f32.mrf.mxu0
    %v768 = vadd.f32 0.0, %v767
    %769 = vmatmul.f32.gmra.mxu0 %v190
    %v770 = vpop.f32.mrf.mxu0
    %v771 = vadd.f32 0.0, %v770
    %772 = vmatmul.f32.gmra.mxu0 %v193
    %v773 = vpop.f32.mrf.mxu0
    %v774 = vadd.f32 0.0, %v773
    %775 = vmatmul.f32.gmra.mxu0 %v196
    %v776 = vpop.f32.mrf.mxu0
    %v777 = vadd.f32 0.0, %v776
    %778 = vmatmul.f32.gmra.mxu0 %v199
    %v779 = vpop.f32.mrf.mxu0
    %v780 = vadd.f32 0.0, %v779
    %781 = vdwg.mxu0
    %v782 = vld [vmem:[%s2] sm:$0xf]
    %v784 = vperm.slane %v782, 0
    %v785 = vperm.slane %v782, 1
    %v786 = vperm.slane %v782, 2
    %v787 = vperm.slane %v782, 3
    %v792 = vadd.f32 %v235, %v784
    %v793 = vadd.f32 %v348, %v785
    %v794 = vadd.f32 %v461, %v786
    %v795 = vadd.f32 %v574, %v787
    %v796 = vadd.f32 %v238, %v784
    %v797 = vadd.f32 %v351, %v785
    %v798 = vadd.f32 %v464, %v786
    %v799 = vadd.f32 %v577, %v787
    %v800 = vadd.f32 %v241, %v784
    %v801 = vadd.f32 %v354, %v785
    %v802 = vadd.f32 %v467, %v786
    %v803 = vadd.f32 %v580, %v787
    %v804 = vadd.f32 %v244, %v784
    %v805 = vadd.f32 %v357, %v785
    %v806 = vadd.f32 %v470, %v786
    %v807 = vadd.f32 %v583, %v787
    %v808 = vadd.f32 %v247, %v784
    %v809 = vadd.f32 %v360, %v785
    %v810 = vadd.f32 %v473, %v786
    %v811 = vadd.f32 %v586, %v787
    %v812 = vadd.f32 %v250, %v784
    %v813 = vadd.f32 %v363, %v785
    %v814 = vadd.f32 %v476, %v786
    %v815 = vadd.f32 %v589, %v787
    %v816 = vadd.f32 %v253, %v784
    %v817 = vadd.f32 %v366, %v785
    %v818 = vadd.f32 %v479, %v786
    %v819 = vadd.f32 %v592, %v787
    %v820 = vadd.f32 %v256, %v784
    %v821 = vadd.f32 %v369, %v785
    %v822 = vadd.f32 %v482, %v786
    %v823 = vadd.f32 %v595, %v787
    %v824 = vadd.f32 %v259, %v784
    %v825 = vadd.f32 %v372, %v785
    %v826 = vadd.f32 %v485, %v786
    %v827 = vadd.f32 %v598, %v787
    %v828 = vadd.f32 %v262, %v784
    %v829 = vadd.f32 %v375, %v785
    %v830 = vadd.f32 %v488, %v786
    %v831 = vadd.f32 %v601, %v787
    %v832 = vadd.f32 %v265, %v784
    %v833 = vadd.f32 %v378, %v785
    %v834 = vadd.f32 %v491, %v786
    %v835 = vadd.f32 %v604, %v787
    %v836 = vadd.f32 %v268, %v784
    %v837 = vadd.f32 %v381, %v785
    %v838 = vadd.f32 %v494, %v786
    %v839 = vadd.f32 %v607, %v787
    %v840 = vadd.f32 %v271, %v784
    %v841 = vadd.f32 %v384, %v785
    %v842 = vadd.f32 %v497, %v786
    %v843 = vadd.f32 %v610, %v787
    %v844 = vadd.f32 %v274, %v784
    %v845 = vadd.f32 %v387, %v785
    %v846 = vadd.f32 %v500, %v786
    %v847 = vadd.f32 %v613, %v787
    %v848 = vadd.f32 %v277, %v784
    %v849 = vadd.f32 %v390, %v785
    %v850 = vadd.f32 %v503, %v786
    %v851 = vadd.f32 %v616, %v787
    %v852 = vadd.f32 %v280, %v784
    %v853 = vadd.f32 %v393, %v785
    %v854 = vadd.f32 %v506, %v786
    %v855 = vadd.f32 %v619, %v787
    %v856 = vadd.f32 %v283, %v784
    %v857 = vadd.f32 %v396, %v785
    %v858 = vadd.f32 %v509, %v786
    %v859 = vadd.f32 %v622, %v787
    %v860 = vadd.f32 %v286, %v784
    %v861 = vadd.f32 %v399, %v785
    %v862 = vadd.f32 %v512, %v786
    %v863 = vadd.f32 %v625, %v787
    %v864 = vadd.f32 %v289, %v784
    %v865 = vadd.f32 %v402, %v785
    %v866 = vadd.f32 %v515, %v786
    %v867 = vadd.f32 %v628, %v787
    %v868 = vadd.f32 %v292, %v784
    %v869 = vadd.f32 %v405, %v785
    %v870 = vadd.f32 %v518, %v786
    %v871 = vadd.f32 %v631, %v787
    %v872 = vadd.f32 %v295, %v784
    %v873 = vadd.f32 %v408, %v785
    %v874 = vadd.f32 %v521, %v786
    %v875 = vadd.f32 %v634, %v787
    %v876 = vadd.f32 %v298, %v784
    %v877 = vadd.f32 %v411, %v785
    %v878 = vadd.f32 %v524, %v786
    %v879 = vadd.f32 %v637, %v787
    %v880 = vadd.f32 %v301, %v784
    %v881 = vadd.f32 %v414, %v785
    %v882 = vadd.f32 %v527, %v786
    %v883 = vadd.f32 %v640, %v787
    %v884 = vadd.f32 %v304, %v784
    %v885 = vadd.f32 %v417, %v785
    %v886 = vadd.f32 %v530, %v786
    %v887 = vadd.f32 %v643, %v787
    %v888 = vadd.f32 %v307, %v784
    %v889 = vadd.f32 %v420, %v785
    %v890 = vadd.f32 %v533, %v786
    %v891 = vadd.f32 %v646, %v787
    %v892 = vadd.f32 %v310, %v784
    %v893 = vadd.f32 %v423, %v785
    %v894 = vadd.f32 %v536, %v786
    %v895 = vadd.f32 %v649, %v787
    %v896 = vadd.f32 %v313, %v784
    %v897 = vadd.f32 %v426, %v785
    %v898 = vadd.f32 %v539, %v786
    %v899 = vadd.f32 %v652, %v787
    %v900 = vadd.f32 %v316, %v784
    %v901 = vadd.f32 %v429, %v785
    %v902 = vadd.f32 %v542, %v786
    %v903 = vadd.f32 %v655, %v787
    %v904 = vadd.f32 %v319, %v784
    %v905 = vadd.f32 %v432, %v785
    %v906 = vadd.f32 %v545, %v786
    %v907 = vadd.f32 %v658, %v787
    %v908 = vadd.f32 %v322, %v784
    %v909 = vadd.f32 %v435, %v785
    %v910 = vadd.f32 %v548, %v786
    %v911 = vadd.f32 %v661, %v787
    %v912 = vadd.f32 %v325, %v784
    %v913 = vadd.f32 %v438, %v785
    %v914 = vadd.f32 %v551, %v786
    %v915 = vadd.f32 %v664, %v787
    %v916 = vadd.f32 %v328, %v784
    %v917 = vadd.f32 %v441, %v785
    %v918 = vadd.f32 %v554, %v786
    %v919 = vadd.f32 %v667, %v787
    %v920 = vmax.f32 %v792, 0.0
    %v921 = vmax.f32 %v793, 0.0
    %v922 = vmax.f32 %v794, 0.0
    %v923 = vmax.f32 %v795, 0.0
    %v924 = vmax.f32 %v796, 0.0
    %v925 = vmax.f32 %v797, 0.0
    %v926 = vmax.f32 %v798, 0.0
    %v927 = vmax.f32 %v799, 0.0
    %v928 = vmax.f32 %v800, 0.0
    %v929 = vmax.f32 %v801, 0.0
    %v930 = vmax.f32 %v802, 0.0
    %v931 = vmax.f32 %v803, 0.0
    %v932 = vmax.f32 %v804, 0.0
    %v933 = vmax.f32 %v805, 0.0
    %v934 = vmax.f32 %v806, 0.0
    %v935 = vmax.f32 %v807, 0.0
    %v936 = vmax.f32 %v808, 0.0
    %v937 = vmax.f32 %v809, 0.0
    %v938 = vmax.f32 %v810, 0.0
    %v939 = vmax.f32 %v811, 0.0
    %v940 = vmax.f32 %v812, 0.0
    %v941 = vmax.f32 %v813, 0.0
    %v942 = vmax.f32 %v814, 0.0
    %v943 = vmax.f32 %v815, 0.0
    %v944 = vmax.f32 %v816, 0.0
    %v945 = vmax.f32 %v817, 0.0
    %v946 = vmax.f32 %v818, 0.0
    %v947 = vmax.f32 %v819, 0.0
    %v948 = vmax.f32 %v820, 0.0
    %v949 = vmax.f32 %v821, 0.0
    %v950 = vmax.f32 %v822, 0.0
    %v951 = vmax.f32 %v823, 0.0
    %v952 = vmax.f32 %v824, 0.0
    %v953 = vmax.f32 %v825, 0.0
    %v954 = vmax.f32 %v826, 0.0
    %v955 = vmax.f32 %v827, 0.0
    %v956 = vmax.f32 %v828, 0.0
    %v957 = vmax.f32 %v829, 0.0
    %v958 = vmax.f32 %v830, 0.0
    %v959 = vmax.f32 %v831, 0.0
    %v960 = vmax.f32 %v832, 0.0
    %v961 = vmax.f32 %v833, 0.0
    %v962 = vmax.f32 %v834, 0.0
    %v963 = vmax.f32 %v835, 0.0
    %v964 = vmax.f32 %v836, 0.0
    %v965 = vmax.f32 %v837, 0.0
    %v966 = vmax.f32 %v838, 0.0
    %v967 = vmax.f32 %v839, 0.0
    %v968 = vmax.f32 %v840, 0.0
    %v969 = vmax.f32 %v841, 0.0
    %v970 = vmax.f32 %v842, 0.0
    %v971 = vmax.f32 %v843, 0.0
    %v972 = vmax.f32 %v844, 0.0
    %v973 = vmax.f32 %v845, 0.0
    %v974 = vmax.f32 %v846, 0.0
    %v975 = vmax.f32 %v847, 0.0
    %v976 = vmax.f32 %v848, 0.0
    %v977 = vmax.f32 %v849, 0.0
    %v978 = vmax.f32 %v850, 0.0
    %v979 = vmax.f32 %v851, 0.0
    %v980 = vmax.f32 %v852, 0.0
    %v981 = vmax.f32 %v853, 0.0
    %v982 = vmax.f32 %v854, 0.0
    %v983 = vmax.f32 %v855, 0.0
    %v984 = vmax.f32 %v856, 0.0
    %v985 = vmax.f32 %v857, 0.0
    %v986 = vmax.f32 %v858, 0.0
    %v987 = vmax.f32 %v859, 0.0
    %v988 = vmax.f32 %v860, 0.0
    %v989 = vmax.f32 %v861, 0.0
    %v990 = vmax.f32 %v862, 0.0
    %v991 = vmax.f32 %v863, 0.0
    %v992 = vmax.f32 %v864, 0.0
    %v993 = vmax.f32 %v865, 0.0
    %v994 = vmax.f32 %v866, 0.0
    %v995 = vmax.f32 %v867, 0.0
    %v996 = vmax.f32 %v868, 0.0
    %v997 = vmax.f32 %v869, 0.0
    %v998 = vmax.f32 %v870, 0.0
    %v999 = vmax.f32 %v871, 0.0
    %v1000 = vmax.f32 %v872, 0.0
    %v1001 = vmax.f32 %v873, 0.0
    %v1002 = vmax.f32 %v874, 0.0
    %v1003 = vmax.f32 %v875, 0.0
    %v1004 = vmax.f32 %v876, 0.0
    %v1005 = vmax.f32 %v877, 0.0
    %v1006 = vmax.f32 %v878, 0.0
    %v1007 = vmax.f32 %v879, 0.0
    %v1008 = vmax.f32 %v880, 0.0
    %v1009 = vmax.f32 %v881, 0.0
    %v1010 = vmax.f32 %v882, 0.0
    %v1011 = vmax.f32 %v883, 0.0
    %v1012 = vmax.f32 %v884, 0.0
    %v1013 = vmax.f32 %v885, 0.0
    %v1014 = vmax.f32 %v886, 0.0
    %v1015 = vmax.f32 %v887, 0.0
    %v1016 = vmax.f32 %v888, 0.0
    %v1017 = vmax.f32 %v889, 0.0
    %v1018 = vmax.f32 %v890, 0.0
    %v1019 = vmax.f32 %v891, 0.0
    %v1020 = vmax.f32 %v892, 0.0
    %v1021 = vmax.f32 %v893, 0.0
    %v1022 = vmax.f32 %v894, 0.0
    %v1023 = vmax.f32 %v895, 0.0
    %v1024 = vmax.f32 %v896, 0.0
    %v1025 = vmax.f32 %v897, 0.0
    %v1026 = vmax.f32 %v898, 0.0
    %v1027 = vmax.f32 %v899, 0.0
    %v1028 = vmax.f32 %v900, 0.0
    %v1029 = vmax.f32 %v901, 0.0
    %v1030 = vmax.f32 %v902, 0.0
    %v1031 = vmax.f32 %v903, 0.0
    %v1032 = vmax.f32 %v904, 0.0
    %v1033 = vmax.f32 %v905, 0.0
    %v1034 = vmax.f32 %v906, 0.0
    %v1035 = vmax.f32 %v907, 0.0
    %v1036 = vmax.f32 %v908, 0.0
    %v1037 = vmax.f32 %v909, 0.0
    %v1038 = vmax.f32 %v910, 0.0
    %v1039 = vmax.f32 %v911, 0.0
    %v1040 = vmax.f32 %v912, 0.0
    %v1041 = vmax.f32 %v913, 0.0
    %v1042 = vmax.f32 %v914, 0.0
    %v1043 = vmax.f32 %v915, 0.0
    %v1044 = vmax.f32 %v916, 0.0
    %v1045 = vmax.f32 %v917, 0.0
    %v1046 = vmax.f32 %v918, 0.0
    %v1047 = vmax.f32 %v919, 0.0
    %v1048 = vld [vmem:[#allocation3] sm:$0xff]
    %v1049 = vld [vmem:[#allocation3 + $0x8] sm:$0xff]
    %v1050 = vld [vmem:[#allocation3 + $0x10] sm:$0xff]
    %v1051 = vld [vmem:[#allocation3 + $0x18] sm:$0xff]
    %v1052 = vld [vmem:[#allocation3 + $0x20] sm:$0xff]
    %v1053 = vld [vmem:[#allocation3 + $0x28] sm:$0xff]
    %v1054 = vld [vmem:[#allocation3 + $0x30] sm:$0xff]
    %v1055 = vld [vmem:[#allocation3 + $0x38] sm:$0xff]
    %v1056 = vld [vmem:[#allocation3 + $0x40] sm:$0xff]
    %v1057 = vld [vmem:[#allocation3 + $0x48] sm:$0xff]
    %v1058 = vld [vmem:[#allocation3 + $0x50] sm:$0xff]
    %v1059 = vld [vmem:[#allocation3 + $0x58] sm:$0xff]
    %v1060 = vld [vmem:[#allocation3 + $0x60] sm:$0xff]
    %v1061 = vld [vmem:[#allocation3 + $0x68] sm:$0xff]
    %v1062 = vld [vmem:[#allocation3 + $0x70] sm:$0xff]
    %v1063 = vld [vmem:[#allocation3 + $0x78] sm:$0xff]
    %v1064 = vld [vmem:[#allocation3 + $0x80] sm:$0xff]
    %v1065 = vld [vmem:[#allocation3 + $0x88] sm:$0xff]
    %v1066 = vld [vmem:[#allocation3 + $0x90] sm:$0xff]
    %v1067 = vld [vmem:[#allocation3 + $0x98] sm:$0xff]
    %v1068 = vld [vmem:[#allocation3 + $0xa0] sm:$0xff]
    %v1069 = vld [vmem:[#allocation3 + $0xa8] sm:$0xff]
    %v1070 = vld [vmem:[#allocation3 + $0xb0] sm:$0xff]
    %v1071 = vld [vmem:[#allocation3 + $0xb8] sm:$0xff]
    %v1072 = vld [vmem:[#allocation3 + $0xc0] sm:$0xff]
    %v1073 = vld [vmem:[#allocation3 + $0xc8] sm:$0xff]
    %v1074 = vld [vmem:[#allocation3 + $0xd0] sm:$0xff]
    %v1075 = vld [vmem:[#allocation3 + $0xd8] sm:$0xff]
    %v1076 = vld [vmem:[#allocation3 + $0xe0] sm:$0xff]
    %v1077 = vld [vmem:[#allocation3 + $0xe8] sm:$0xff]
    %v1078 = vld [vmem:[#allocation3 + $0xf0] sm:$0xff]
    %v1079 = vld [vmem:[#allocation3 + $0xf8] sm:$0xff]
    %v1080 = vld [vmem:[#allocation3 + $0x100] sm:$0xff]
    %v1081 = vld [vmem:[#allocation3 + $0x108] sm:$0xff]
    %v1082 = vld [vmem:[#allocation3 + $0x110] sm:$0xff]
    %v1083 = vld [vmem:[#allocation3 + $0x118] sm:$0xff]
    %v1084 = vld [vmem:[#allocation3 + $0x120] sm:$0xff]
    %v1085 = vld [vmem:[#allocation3 + $0x128] sm:$0xff]
    %v1086 = vld [vmem:[#allocation3 + $0x130] sm:$0xff]
    %v1087 = vld [vmem:[#allocation3 + $0x138] sm:$0xff]
    %v1088 = vld [vmem:[#allocation3 + $0x140] sm:$0xff]
    %v1089 = vld [vmem:[#allocation3 + $0x148] sm:$0xff]
    %v1090 = vld [vmem:[#allocation3 + $0x150] sm:$0xff]
    %v1091 = vld [vmem:[#allocation3 + $0x158] sm:$0xff]
    %v1092 = vld [vmem:[#allocation3 + $0x160] sm:$0xff]
    %v1093 = vld [vmem:[#allocation3 + $0x168] sm:$0xff]
    %v1094 = vld [vmem:[#allocation3 + $0x170] sm:$0xff]
    %v1095 = vld [vmem:[#allocation3 + $0x178] sm:$0xff]
    %v1096 = vld [vmem:[#allocation3 + $0x180] sm:$0xff]
    %v1097 = vld [vmem:[#allocation3 + $0x188] sm:$0xff]
    %v1098 = vld [vmem:[#allocation3 + $0x190] sm:$0xff]
    %v1099 = vld [vmem:[#allocation3 + $0x198] sm:$0xff]
    %v1100 = vld [vmem:[#allocation3 + $0x1a0] sm:$0xff]
    %v1101 = vld [vmem:[#allocation3 + $0x1a8] sm:$0xff]
    %v1102 = vld [vmem:[#allocation3 + $0x1b0] sm:$0xff]
    %v1103 = vld [vmem:[#allocation3 + $0x1b8] sm:$0xff]
    %v1104 = vld [vmem:[#allocation3 + $0x1c0] sm:$0xff]
    %v1105 = vld [vmem:[#allocation3 + $0x1c8] sm:$0xff]
    %v1106 = vld [vmem:[#allocation3 + $0x1d0] sm:$0xff]
    %v1107 = vld [vmem:[#allocation3 + $0x1d8] sm:$0xff]
    %v1108 = vld [vmem:[#allocation3 + $0x1e0] sm:$0xff]
    %v1109 = vld [vmem:[#allocation3 + $0x1e8] sm:$0xff]
    %v1110 = vld [vmem:[#allocation3 + $0x1f0] sm:$0xff]
    %v1111 = vld [vmem:[#allocation3 + $0x1f8] sm:$0xff]
    %v1112 = vld [vmem:[#allocation3 + $0x200] sm:$0xff]
    %v1113 = vld [vmem:[#allocation3 + $0x208] sm:$0xff]
    %v1114 = vld [vmem:[#allocation3 + $0x210] sm:$0xff]
    %v1115 = vld [vmem:[#allocation3 + $0x218] sm:$0xff]
    %v1116 = vld [vmem:[#allocation3 + $0x220] sm:$0xff]
    %v1117 = vld [vmem:[#allocation3 + $0x228] sm:$0xff]
    %v1118 = vld [vmem:[#allocation3 + $0x230] sm:$0xff]
    %v1119 = vld [vmem:[#allocation3 + $0x238] sm:$0xff]
    %v1120 = vld [vmem:[#allocation3 + $0x240] sm:$0xff]
    %v1121 = vld [vmem:[#allocation3 + $0x248] sm:$0xff]
    %v1122 = vld [vmem:[#allocation3 + $0x250] sm:$0xff]
    %v1123 = vld [vmem:[#allocation3 + $0x258] sm:$0xff]
    %v1124 = vld [vmem:[#allocation3 + $0x260] sm:$0xff]
    %v1125 = vld [vmem:[#allocation3 + $0x268] sm:$0xff]
    %v1126 = vld [vmem:[#allocation3 + $0x270] sm:$0xff]
    %v1127 = vld [vmem:[#allocation3 + $0x278] sm:$0xff]
    %v1128 = vld [vmem:[#allocation3 + $0x280] sm:$0xff]
    %v1129 = vld [vmem:[#allocation3 + $0x288] sm:$0xff]
    %v1130 = vld [vmem:[#allocation3 + $0x290] sm:$0xff]
    %v1131 = vld [vmem:[#allocation3 + $0x298] sm:$0xff]
    %v1132 = vld [vmem:[#allocation3 + $0x2a0] sm:$0xff]
    %v1133 = vld [vmem:[#allocation3 + $0x2a8] sm:$0xff]
    %v1134 = vld [vmem:[#allocation3 + $0x2b0] sm:$0xff]
    %v1135 = vld [vmem:[#allocation3 + $0x2b8] sm:$0xff]
    %v1136 = vld [vmem:[#allocation3 + $0x2c0] sm:$0xff]
    %v1137 = vld [vmem:[#allocation3 + $0x2c8] sm:$0xff]
    %v1138 = vld [vmem:[#allocation3 + $0x2d0] sm:$0xff]
    %v1139 = vld [vmem:[#allocation3 + $0x2d8] sm:$0xff]
    %v1140 = vld [vmem:[#allocation3 + $0x2e0] sm:$0xff]
    %v1141 = vld [vmem:[#allocation3 + $0x2e8] sm:$0xff]
    %v1142 = vld [vmem:[#allocation3 + $0x2f0] sm:$0xff]
    %v1143 = vld [vmem:[#allocation3 + $0x2f8] sm:$0xff]
    %v1144 = vld [vmem:[#allocation3 + $0x300] sm:$0xff]
    %v1145 = vld [vmem:[#allocation3 + $0x308] sm:$0xff]
    %v1146 = vld [vmem:[#allocation3 + $0x310] sm:$0xff]
    %v1147 = vld [vmem:[#allocation3 + $0x318] sm:$0xff]
    %v1148 = vld [vmem:[#allocation3 + $0x320] sm:$0xff]
    %v1149 = vld [vmem:[#allocation3 + $0x328] sm:$0xff]
    %v1150 = vld [vmem:[#allocation3 + $0x330] sm:$0xff]
    %v1151 = vld [vmem:[#allocation3 + $0x338] sm:$0xff]
    %v1152 = vld [vmem:[#allocation3 + $0x340] sm:$0xff]
    %v1153 = vld [vmem:[#allocation3 + $0x348] sm:$0xff]
    %v1154 = vld [vmem:[#allocation3 + $0x350] sm:$0xff]
    %v1155 = vld [vmem:[#allocation3 + $0x358] sm:$0xff]
    %v1156 = vld [vmem:[#allocation3 + $0x360] sm:$0xff]
    %v1157 = vld [vmem:[#allocation3 + $0x368] sm:$0xff]
    %v1158 = vld [vmem:[#allocation3 + $0x370] sm:$0xff]
    %v1159 = vld [vmem:[#allocation3 + $0x378] sm:$0xff]
    %v1160 = vld [vmem:[#allocation3 + $0x380] sm:$0xff]
    %v1161 = vld [vmem:[#allocation3 + $0x388] sm:$0xff]
    %v1162 = vld [vmem:[#allocation3 + $0x390] sm:$0xff]
    %v1163 = vld [vmem:[#allocation3 + $0x398] sm:$0xff]
    %v1164 = vld [vmem:[#allocation3 + $0x3a0] sm:$0xff]
    %v1165 = vld [vmem:[#allocation3 + $0x3a8] sm:$0xff]
    %v1166 = vld [vmem:[#allocation3 + $0x3b0] sm:$0xff]
    %v1167 = vld [vmem:[#allocation3 + $0x3b8] sm:$0xff]
    %v1168 = vld [vmem:[#allocation3 + $0x3c0] sm:$0xff]
    %v1169 = vld [vmem:[#allocation3 + $0x3c8] sm:$0xff]
    %v1170 = vld [vmem:[#allocation3 + $0x3d0] sm:$0xff]
    %v1171 = vld [vmem:[#allocation3 + $0x3d8] sm:$0xff]
    %v1172 = vld [vmem:[#allocation3 + $0x3e0] sm:$0xff]
    %v1173 = vld [vmem:[#allocation3 + $0x3e8] sm:$0xff]
    %v1174 = vld [vmem:[#allocation3 + $0x3f0] sm:$0xff]
    %v1175 = vld [vmem:[#allocation3 + $0x3f8] sm:$0xff]
    %v1176 = vld [vmem:[%s4] sm:$0x3]
    %v1178 = vperm.slane %v1176, 0
    %v1179 = vperm.slane %v1176, 1
    %1182 = vmatpush.msra.mxu0 %v1078
    %1183 = vmatpush.msra.mxu0 %v1076
    %1184 = vmatpush.msra.mxu0 %v1074
    %1185 = vmatpush.msra.mxu0 %v1072
    %1186 = vmatpush.msra.mxu0 %v1070
    %1187 = vmatpush.msra.mxu0 %v1068
    %1188 = vmatpush.msra.mxu0 %v1066
    %1189 = vmatpush.msra.mxu0 %v1064
    %1190 = vmatpush.msra.mxu0 %v1062
    %1191 = vmatpush.msra.mxu0 %v1060
    %1192 = vmatpush.msra.mxu0 %v1058
    %1193 = vmatpush.msra.mxu0 %v1056
    %1194 = vmatpush.msra.mxu0 %v1054
    %1195 = vmatpush.msra.mxu0 %v1052
    %1196 = vmatpush.msra.mxu0 %v1050
    %1197 = vmatpush.msra.mxu0 %v1048
    %1198 = vmatmul.f32.gmra.mxu0 %v920
    %v1199 = vpop.f32.mrf.mxu0
    %v1200 = vadd.f32 %v1178, %v1199
    %1201 = vmatmul.f32.gmra.mxu0 %v924
    %v1202 = vpop.f32.mrf.mxu0
    %v1203 = vadd.f32 %v1178, %v1202
    %1204 = vmatmul.f32.gmra.mxu0 %v928
    %v1205 = vpop.f32.mrf.mxu0
    %v1206 = vadd.f32 %v1178, %v1205
    %1207 = vmatmul.f32.gmra.mxu0 %v932
    %v1208 = vpop.f32.mrf.mxu0
    %v1209 = vadd.f32 %v1178, %v1208
    %1210 = vmatmul.f32.gmra.mxu0 %v936
    %v1211 = vpop.f32.mrf.mxu0
    %v1212 = vadd.f32 %v1178, %v1211
    %1213 = vmatmul.f32.gmra.mxu0 %v940
    %v1214 = vpop.f32.mrf.mxu0
    %v1215 = vadd.f32 %v1178, %v1214
    %1216 = vmatmul.f32.gmra.mxu0 %v944
    %v1217 = vpop.f32.mrf.mxu0
    %v1218 = vadd.f32 %v1178, %v1217
    %1219 = vmatmul.f32.gmra.mxu0 %v948
    %v1220 = vpop.f32.mrf.mxu0
    %v1221 = vadd.f32 %v1178, %v1220
    %1222 = vmatmul.f32.gmra.mxu0 %v952
    %v1223 = vpop.f32.mrf.mxu0
    %v1224 = vadd.f32 %v1178, %v1223
    %1225 = vmatmul.f32.gmra.mxu0 %v956
    %v1226 = vpop.f32.mrf.mxu0
    %v1227 = vadd.f32 %v1178, %v1226
    %1228 = vmatmul.f32.gmra.mxu0 %v960
    %v1229 = vpop.f32.mrf.mxu0
    %v1230 = vadd.f32 %v1178, %v1229
    %1231 = vmatmul.f32.gmra.mxu0 %v964
    %v1232 = vpop.f32.mrf.mxu0
    %v1233 = vadd.f32 %v1178, %v1232
    %1234 = vmatmul.f32.gmra.mxu0 %v968
    %v1235 = vpop.f32.mrf.mxu0
    %v1236 = vadd.f32 %v1178, %v1235
    %1237 = vmatmul.f32.gmra.mxu0 %v972
    %v1238 = vpop.f32.mrf.mxu0
    %v1239 = vadd.f32 %v1178, %v1238
    %1240 = vmatmul.f32.gmra.mxu0 %v976
    %v1241 = vpop.f32.mrf.mxu0
    %v1242 = vadd.f32 %v1178, %v1241
    %1243 = vmatmul.f32.gmra.mxu0 %v980
    %v1244 = vpop.f32.mrf.mxu0
    %v1245 = vadd.f32 %v1178, %v1244
    %1246 = vmatmul.f32.gmra.mxu0 %v984
    %v1247 = vpop.f32.mrf.mxu0
    %v1248 = vadd.f32 %v1178, %v1247
    %1249 = vmatmul.f32.gmra.mxu0 %v988
    %v1250 = vpop.f32.mrf.mxu0
    %v1251 = vadd.f32 %v1178, %v1250
    %1252 = vmatmul.f32.gmra.mxu0 %v992
    %v1253 = vpop.f32.mrf.mxu0
    %v1254 = vadd.f32 %v1178, %v1253
    %1255 = vmatmul.f32.gmra.mxu0 %v996
    %v1256 = vpop.f32.mrf.mxu0
    %v1257 = vadd.f32 %v1178, %v1256
    %1258 = vmatmul.f32.gmra.mxu0 %v1000
    %v1259 = vpop.f32.mrf.mxu0
    %v1260 = vadd.f32 %v1178, %v1259
    %1261 = vmatmul.f32.gmra.mxu0 %v1004
    %v1262 = vpop.f32.mrf.mxu0
    %v1263 = vadd.f32 %v1178, %v1262
    %1264 = vmatmul.f32.gmra.mxu0 %v1008
    %v1265 = vpop.f32.mrf.mxu0
    %v1266 = vadd.f32 %v1178, %v1265
    %1267 = vmatmul.f32.gmra.mxu0 %v1012
    %v1268 = vpop.f32.mrf.mxu0
    %v1269 = vadd.f32 %v1178, %v1268
    %1270 = vmatmul.f32.gmra.mxu0 %v1016
    %v1271 = vpop.f32.mrf.mxu0
    %v1272 = vadd.f32 %v1178, %v1271
    %1273 = vmatmul.f32.gmra.mxu0 %v1020
    %v1274 = vpop.f32.mrf.mxu0
    %v1275 = vadd.f32 %v1178, %v1274
    %1276 = vmatmul.f32.gmra.mxu0 %v1024
    %v1277 = vpop.f32.mrf.mxu0
    %v1278 = vadd.f32 %v1178, %v1277
    %1279 = vmatmul.f32.gmra.mxu0 %v1028
    %v1280 = vpop.f32.mrf.mxu0
    %v1281 = vadd.f32 %v1178, %v1280
    %1282 = vmatmul.f32.gmra.mxu0 %v1032
    %v1283 = vpop.f32.mrf.mxu0
    %v1284 = vadd.f32 %v1178, %v1283
    %1285 = vmatmul.f32.gmra.mxu0 %v1036
    %v1286 = vpop.f32.mrf.mxu0
    %v1287 = vadd.f32 %v1178, %v1286
    %1288 = vmatmul.f32.gmra.mxu0 %v1040
    %v1289 = vpop.f32.mrf.mxu0
    %v1290 = vadd.f32 %v1178, %v1289
    %1291 = vmatmul.f32.gmra.mxu0 %v1044
    %v1292 = vpop.f32.mrf.mxu0
    %v1293 = vadd.f32 %v1178, %v1292
    %1294 = vdwg.mxu0
    %1295 = vmatpush.msra.mxu0 %v1110
    %1296 = vmatpush.msra.mxu0 %v1108
    %1297 = vmatpush.msra.mxu0 %v1106
    %1298 = vmatpush.msra.mxu0 %v1104
    %1299 = vmatpush.msra.mxu0 %v1102
    %1300 = vmatpush.msra.mxu0 %v1100
    %1301 = vmatpush.msra.mxu0 %v1098
    %1302 = vmatpush.msra.mxu0 %v1096
    %1303 = vmatpush.msra.mxu0 %v1094
    %1304 = vmatpush.msra.mxu0 %v1092
    %1305 = vmatpush.msra.mxu0 %v1090
    %1306 = vmatpush.msra.mxu0 %v1088
    %1307 = vmatpush.msra.mxu0 %v1086
    %1308 = vmatpush.msra.mxu0 %v1084
    %1309 = vmatpush.msra.mxu0 %v1082
    %1310 = vmatpush.msra.mxu0 %v1080
    %1311 = vmatmul.f32.gmra.mxu0 %v921
    %v1312 = vpop.f32.mrf.mxu0
    %v1313 = vadd.f32 %v1200, %v1312
    %1314 = vmatmul.f32.gmra.mxu0 %v925
    %v1315 = vpop.f32.mrf.mxu0
    %v1316 = vadd.f32 %v1203, %v1315
    %1317 = vmatmul.f32.gmra.mxu0 %v929
    %v1318 = vpop.f32.mrf.mxu0
    %v1319 = vadd.f32 %v1206, %v1318
    %1320 = vmatmul.f32.gmra.mxu0 %v933
    %v1321 = vpop.f32.mrf.mxu0
    %v1322 = vadd.f32 %v1209, %v1321
    %1323 = vmatmul.f32.gmra.mxu0 %v937
    %v1324 = vpop.f32.mrf.mxu0
    %v1325 = vadd.f32 %v1212, %v1324
    %1326 = vmatmul.f32.gmra.mxu0 %v941
    %v1327 = vpop.f32.mrf.mxu0
    %v1328 = vadd.f32 %v1215, %v1327
    %1329 = vmatmul.f32.gmra.mxu0 %v945
    %v1330 = vpop.f32.mrf.mxu0
    %v1331 = vadd.f32 %v1218, %v1330
    %1332 = vmatmul.f32.gmra.mxu0 %v949
    %v1333 = vpop.f32.mrf.mxu0
    %v1334 = vadd.f32 %v1221, %v1333
    %1335 = vmatmul.f32.gmra.mxu0 %v953
    %v1336 = vpop.f32.mrf.mxu0
    %v1337 = vadd.f32 %v1224, %v1336
    %1338 = vmatmul.f32.gmra.mxu0 %v957
    %v1339 = vpop.f32.mrf.mxu0
    %v1340 = vadd.f32 %v1227, %v1339
    %1341 = vmatmul.f32.gmra.mxu0 %v961
    %v1342 = vpop.f32.mrf.mxu0
    %v1343 = vadd.f32 %v1230, %v1342
    %1344 = vmatmul.f32.gmra.mxu0 %v965
    %v1345 = vpop.f32.mrf.mxu0
    %v1346 = vadd.f32 %v1233, %v1345
    %1347 = vmatmul.f32.gmra.mxu0 %v969
    %v1348 = vpop.f32.mrf.mxu0
    %v1349 = vadd.f32 %v1236, %v1348
    %1350 = vmatmul.f32.gmra.mxu0 %v973
    %v1351 = vpop.f32.mrf.mxu0
    %v1352 = vadd.f32 %v1239, %v1351
    %1353 = vmatmul.f32.gmra.mxu0 %v977
    %v1354 = vpop.f32.mrf.mxu0
    %v1355 = vadd.f32 %v1242, %v1354
    %1356 = vmatmul.f32.gmra.mxu0 %v981
    %v1357 = vpop.f32.mrf.mxu0
    %v1358 = vadd.f32 %v1245, %v1357
    %1359 = vmatmul.f32.gmra.mxu0 %v985
    %v1360 = vpop.f32.mrf.mxu0
    %v1361 = vadd.f32 %v1248, %v1360
    %1362 = vmatmul.f32.gmra.mxu0 %v989
    %v1363 = vpop.f32.mrf.mxu0
    %v1364 = vadd.f32 %v1251, %v1363
    %1365 = vmatmul.f32.gmra.mxu0 %v993
    %v1366 = vpop.f32.mrf.mxu0
    %v1367 = vadd.f32 %v1254, %v1366
    %1368 = vmatmul.f32.gmra.mxu0 %v997
    %v1369 = vpop.f32.mrf.mxu0
    %v1370 = vadd.f32 %v1257, %v1369
    %1371 = vmatmul.f32.gmra.mxu0 %v1001
    %v1372 = vpop.f32.mrf.mxu0
    %v1373 = vadd.f32 %v1260, %v1372
    %1374 = vmatmul.f32.gmra.mxu0 %v1005
    %v1375 = vpop.f32.mrf.mxu0
    %v1376 = vadd.f32 %v1263, %v1375
    %1377 = vmatmul.f32.gmra.mxu0 %v1009
    %v1378 = vpop.f32.mrf.mxu0
    %v1379 = vadd.f32 %v1266, %v1378
    %1380 = vmatmul.f32.gmra.mxu0 %v1013
    %v1381 = vpop.f32.mrf.mxu0
    %v1382 = vadd.f32 %v1269, %v1381
    %1383 = vmatmul.f32.gmra.mxu0 %v1017
    %v1384 = vpop.f32.mrf.mxu0
    %v1385 = vadd.f32 %v1272, %v1384
    %1386 = vmatmul.f32.gmra.mxu0 %v1021
    %v1387 = vpop.f32.mrf.mxu0
    %v1388 = vadd.f32 %v1275, %v1387
    %1389 = vmatmul.f32.gmra.mxu0 %v1025
    %v1390 = vpop.f32.mrf.mxu0
    %v1391 = vadd.f32 %v1278, %v1390
    %1392 = vmatmul.f32.gmra.mxu0 %v1029
    %v1393 = vpop.f32.mrf.mxu0
    %v1394 = vadd.f32 %v1281, %v1393
    %1395 = vmatmul.f32.gmra.mxu0 %v1033
    %v1396 = vpop.f32.mrf.mxu0
    %v1397 = vadd.f32 %v1284, %v1396
    %1398 = vmatmul.f32.gmra.mxu0 %v1037
    %v1399 = vpop.f32.mrf.mxu0
    %v1400 = vadd.f32 %v1287, %v1399
    %1401 = vmatmul.f32.gmra.mxu0 %v1041
    %v1402 = vpop.f32.mrf.mxu0
    %v1403 = vadd.f32 %v1290, %v1402
    %1404 = vmatmul.f32.gmra.mxu0 %v1045
    %v1405 = vpop.f32.mrf.mxu0
    %v1406 = vadd.f32 %v1293, %v1405
    %1407 = vdwg.mxu0
    %1408 = vmatpush.msra.mxu0 %v1142
    %1409 = vmatpush.msra.mxu0 %v1140
    %1410 = vmatpush.msra.mxu0 %v1138
    %1411 = vmatpush.msra.mxu0 %v1136
    %1412 = vmatpush.msra.mxu0 %v1134
    %1413 = vmatpush.msra.mxu0 %v1132
    %1414 = vmatpush.msra.mxu0 %v1130
    %1415 = vmatpush.msra.mxu0 %v1128
    %1416 = vmatpush.msra.mxu0 %v1126
    %1417 = vmatpush.msra.mxu0 %v1124
    %1418 = vmatpush.msra.mxu0 %v1122
    %1419 = vmatpush.msra.mxu0 %v1120
    %1420 = vmatpush.msra.mxu0 %v1118
    %1421 = vmatpush.msra.mxu0 %v1116
    %1422 = vmatpush.msra.mxu0 %v1114
    %1423 = vmatpush.msra.mxu0 %v1112
    %1424 = vmatmul.f32.gmra.mxu0 %v922
    %v1425 = vpop.f32.mrf.mxu0
    %v1426 = vadd.f32 %v1313, %v1425
    %1427 = vmatmul.f32.gmra.mxu0 %v926
    %v1428 = vpop.f32.mrf.mxu0
    %v1429 = vadd.f32 %v1316, %v1428
    %1430 = vmatmul.f32.gmra.mxu0 %v930
    %v1431 = vpop.f32.mrf.mxu0
    %v1432 = vadd.f32 %v1319, %v1431
    %1433 = vmatmul.f32.gmra.mxu0 %v934
    %v1434 = vpop.f32.mrf.mxu0
    %v1435 = vadd.f32 %v1322, %v1434
    %1436 = vmatmul.f32.gmra.mxu0 %v938
    %v1437 = vpop.f32.mrf.mxu0
    %v1438 = vadd.f32 %v1325, %v1437
    %1439 = vmatmul.f32.gmra.mxu0 %v942
    %v1440 = vpop.f32.mrf.mxu0
    %v1441 = vadd.f32 %v1328, %v1440
    %1442 = vmatmul.f32.gmra.mxu0 %v946
    %v1443 = vpop.f32.mrf.mxu0
    %v1444 = vadd.f32 %v1331, %v1443
    %1445 = vmatmul.f32.gmra.mxu0 %v950
    %v1446 = vpop.f32.mrf.mxu0
    %v1447 = vadd.f32 %v1334, %v1446
    %1448 = vmatmul.f32.gmra.mxu0 %v954
    %v1449 = vpop.f32.mrf.mxu0
    %v1450 = vadd.f32 %v1337, %v1449
    %1451 = vmatmul.f32.gmra.mxu0 %v958
    %v1452 = vpop.f32.mrf.mxu0
    %v1453 = vadd.f32 %v1340, %v1452
    %1454 = vmatmul.f32.gmra.mxu0 %v962
    %v1455 = vpop.f32.mrf.mxu0
    %v1456 = vadd.f32 %v1343, %v1455
    %1457 = vmatmul.f32.gmra.mxu0 %v966
    %v1458 = vpop.f32.mrf.mxu0
    %v1459 = vadd.f32 %v1346, %v1458
    %1460 = vmatmul.f32.gmra.mxu0 %v970
    %v1461 = vpop.f32.mrf.mxu0
    %v1462 = vadd.f32 %v1349, %v1461
    %1463 = vmatmul.f32.gmra.mxu0 %v974
    %v1464 = vpop.f32.mrf.mxu0
    %v1465 = vadd.f32 %v1352, %v1464
    %1466 = vmatmul.f32.gmra.mxu0 %v978
    %v1467 = vpop.f32.mrf.mxu0
    %v1468 = vadd.f32 %v1355, %v1467
    %1469 = vmatmul.f32.gmra.mxu0 %v982
    %v1470 = vpop.f32.mrf.mxu0
    %v1471 = vadd.f32 %v1358, %v1470
    %1472 = vmatmul.f32.gmra.mxu0 %v986
    %v1473 = vpop.f32.mrf.mxu0
    %v1474 = vadd.f32 %v1361, %v1473
    %1475 = vmatmul.f32.gmra.mxu0 %v990
    %v1476 = vpop.f32.mrf.mxu0
    %v1477 = vadd.f32 %v1364, %v1476
    %1478 = vmatmul.f32.gmra.mxu0 %v994
    %v1479 = vpop.f32.mrf.mxu0
    %v1480 = vadd.f32 %v1367, %v1479
    %1481 = vmatmul.f32.gmra.mxu0 %v998
    %v1482 = vpop.f32.mrf.mxu0
    %v1483 = vadd.f32 %v1370, %v1482
    %1484 = vmatmul.f32.gmra.mxu0 %v1002
    %v1485 = vpop.f32.mrf.mxu0
    %v1486 = vadd.f32 %v1373, %v1485
    %1487 = vmatmul.f32.gmra.mxu0 %v1006
    %v1488 = vpop.f32.mrf.mxu0
    %v1489 = vadd.f32 %v1376, %v1488
    %1490 = vmatmul.f32.gmra.mxu0 %v1010
    %v1491 = vpop.f32.mrf.mxu0
    %v1492 = vadd.f32 %v1379, %v1491
    %1493 = vmatmul.f32.gmra.mxu0 %v1014
    %v1494 = vpop.f32.mrf.mxu0
    %v1495 = vadd.f32 %v1382, %v1494
    %1496 = vmatmul.f32.gmra.mxu0 %v1018
    %v1497 = vpop.f32.mrf.mxu0
    %v1498 = vadd.f32 %v1385, %v1497
    %1499 = vmatmul.f32.gmra.mxu0 %v1022
    %v1500 = vpop.f32.mrf.mxu0
    %v1501 = vadd.f32 %v1388, %v1500
    %1502 = vmatmul.f32.gmra.mxu0 %v1026
    %v1503 = vpop.f32.mrf.mxu0
    %v1504 = vadd.f32 %v1391, %v1503
    %1505 = vmatmul.f32.gmra.mxu0 %v1030
    %v1506 = vpop.f32.mrf.mxu0
    %v1507 = vadd.f32 %v1394, %v1506
    %1508 = vmatmul.f32.gmra.mxu0 %v1034
    %v1509 = vpop.f32.mrf.mxu0
    %v1510 = vadd.f32 %v1397, %v1509
    %1511 = vmatmul.f32.gmra.mxu0 %v1038
    %v1512 = vpop.f32.mrf.mxu0
    %v1513 = vadd.f32 %v1400, %v1512
    %1514 = vmatmul.f32.gmra.mxu0 %v1042
    %v1515 = vpop.f32.mrf.mxu0
    %v1516 = vadd.f32 %v1403, %v1515
    %1517 = vmatmul.f32.gmra.mxu0 %v1046
    %v1518 = vpop.f32.mrf.mxu0
    %v1519 = vadd.f32 %v1406, %v1518
    %1520 = vdwg.mxu0
    %1521 = vmatpush.msra.mxu0 %v1174
    %1522 = vmatpush.msra.mxu0 %v1172
    %1523 = vmatpush.msra.mxu0 %v1170
    %1524 = vmatpush.msra.mxu0 %v1168
    %1525 = vmatpush.msra.mxu0 %v1166
    %1526 = vmatpush.msra.mxu0 %v1164
    %1527 = vmatpush.msra.mxu0 %v1162
    %1528 = vmatpush.msra.mxu0 %v1160
    %1529 = vmatpush.msra.mxu0 %v1158
    %1530 = vmatpush.msra.mxu0 %v1156
    %1531 = vmatpush.msra.mxu0 %v1154
    %1532 = vmatpush.msra.mxu0 %v1152
    %1533 = vmatpush.msra.mxu0 %v1150
    %1534 = vmatpush.msra.mxu0 %v1148
    %1535 = vmatpush.msra.mxu0 %v1146
    %1536 = vmatpush.msra.mxu0 %v1144
    %1537 = vmatmul.f32.gmra.mxu0 %v923
    %v1538 = vpop.f32.mrf.mxu0
    %v1539 = vadd.f32 %v1426, %v1538
    %1540 = vmatmul.f32.gmra.mxu0 %v927
    %v1541 = vpop.f32.mrf.mxu0
    %v1542 = vadd.f32 %v1429, %v1541
    %1543 = vmatmul.f32.gmra.mxu0 %v931
    %v1544 = vpop.f32.mrf.mxu0
    %v1545 = vadd.f32 %v1432, %v1544
    %1546 = vmatmul.f32.gmra.mxu0 %v935
    %v1547 = vpop.f32.mrf.mxu0
    %v1548 = vadd.f32 %v1435, %v1547
    %1549 = vmatmul.f32.gmra.mxu0 %v939
    %v1550 = vpop.f32.mrf.mxu0
    %v1551 = vadd.f32 %v1438, %v1550
    %1552 = vmatmul.f32.gmra.mxu0 %v943
    %v1553 = vpop.f32.mrf.mxu0
    %v1554 = vadd.f32 %v1441, %v1553
    %1555 = vmatmul.f32.gmra.mxu0 %v947
    %v1556 = vpop.f32.mrf.mxu0
    %v1557 = vadd.f32 %v1444, %v1556
    %1558 = vmatmul.f32.gmra.mxu0 %v951
    %v1559 = vpop.f32.mrf.mxu0
    %v1560 = vadd.f32 %v1447, %v1559
    %1561 = vmatmul.f32.gmra.mxu0 %v955
    %v1562 = vpop.f32.mrf.mxu0
    %v1563 = vadd.f32 %v1450, %v1562
    %1564 = vmatmul.f32.gmra.mxu0 %v959
    %v1565 = vpop.f32.mrf.mxu0
    %v1566 = vadd.f32 %v1453, %v1565
    %1567 = vmatmul.f32.gmra.mxu0 %v963
    %v1568 = vpop.f32.mrf.mxu0
    %v1569 = vadd.f32 %v1456, %v1568
    %1570 = vmatmul.f32.gmra.mxu0 %v967
    %v1571 = vpop.f32.mrf.mxu0
    %v1572 = vadd.f32 %v1459, %v1571
    %1573 = vmatmul.f32.gmra.mxu0 %v971
    %v1574 = vpop.f32.mrf.mxu0
    %v1575 = vadd.f32 %v1462, %v1574
    %1576 = vmatmul.f32.gmra.mxu0 %v975
    %v1577 = vpop.f32.mrf.mxu0
    %v1578 = vadd.f32 %v1465, %v1577
    %1579 = vmatmul.f32.gmra.mxu0 %v979
    %v1580 = vpop.f32.mrf.mxu0
    %v1581 = vadd.f32 %v1468, %v1580
    %1582 = vmatmul.f32.gmra.mxu0 %v983
    %v1583 = vpop.f32.mrf.mxu0
    %v1584 = vadd.f32 %v1471, %v1583
    %1585 = vmatmul.f32.gmra.mxu0 %v987
    %v1586 = vpop.f32.mrf.mxu0
    %v1587 = vadd.f32 %v1474, %v1586
    %1588 = vmatmul.f32.gmra.mxu0 %v991
    %v1589 = vpop.f32.mrf.mxu0
    %v1590 = vadd.f32 %v1477, %v1589
    %1591 = vmatmul.f32.gmra.mxu0 %v995
    %v1592 = vpop.f32.mrf.mxu0
    %v1593 = vadd.f32 %v1480, %v1592
    %1594 = vmatmul.f32.gmra.mxu0 %v999
    %v1595 = vpop.f32.mrf.mxu0
    %v1596 = vadd.f32 %v1483, %v1595
    %1597 = vmatmul.f32.gmra.mxu0 %v1003
    %v1598 = vpop.f32.mrf.mxu0
    %v1599 = vadd.f32 %v1486, %v1598
    %1600 = vmatmul.f32.gmra.mxu0 %v1007
    %v1601 = vpop.f32.mrf.mxu0
    %v1602 = vadd.f32 %v1489, %v1601
    %1603 = vmatmul.f32.gmra.mxu0 %v1011
    %v1604 = vpop.f32.mrf.mxu0
    %v1605 = vadd.f32 %v1492, %v1604
    %1606 = vmatmul.f32.gmra.mxu0 %v1015
    %v1607 = vpop.f32.mrf.mxu0
    %v1608 = vadd.f32 %v1495, %v1607
    %1609 = vmatmul.f32.gmra.mxu0 %v1019
    %v1610 = vpop.f32.mrf.mxu0
    %v1611 = vadd.f32 %v1498, %v1610
    %1612 = vmatmul.f32.gmra.mxu0 %v1023
    %v1613 = vpop.f32.mrf.mxu0
    %v1614 = vadd.f32 %v1501, %v1613
    %1615 = vmatmul.f32.gmra.mxu0 %v1027
    %v1616 = vpop.f32.mrf.mxu0
    %v1617 = vadd.f32 %v1504, %v1616
    %1618 = vmatmul.f32.gmra.mxu0 %v1031
    %v1619 = vpop.f32.mrf.mxu0
    %v1620 = vadd.f32 %v1507, %v1619
    %1621 = vmatmul.f32.gmra.mxu0 %v1035
    %v1622 = vpop.f32.mrf.mxu0
    %v1623 = vadd.f32 %v1510, %v1622
    %1624 = vmatmul.f32.gmra.mxu0 %v1039
    %v1625 = vpop.f32.mrf.mxu0
    %v1626 = vadd.f32 %v1513, %v1625
    %1627 = vmatmul.f32.gmra.mxu0 %v1043
    %v1628 = vpop.f32.mrf.mxu0
    %v1629 = vadd.f32 %v1516, %v1628
    %1630 = vmatmul.f32.gmra.mxu0 %v1047
    %v1631 = vpop.f32.mrf.mxu0
    %v1632 = vadd.f32 %v1519, %v1631
    %1633 = vdwg.mxu0
    %1634 = vmatpush.msra.mxu0 %v1079
    %1635 = vmatpush.msra.mxu0 %v1077
    %1636 = vmatpush.msra.mxu0 %v1075
    %1637 = vmatpush.msra.mxu0 %v1073
    %1638 = vmatpush.msra.mxu0 %v1071
    %1639 = vmatpush.msra.mxu0 %v1069
    %1640 = vmatpush.msra.mxu0 %v1067
    %1641 = vmatpush.msra.mxu0 %v1065
    %1642 = vmatpush.msra.mxu0 %v1063
    %1643 = vmatpush.msra.mxu0 %v1061
    %1644 = vmatpush.msra.mxu0 %v1059
    %1645 = vmatpush.msra.mxu0 %v1057
    %1646 = vmatpush.msra.mxu0 %v1055
    %1647 = vmatpush.msra.mxu0 %v1053
    %1648 = vmatpush.msra.mxu0 %v1051
    %1649 = vmatpush.msra.mxu0 %v1049
    %1650 = vmatmul.f32.gmra.mxu0 %v920
    %v1651 = vpop.f32.mrf.mxu0
    %v1652 = vadd.f32 %v1179, %v1651
    %1653 = vmatmul.f32.gmra.mxu0 %v924
    %v1654 = vpop.f32.mrf.mxu0
    %v1655 = vadd.f32 %v1179, %v1654
    %1656 = vmatmul.f32.gmra.mxu0 %v928
    %v1657 = vpop.f32.mrf.mxu0
    %v1658 = vadd.f32 %v1179, %v1657
    %1659 = vmatmul.f32.gmra.mxu0 %v932
    %v1660 = vpop.f32.mrf.mxu0
    %v1661 = vadd.f32 %v1179, %v1660
    %1662 = vmatmul.f32.gmra.mxu0 %v936
    %v1663 = vpop.f32.mrf.mxu0
    %v1664 = vadd.f32 %v1179, %v1663
    %1665 = vmatmul.f32.gmra.mxu0 %v940
    %v1666 = vpop.f32.mrf.mxu0
    %v1667 = vadd.f32 %v1179, %v1666
    %1668 = vmatmul.f32.gmra.mxu0 %v944
    %v1669 = vpop.f32.mrf.mxu0
    %v1670 = vadd.f32 %v1179, %v1669
    %1671 = vmatmul.f32.gmra.mxu0 %v948
    %v1672 = vpop.f32.mrf.mxu0
    %v1673 = vadd.f32 %v1179, %v1672
    %1674 = vmatmul.f32.gmra.mxu0 %v952
    %v1675 = vpop.f32.mrf.mxu0
    %v1676 = vadd.f32 %v1179, %v1675
    %1677 = vmatmul.f32.gmra.mxu0 %v956
    %v1678 = vpop.f32.mrf.mxu0
    %v1679 = vadd.f32 %v1179, %v1678
    %1680 = vmatmul.f32.gmra.mxu0 %v960
    %v1681 = vpop.f32.mrf.mxu0
    %v1682 = vadd.f32 %v1179, %v1681
    %1683 = vmatmul.f32.gmra.mxu0 %v964
    %v1684 = vpop.f32.mrf.mxu0
    %v1685 = vadd.f32 %v1179, %v1684
    %1686 = vmatmul.f32.gmra.mxu0 %v968
    %v1687 = vpop.f32.mrf.mxu0
    %v1688 = vadd.f32 %v1179, %v1687
    %1689 = vmatmul.f32.gmra.mxu0 %v972
    %v1690 = vpop.f32.mrf.mxu0
    %v1691 = vadd.f32 %v1179, %v1690
    %1692 = vmatmul.f32.gmra.mxu0 %v976
    %v1693 = vpop.f32.mrf.mxu0
    %v1694 = vadd.f32 %v1179, %v1693
    %1695 = vmatmul.f32.gmra.mxu0 %v980
    %v1696 = vpop.f32.mrf.mxu0
    %v1697 = vadd.f32 %v1179, %v1696
    %1698 = vmatmul.f32.gmra.mxu0 %v984
    %v1699 = vpop.f32.mrf.mxu0
    %v1700 = vadd.f32 %v1179, %v1699
    %1701 = vmatmul.f32.gmra.mxu0 %v988
    %v1702 = vpop.f32.mrf.mxu0
    %v1703 = vadd.f32 %v1179, %v1702
    %1704 = vmatmul.f32.gmra.mxu0 %v992
    %v1705 = vpop.f32.mrf.mxu0
    %v1706 = vadd.f32 %v1179, %v1705
    %1707 = vmatmul.f32.gmra.mxu0 %v996
    %v1708 = vpop.f32.mrf.mxu0
    %v1709 = vadd.f32 %v1179, %v1708
    %1710 = vmatmul.f32.gmra.mxu0 %v1000
    %v1711 = vpop.f32.mrf.mxu0
    %v1712 = vadd.f32 %v1179, %v1711
    %1713 = vmatmul.f32.gmra.mxu0 %v1004
    %v1714 = vpop.f32.mrf.mxu0
    %v1715 = vadd.f32 %v1179, %v1714
    %1716 = vmatmul.f32.gmra.mxu0 %v1008
    %v1717 = vpop.f32.mrf.mxu0
    %v1718 = vadd.f32 %v1179, %v1717
    %1719 = vmatmul.f32.gmra.mxu0 %v1012
    %v1720 = vpop.f32.mrf.mxu0
    %v1721 = vadd.f32 %v1179, %v1720
    %1722 = vmatmul.f32.gmra.mxu0 %v1016
    %v1723 = vpop.f32.mrf.mxu0
    %v1724 = vadd.f32 %v1179, %v1723
    %1725 = vmatmul.f32.gmra.mxu0 %v1020
    %v1726 = vpop.f32.mrf.mxu0
    %v1727 = vadd.f32 %v1179, %v1726
    %1728 = vmatmul.f32.gmra.mxu0 %v1024
    %v1729 = vpop.f32.mrf.mxu0
    %v1730 = vadd.f32 %v1179, %v1729
    %1731 = vmatmul.f32.gmra.mxu0 %v1028
    %v1732 = vpop.f32.mrf.mxu0
    %v1733 = vadd.f32 %v1179, %v1732
    %1734 = vmatmul.f32.gmra.mxu0 %v1032
    %v1735 = vpop.f32.mrf.mxu0
    %v1736 = vadd.f32 %v1179, %v1735
    %1737 = vmatmul.f32.gmra.mxu0 %v1036
    %v1738 = vpop.f32.mrf.mxu0
    %v1739 = vadd.f32 %v1179, %v1738
    %1740 = vmatmul.f32.gmra.mxu0 %v1040
    %v1741 = vpop.f32.mrf.mxu0
    %v1742 = vadd.f32 %v1179, %v1741
    %1743 = vmatmul.f32.gmra.mxu0 %v1044
    %v1744 = vpop.f32.mrf.mxu0
    %v1745 = vadd.f32 %v1179, %v1744
    %1746 = vdwg.mxu0
    %1747 = vmatpush.msra.mxu0 %v1111
    %1748 = vmatpush.msra.mxu0 %v1109
    %1749 = vmatpush.msra.mxu0 %v1107
    %1750 = vmatpush.msra.mxu0 %v1105
    %1751 = vmatpush.msra.mxu0 %v1103
    %1752 = vmatpush.msra.mxu0 %v1101
    %1753 = vmatpush.msra.mxu0 %v1099
    %1754 = vmatpush.msra.mxu0 %v1097
    %1755 = vmatpush.msra.mxu0 %v1095
    %1756 = vmatpush.msra.mxu0 %v1093
    %1757 = vmatpush.msra.mxu0 %v1091
    %1758 = vmatpush.msra.mxu0 %v1089
    %1759 = vmatpush.msra.mxu0 %v1087
    %1760 = vmatpush.msra.mxu0 %v1085
    %1761 = vmatpush.msra.mxu0 %v1083
    %1762 = vmatpush.msra.mxu0 %v1081
    %1763 = vmatmul.f32.gmra.mxu0 %v921
    %v1764 = vpop.f32.mrf.mxu0
    %v1765 = vadd.f32 %v1652, %v1764
    %1766 = vmatmul.f32.gmra.mxu0 %v925
    %v1767 = vpop.f32.mrf.mxu0
    %v1768 = vadd.f32 %v1655, %v1767
    %1769 = vmatmul.f32.gmra.mxu0 %v929
    %v1770 = vpop.f32.mrf.mxu0
    %v1771 = vadd.f32 %v1658, %v1770
    %1772 = vmatmul.f32.gmra.mxu0 %v933
    %v1773 = vpop.f32.mrf.mxu0
    %v1774 = vadd.f32 %v1661, %v1773
    %1775 = vmatmul.f32.gmra.mxu0 %v937
    %v1776 = vpop.f32.mrf.mxu0
    %v1777 = vadd.f32 %v1664, %v1776
    %1778 = vmatmul.f32.gmra.mxu0 %v941
    %v1779 = vpop.f32.mrf.mxu0
    %v1780 = vadd.f32 %v1667, %v1779
    %1781 = vmatmul.f32.gmra.mxu0 %v945
    %v1782 = vpop.f32.mrf.mxu0
    %v1783 = vadd.f32 %v1670, %v1782
    %1784 = vmatmul.f32.gmra.mxu0 %v949
    %v1785 = vpop.f32.mrf.mxu0
    %v1786 = vadd.f32 %v1673, %v1785
    %1787 = vmatmul.f32.gmra.mxu0 %v953
    %v1788 = vpop.f32.mrf.mxu0
    %v1789 = vadd.f32 %v1676, %v1788
    %1790 = vmatmul.f32.gmra.mxu0 %v957
    %v1791 = vpop.f32.mrf.mxu0
    %v1792 = vadd.f32 %v1679, %v1791
    %1793 = vmatmul.f32.gmra.mxu0 %v961
    %v1794 = vpop.f32.mrf.mxu0
    %v1795 = vadd.f32 %v1682, %v1794
    %1796 = vmatmul.f32.gmra.mxu0 %v965
    %v1797 = vpop.f32.mrf.mxu0
    %v1798 = vadd.f32 %v1685, %v1797
    %1799 = vmatmul.f32.gmra.mxu0 %v969
    %v1800 = vpop.f32.mrf.mxu0
    %v1801 = vadd.f32 %v1688, %v1800
    %1802 = vmatmul.f32.gmra.mxu0 %v973
    %v1803 = vpop.f32.mrf.mxu0
    %v1804 = vadd.f32 %v1691, %v1803
    %1805 = vmatmul.f32.gmra.mxu0 %v977
    %v1806 = vpop.f32.mrf.mxu0
    %v1807 = vadd.f32 %v1694, %v1806
    %1808 = vmatmul.f32.gmra.mxu0 %v981
    %v1809 = vpop.f32.mrf.mxu0
    %v1810 = vadd.f32 %v1697, %v1809
    %1811 = vmatmul.f32.gmra.mxu0 %v985
    %v1812 = vpop.f32.mrf.mxu0
    %v1813 = vadd.f32 %v1700, %v1812
    %1814 = vmatmul.f32.gmra.mxu0 %v989
    %v1815 = vpop.f32.mrf.mxu0
    %v1816 = vadd.f32 %v1703, %v1815
    %1817 = vmatmul.f32.gmra.mxu0 %v993
    %v1818 = vpop.f32.mrf.mxu0
    %v1819 = vadd.f32 %v1706, %v1818
    %1820 = vmatmul.f32.gmra.mxu0 %v997
    %v1821 = vpop.f32.mrf.mxu0
    %v1822 = vadd.f32 %v1709, %v1821
    %1823 = vmatmul.f32.gmra.mxu0 %v1001
    %v1824 = vpop.f32.mrf.mxu0
    %v1825 = vadd.f32 %v1712, %v1824
    %1826 = vmatmul.f32.gmra.mxu0 %v1005
    %v1827 = vpop.f32.mrf.mxu0
    %v1828 = vadd.f32 %v1715, %v1827
    %1829 = vmatmul.f32.gmra.mxu0 %v1009
    %v1830 = vpop.f32.mrf.mxu0
    %v1831 = vadd.f32 %v1718, %v1830
    %1832 = vmatmul.f32.gmra.mxu0 %v1013
    %v1833 = vpop.f32.mrf.mxu0
    %v1834 = vadd.f32 %v1721, %v1833
    %1835 = vmatmul.f32.gmra.mxu0 %v1017
    %v1836 = vpop.f32.mrf.mxu0
    %v1837 = vadd.f32 %v1724, %v1836
    %1838 = vmatmul.f32.gmra.mxu0 %v1021
    %v1839 = vpop.f32.mrf.mxu0
    %v1840 = vadd.f32 %v1727, %v1839
    %1841 = vmatmul.f32.gmra.mxu0 %v1025
    %v1842 = vpop.f32.mrf.mxu0
    %v1843 = vadd.f32 %v1730, %v1842
    %1844 = vmatmul.f32.gmra.mxu0 %v1029
    %v1845 = vpop.f32.mrf.mxu0
    %v1846 = vadd.f32 %v1733, %v1845
    %1847 = vmatmul.f32.gmra.mxu0 %v1033
    %v1848 = vpop.f32.mrf.mxu0
    %v1849 = vadd.f32 %v1736, %v1848
    %1850 = vmatmul.f32.gmra.mxu0 %v1037
    %v1851 = vpop.f32.mrf.mxu0
    %v1852 = vadd.f32 %v1739, %v1851
    %1853 = vmatmul.f32.gmra.mxu0 %v1041
    %v1854 = vpop.f32.mrf.mxu0
    %v1855 = vadd.f32 %v1742, %v1854
    %1856 = vmatmul.f32.gmra.mxu0 %v1045
    %v1857 = vpop.f32.mrf.mxu0
    %v1858 = vadd.f32 %v1745, %v1857
    %1859 = vdwg.mxu0
    %1860 = vmatpush.msra.mxu0 %v1143
    %1861 = vmatpush.msra.mxu0 %v1141
    %1862 = vmatpush.msra.mxu0 %v1139
    %1863 = vmatpush.msra.mxu0 %v1137
    %1864 = vmatpush.msra.mxu0 %v1135
    %1865 = vmatpush.msra.mxu0 %v1133
    %1866 = vmatpush.msra.mxu0 %v1131
    %1867 = vmatpush.msra.mxu0 %v1129
    %1868 = vmatpush.msra.mxu0 %v1127
    %1869 = vmatpush.msra.mxu0 %v1125
    %1870 = vmatpush.msra.mxu0 %v1123
    %1871 = vmatpush.msra.mxu0 %v1121
    %1872 = vmatpush.msra.mxu0 %v1119
    %1873 = vmatpush.msra.mxu0 %v1117
    %1874 = vmatpush.msra.mxu0 %v1115
    %1875 = vmatpush.msra.mxu0 %v1113
    %1876 = vmatmul.f32.gmra.mxu0 %v922
    %v1877 = vpop.f32.mrf.mxu0
    %v1878 = vadd.f32 %v1765, %v1877
    %1879 = vmatmul.f32.gmra.mxu0 %v926
    %v1880 = vpop.f32.mrf.mxu0
    %v1881 = vadd.f32 %v1768, %v1880
    %1882 = vmatmul.f32.gmra.mxu0 %v930
    %v1883 = vpop.f32.mrf.mxu0
    %v1884 = vadd.f32 %v1771, %v1883
    %1885 = vmatmul.f32.gmra.mxu0 %v934
    %v1886 = vpop.f32.mrf.mxu0
    %v1887 = vadd.f32 %v1774, %v1886
    %1888 = vmatmul.f32.gmra.mxu0 %v938
    %v1889 = vpop.f32.mrf.mxu0
    %v1890 = vadd.f32 %v1777, %v1889
    %1891 = vmatmul.f32.gmra.mxu0 %v942
    %v1892 = vpop.f32.mrf.mxu0
    %v1893 = vadd.f32 %v1780, %v1892
    %1894 = vmatmul.f32.gmra.mxu0 %v946
    %v1895 = vpop.f32.mrf.mxu0
    %v1896 = vadd.f32 %v1783, %v1895
    %1897 = vmatmul.f32.gmra.mxu0 %v950
    %v1898 = vpop.f32.mrf.mxu0
    %v1899 = vadd.f32 %v1786, %v1898
    %1900 = vmatmul.f32.gmra.mxu0 %v954
    %v1901 = vpop.f32.mrf.mxu0
    %v1902 = vadd.f32 %v1789, %v1901
    %1903 = vmatmul.f32.gmra.mxu0 %v958
    %v1904 = vpop.f32.mrf.mxu0
    %v1905 = vadd.f32 %v1792, %v1904
    %1906 = vmatmul.f32.gmra.mxu0 %v962
    %v1907 = vpop.f32.mrf.mxu0
    %v1908 = vadd.f32 %v1795, %v1907
    %1909 = vmatmul.f32.gmra.mxu0 %v966
    %v1910 = vpop.f32.mrf.mxu0
    %v1911 = vadd.f32 %v1798, %v1910
    %1912 = vmatmul.f32.gmra.mxu0 %v970
    %v1913 = vpop.f32.mrf.mxu0
    %v1914 = vadd.f32 %v1801, %v1913
    %1915 = vmatmul.f32.gmra.mxu0 %v974
    %v1916 = vpop.f32.mrf.mxu0
    %v1917 = vadd.f32 %v1804, %v1916
    %1918 = vmatmul.f32.gmra.mxu0 %v978
    %v1919 = vpop.f32.mrf.mxu0
    %v1920 = vadd.f32 %v1807, %v1919
    %1921 = vmatmul.f32.gmra.mxu0 %v982
    %v1922 = vpop.f32.mrf.mxu0
    %v1923 = vadd.f32 %v1810, %v1922
    %1924 = vmatmul.f32.gmra.mxu0 %v986
    %v1925 = vpop.f32.mrf.mxu0
    %v1926 = vadd.f32 %v1813, %v1925
    %1927 = vmatmul.f32.gmra.mxu0 %v990
    %v1928 = vpop.f32.mrf.mxu0
    %v1929 = vadd.f32 %v1816, %v1928
    %1930 = vmatmul.f32.gmra.mxu0 %v994
    %v1931 = vpop.f32.mrf.mxu0
    %v1932 = vadd.f32 %v1819, %v1931
    %1933 = vmatmul.f32.gmra.mxu0 %v998
    %v1934 = vpop.f32.mrf.mxu0
    %v1935 = vadd.f32 %v1822, %v1934
    %1936 = vmatmul.f32.gmra.mxu0 %v1002
    %v1937 = vpop.f32.mrf.mxu0
    %v1938 = vadd.f32 %v1825, %v1937
    %1939 = vmatmul.f32.gmra.mxu0 %v1006
    %v1940 = vpop.f32.mrf.mxu0
    %v1941 = vadd.f32 %v1828, %v1940
    %1942 = vmatmul.f32.gmra.mxu0 %v1010
    %v1943 = vpop.f32.mrf.mxu0
    %v1944 = vadd.f32 %v1831, %v1943
    %1945 = vmatmul.f32.gmra.mxu0 %v1014
    %v1946 = vpop.f32.mrf.mxu0
    %v1947 = vadd.f32 %v1834, %v1946
    %1948 = vmatmul.f32.gmra.mxu0 %v1018
    %v1949 = vpop.f32.mrf.mxu0
    %v1950 = vadd.f32 %v1837, %v1949
    %1951 = vmatmul.f32.gmra.mxu0 %v1022
    %v1952 = vpop.f32.mrf.mxu0
    %v1953 = vadd.f32 %v1840, %v1952
    %1954 = vmatmul.f32.gmra.mxu0 %v1026
    %v1955 = vpop.f32.mrf.mxu0
    %v1956 = vadd.f32 %v1843, %v1955
    %1957 = vmatmul.f32.gmra.mxu0 %v1030
    %v1958 = vpop.f32.mrf.mxu0
    %v1959 = vadd.f32 %v1846, %v1958
    %1960 = vmatmul.f32.gmra.mxu0 %v1034
    %v1961 = vpop.f32.mrf.mxu0
    %v1962 = vadd.f32 %v1849, %v1961
    %1963 = vmatmul.f32.gmra.mxu0 %v1038
    %v1964 = vpop.f32.mrf.mxu0
    %v1965 = vadd.f32 %v1852, %v1964
    %1966 = vmatmul.f32.gmra.mxu0 %v1042
    %v1967 = vpop.f32.mrf.mxu0
    %v1968 = vadd.f32 %v1855, %v1967
    %1969 = vmatmul.f32.gmra.mxu0 %v1046
    %v1970 = vpop.f32.mrf.mxu0
    %v1971 = vadd.f32 %v1858, %v1970
    %1972 = vdwg.mxu0
    %1973 = vmatpush.msra.mxu0 %v1175
    %1974 = vmatpush.msra.mxu0 %v1173
    %1975 = vmatpush.msra.mxu0 %v1171
    %1976 = vmatpush.msra.mxu0 %v1169
    %1977 = vmatpush.msra.mxu0 %v1167
    %1978 = vmatpush.msra.mxu0 %v1165
    %1979 = vmatpush.msra.mxu0 %v1163
    %1980 = vmatpush.msra.mxu0 %v1161
    %1981 = vmatpush.msra.mxu0 %v1159
    %1982 = vmatpush.msra.mxu0 %v1157
    %1983 = vmatpush.msra.mxu0 %v1155
    %1984 = vmatpush.msra.mxu0 %v1153
    %1985 = vmatpush.msra.mxu0 %v1151
    %1986 = vmatpush.msra.mxu0 %v1149
    %1987 = vmatpush.msra.mxu0 %v1147
    %1988 = vmatpush.msra.mxu0 %v1145
    %1989 = vmatmul.f32.gmra.mxu0 %v923
    %v1990 = vpop.f32.mrf.mxu0
    %v1991 = vadd.f32 %v1878, %v1990
    %1992 = vmatmul.f32.gmra.mxu0 %v927
    %v1993 = vpop.f32.mrf.mxu0
    %v1994 = vadd.f32 %v1881, %v1993
    %1995 = vmatmul.f32.gmra.mxu0 %v931
    %v1996 = vpop.f32.mrf.mxu0
    %v1997 = vadd.f32 %v1884, %v1996
    %1998 = vmatmul.f32.gmra.mxu0 %v935
    %v1999 = vpop.f32.mrf.mxu0
    %v2000 = vadd.f32 %v1887, %v1999
    %2001 = vmatmul.f32.gmra.mxu0 %v939
    %v2002 = vpop.f32.mrf.mxu0
    %v2003 = vadd.f32 %v1890, %v2002
    %2004 = vmatmul.f32.gmra.mxu0 %v943
    %v2005 = vpop.f32.mrf.mxu0
    %v2006 = vadd.f32 %v1893, %v2005
    %2007 = vmatmul.f32.gmra.mxu0 %v947
    %v2008 = vpop.f32.mrf.mxu0
    %v2009 = vadd.f32 %v1896, %v2008
    %2010 = vmatmul.f32.gmra.mxu0 %v951
    %v2011 = vpop.f32.mrf.mxu0
    %v2012 = vadd.f32 %v1899, %v2011
    %2013 = vmatmul.f32.gmra.mxu0 %v955
    %v2014 = vpop.f32.mrf.mxu0
    %v2015 = vadd.f32 %v1902, %v2014
    %2016 = vmatmul.f32.gmra.mxu0 %v959
    %v2017 = vpop.f32.mrf.mxu0
    %v2018 = vadd.f32 %v1905, %v2017
    %2019 = vmatmul.f32.gmra.mxu0 %v963
    %v2020 = vpop.f32.mrf.mxu0
    %v2021 = vadd.f32 %v1908, %v2020
    %2022 = vmatmul.f32.gmra.mxu0 %v967
    %v2023 = vpop.f32.mrf.mxu0
    %v2024 = vadd.f32 %v1911, %v2023
    %2025 = vmatmul.f32.gmra.mxu0 %v971
    %v2026 = vpop.f32.mrf.mxu0
    %v2027 = vadd.f32 %v1914, %v2026
    %2028 = vmatmul.f32.gmra.mxu0 %v975
    %v2029 = vpop.f32.mrf.mxu0
    %v2030 = vadd.f32 %v1917, %v2029
    %2031 = vmatmul.f32.gmra.mxu0 %v979
    %v2032 = vpop.f32.mrf.mxu0
    %v2033 = vadd.f32 %v1920, %v2032
    %2034 = vmatmul.f32.gmra.mxu0 %v983
    %v2035 = vpop.f32.mrf.mxu0
    %v2036 = vadd.f32 %v1923, %v2035
    %2037 = vmatmul.f32.gmra.mxu0 %v987
    %v2038 = vpop.f32.mrf.mxu0
    %v2039 = vadd.f32 %v1926, %v2038
    %2040 = vmatmul.f32.gmra.mxu0 %v991
    %v2041 = vpop.f32.mrf.mxu0
    %v2042 = vadd.f32 %v1929, %v2041
    %2043 = vmatmul.f32.gmra.mxu0 %v995
    %v2044 = vpop.f32.mrf.mxu0
    %v2045 = vadd.f32 %v1932, %v2044
    %2046 = vmatmul.f32.gmra.mxu0 %v999
    %v2047 = vpop.f32.mrf.mxu0
    %v2048 = vadd.f32 %v1935, %v2047
    %2049 = vmatmul.f32.gmra.mxu0 %v1003
    %v2050 = vpop.f32.mrf.mxu0
    %v2051 = vadd.f32 %v1938, %v2050
    %2052 = vmatmul.f32.gmra.mxu0 %v1007
    %v2053 = vpop.f32.mrf.mxu0
    %v2054 = vadd.f32 %v1941, %v2053
    %2055 = vmatmul.f32.gmra.mxu0 %v1011
    %v2056 = vpop.f32.mrf.mxu0
    %v2057 = vadd.f32 %v1944, %v2056
    %2058 = vmatmul.f32.gmra.mxu0 %v1015
    %v2059 = vpop.f32.mrf.mxu0
    %v2060 = vadd.f32 %v1947, %v2059
    %2061 = vmatmul.f32.gmra.mxu0 %v1019
    %v2062 = vpop.f32.mrf.mxu0
    %v2063 = vadd.f32 %v1950, %v2062
    %2064 = vmatmul.f32.gmra.mxu0 %v1023
    %v2065 = vpop.f32.mrf.mxu0
    %v2066 = vadd.f32 %v1953, %v2065
    %2067 = vmatmul.f32.gmra.mxu0 %v1027
    %v2068 = vpop.f32.mrf.mxu0
    %v2069 = vadd.f32 %v1956, %v2068
    %2070 = vmatmul.f32.gmra.mxu0 %v1031
    %v2071 = vpop.f32.mrf.mxu0
    %v2072 = vadd.f32 %v1959, %v2071
    %2073 = vmatmul.f32.gmra.mxu0 %v1035
    %v2074 = vpop.f32.mrf.mxu0
    %v2075 = vadd.f32 %v1962, %v2074
    %2076 = vmatmul.f32.gmra.mxu0 %v1039
    %v2077 = vpop.f32.mrf.mxu0
    %v2078 = vadd.f32 %v1965, %v2077
    %2079 = vmatmul.f32.gmra.mxu0 %v1043
    %v2080 = vpop.f32.mrf.mxu0
    %v2081 = vadd.f32 %v1968, %v2080
    %2082 = vmatmul.f32.gmra.mxu0 %v1047
    %v2083 = vpop.f32.mrf.mxu0
    %v2084 = vadd.f32 %v1971, %v2083
    %2085 = vdwg.mxu0
    %v2086 = vmax.f32 %v1539, 0.0
    %v2087 = vmax.f32 %v1991, 0.0
    %v2088 = vmax.f32 %v1542, 0.0
    %v2089 = vmax.f32 %v1994, 0.0
    %v2090 = vmax.f32 %v1545, 0.0
    %v2091 = vmax.f32 %v1997, 0.0
    %v2092 = vmax.f32 %v1548, 0.0
    %v2093 = vmax.f32 %v2000, 0.0
    %v2094 = vmax.f32 %v1551, 0.0
    %v2095 = vmax.f32 %v2003, 0.0
    %v2096 = vmax.f32 %v1554, 0.0
    %v2097 = vmax.f32 %v2006, 0.0
    %v2098 = vmax.f32 %v1557, 0.0
    %v2099 = vmax.f32 %v2009, 0.0
    %v2100 = vmax.f32 %v1560, 0.0
    %v2101 = vmax.f32 %v2012, 0.0
    %v2102 = vmax.f32 %v1563, 0.0
    %v2103 = vmax.f32 %v2015, 0.0
    %v2104 = vmax.f32 %v1566, 0.0
    %v2105 = vmax.f32 %v2018, 0.0
    %v2106 = vmax.f32 %v1569, 0.0
    %v2107 = vmax.f32 %v2021, 0.0
    %v2108 = vmax.f32 %v1572, 0.0
    %v2109 = vmax.f32 %v2024, 0.0
    %v2110 = vmax.f32 %v1575, 0.0
    %v2111 = vmax.f32 %v2027, 0.0
    %v2112 = vmax.f32 %v1578, 0.0
    %v2113 = vmax.f32 %v2030, 0.0
    %v2114 = vmax.f32 %v1581, 0.0
    %v2115 = vmax.f32 %v2033, 0.0
    %v2116 = vmax.f32 %v1584, 0.0
    %v2117 = vmax.f32 %v2036, 0.0
    %v2118 = vmax.f32 %v1587, 0.0
    %v2119 = vmax.f32 %v2039, 0.0
    %v2120 = vmax.f32 %v1590, 0.0
    %v2121 = vmax.f32 %v2042, 0.0
    %v2122 = vmax.f32 %v1593, 0.0
    %v2123 = vmax.f32 %v2045, 0.0
    %v2124 = vmax.f32 %v1596, 0.0
    %v2125 = vmax.f32 %v2048, 0.0
    %v2126 = vmax.f32 %v1599, 0.0
    %v2127 = vmax.f32 %v2051, 0.0
    %v2128 = vmax.f32 %v1602, 0.0
    %v2129 = vmax.f32 %v2054, 0.0
    %v2130 = vmax.f32 %v1605, 0.0
    %v2131 = vmax.f32 %v2057, 0.0
    %v2132 = vmax.f32 %v1608, 0.0
    %v2133 = vmax.f32 %v2060, 0.0
    %v2134 = vmax.f32 %v1611, 0.0
    %v2135 = vmax.f32 %v2063, 0.0
    %v2136 = vmax.f32 %v1614, 0.0
    %v2137 = vmax.f32 %v2066, 0.0
    %v2138 = vmax.f32 %v1617, 0.0
    %v2139 = vmax.f32 %v2069, 0.0
    %v2140 = vmax.f32 %v1620, 0.0
    %v2141 = vmax.f32 %v2072, 0.0
    %v2142 = vmax.f32 %v1623, 0.0
    %v2143 = vmax.f32 %v2075, 0.0
    %v2144 = vmax.f32 %v1626, 0.0
    %v2145 = vmax.f32 %v2078, 0.0
    %v2146 = vmax.f32 %v1629, 0.0
    %v2147 = vmax.f32 %v2081, 0.0
    %v2148 = vmax.f32 %v1632, 0.0
    %v2149 = vmax.f32 %v2084, 0.0
    %v2150 = vld [vmem:[%s5] sm:$0xff]
    %v2151 = vld [vmem:[%s5 + $0x8] sm:$0xff]
    %v2152 = vld [vmem:[%s5 + $0x10] sm:$0xff]
    %v2153 = vld [vmem:[%s5 + $0x18] sm:$0xff]
    %v2154 = vld [vmem:[%s5 + $0x20] sm:$0xff]
    %v2155 = vld [vmem:[%s5 + $0x28] sm:$0xff]
    %v2156 = vld [vmem:[%s5 + $0x30] sm:$0xff]
    %v2157 = vld [vmem:[%s5 + $0x38] sm:$0xff]
    %v2158 = vld [vmem:[%s5 + $0x40] sm:$0xff]
    %v2159 = vld [vmem:[%s5 + $0x48] sm:$0xff]
    %v2160 = vld [vmem:[%s5 + $0x50] sm:$0xff]
    %v2161 = vld [vmem:[%s5 + $0x58] sm:$0xff]
    %v2162 = vld [vmem:[%s5 + $0x60] sm:$0xff]
    %v2163 = vld [vmem:[%s5 + $0x68] sm:$0xff]
    %v2164 = vld [vmem:[%s5 + $0x70] sm:$0xff]
    %v2165 = vld [vmem:[%s5 + $0x78] sm:$0xff]
    %v2166 = vld [vmem:[%s5 + $0x80] sm:$0xff]
    %v2167 = vld [vmem:[%s5 + $0x88] sm:$0xff]
    %v2168 = vld [vmem:[%s5 + $0x90] sm:$0xff]
    %v2169 = vld [vmem:[%s5 + $0x98] sm:$0xff]
    %v2170 = vld [vmem:[%s5 + $0xa0] sm:$0xff]
    %v2171 = vld [vmem:[%s5 + $0xa8] sm:$0xff]
    %v2172 = vld [vmem:[%s5 + $0xb0] sm:$0xff]
    %v2173 = vld [vmem:[%s5 + $0xb8] sm:$0xff]
    %v2174 = vld [vmem:[%s5 + $0xc0] sm:$0xff]
    %v2175 = vld [vmem:[%s5 + $0xc8] sm:$0xff]
    %v2176 = vld [vmem:[%s5 + $0xd0] sm:$0xff]
    %v2177 = vld [vmem:[%s5 + $0xd8] sm:$0xff]
    %v2178 = vld [vmem:[%s5 + $0xe0] sm:$0xff]
    %v2179 = vld [vmem:[%s5 + $0xe8] sm:$0xff]
    %v2180 = vld [vmem:[%s5 + $0xf0] sm:$0xff]
    %v2181 = vld [vmem:[%s5 + $0xf8] sm:$0xff]
    %2182 = vmatpush.msra.mxu0 %v2165
    %2183 = vmatpush.msra.mxu0 %v2164
    %2184 = vmatpush.msra.mxu0 %v2163
    %2185 = vmatpush.msra.mxu0 %v2162
    %2186 = vmatpush.msra.mxu0 %v2161
    %2187 = vmatpush.msra.mxu0 %v2160
    %2188 = vmatpush.msra.mxu0 %v2159
    %2189 = vmatpush.msra.mxu0 %v2158
    %2190 = vmatpush.msra.mxu0 %v2157
    %2191 = vmatpush.msra.mxu0 %v2156
    %2192 = vmatpush.msra.mxu0 %v2155
    %2193 = vmatpush.msra.mxu0 %v2154
    %2194 = vmatpush.msra.mxu0 %v2153
    %2195 = vmatpush.msra.mxu0 %v2152
    %2196 = vmatpush.msra.mxu0 %v2151
    %2197 = vmatpush.msra.mxu0 %v2150
    %2198 = vmatmul.f32.gmra.mxu0 %v2086
    %v2199 = vpop.f32.mrf.mxu0
    %v2200 = vadd.f32 %v687, %v2199
    %2201 = vmatmul.f32.gmra.mxu0 %v2088
    %v2202 = vpop.f32.mrf.mxu0
    %v2203 = vadd.f32 %v690, %v2202
    %2204 = vmatmul.f32.gmra.mxu0 %v2090
    %v2205 = vpop.f32.mrf.mxu0
    %v2206 = vadd.f32 %v693, %v2205
    %2207 = vmatmul.f32.gmra.mxu0 %v2092
    %v2208 = vpop.f32.mrf.mxu0
    %v2209 = vadd.f32 %v696, %v2208
    %2210 = vmatmul.f32.gmra.mxu0 %v2094
    %v2211 = vpop.f32.mrf.mxu0
    %v2212 = vadd.f32 %v699, %v2211
    %2213 = vmatmul.f32.gmra.mxu0 %v2096
    %v2214 = vpop.f32.mrf.mxu0
    %v2215 = vadd.f32 %v702, %v2214
    %2216 = vmatmul.f32.gmra.mxu0 %v2098
    %v2217 = vpop.f32.mrf.mxu0
    %v2218 = vadd.f32 %v705, %v2217
    %2219 = vmatmul.f32.gmra.mxu0 %v2100
    %v2220 = vpop.f32.mrf.mxu0
    %v2221 = vadd.f32 %v708, %v2220
    %2222 = vmatmul.f32.gmra.mxu0 %v2102
    %v2223 = vpop.f32.mrf.mxu0
    %v2224 = vadd.f32 %v711, %v2223
    %2225 = vmatmul.f32.gmra.mxu0 %v2104
    %v2226 = vpop.f32.mrf.mxu0
    %v2227 = vadd.f32 %v714, %v2226
    %2228 = vmatmul.f32.gmra.mxu0 %v2106
    %v2229 = vpop.f32.mrf.mxu0
    %v2230 = vadd.f32 %v717, %v2229
    %2231 = vmatmul.f32.gmra.mxu0 %v2108
    %v2232 = vpop.f32.mrf.mxu0
    %v2233 = vadd.f32 %v720, %v2232
    %2234 = vmatmul.f32.gmra.mxu0 %v2110
    %v2235 = vpop.f32.mrf.mxu0
    %v2236 = vadd.f32 %v723, %v2235
    %2237 = vmatmul.f32.gmra.mxu0 %v2112
    %v2238 = vpop.f32.mrf.mxu0
    %v2239 = vadd.f32 %v726, %v2238
    %2240 = vmatmul.f32.gmra.mxu0 %v2114
    %v2241 = vpop.f32.mrf.mxu0
    %v2242 = vadd.f32 %v729, %v2241
    %2243 = vmatmul.f32.gmra.mxu0 %v2116
    %v2244 = vpop.f32.mrf.mxu0
    %v2245 = vadd.f32 %v732, %v2244
    %2246 = vmatmul.f32.gmra.mxu0 %v2118
    %v2247 = vpop.f32.mrf.mxu0
    %v2248 = vadd.f32 %v735, %v2247
    %2249 = vmatmul.f32.gmra.mxu0 %v2120
    %v2250 = vpop.f32.mrf.mxu0
    %v2251 = vadd.f32 %v738, %v2250
    %2252 = vmatmul.f32.gmra.mxu0 %v2122
    %v2253 = vpop.f32.mrf.mxu0
    %v2254 = vadd.f32 %v741, %v2253
    %2255 = vmatmul.f32.gmra.mxu0 %v2124
    %v2256 = vpop.f32.mrf.mxu0
    %v2257 = vadd.f32 %v744, %v2256
    %2258 = vmatmul.f32.gmra.mxu0 %v2126
    %v2259 = vpop.f32.mrf.mxu0
    %v2260 = vadd.f32 %v747, %v2259
    %2261 = vmatmul.f32.gmra.mxu0 %v2128
    %v2262 = vpop.f32.mrf.mxu0
    %v2263 = vadd.f32 %v750, %v2262
    %2264 = vmatmul.f32.gmra.mxu0 %v2130
    %v2265 = vpop.f32.mrf.mxu0
    %v2266 = vadd.f32 %v753, %v2265
    %2267 = vmatmul.f32.gmra.mxu0 %v2132
    %v2268 = vpop.f32.mrf.mxu0
    %v2269 = vadd.f32 %v756, %v2268
    %2270 = vmatmul.f32.gmra.mxu0 %v2134
    %v2271 = vpop.f32.mrf.mxu0
    %v2272 = vadd.f32 %v759, %v2271
    %2273 = vmatmul.f32.gmra.mxu0 %v2136
    %v2274 = vpop.f32.mrf.mxu0
    %v2275 = vadd.f32 %v762, %v2274
    %2276 = vmatmul.f32.gmra.mxu0 %v2138
    %v2277 = vpop.f32.mrf.mxu0
    %v2278 = vadd.f32 %v765, %v2277
    %2279 = vmatmul.f32.gmra.mxu0 %v2140
    %v2280 = vpop.f32.mrf.mxu0
    %v2281 = vadd.f32 %v768, %v2280
    %2282 = vmatmul.f32.gmra.mxu0 %v2142
    %v2283 = vpop.f32.mrf.mxu0
    %v2284 = vadd.f32 %v771, %v2283
    %2285 = vmatmul.f32.gmra.mxu0 %v2144
    %v2286 = vpop.f32.mrf.mxu0
    %v2287 = vadd.f32 %v774, %v2286
    %2288 = vmatmul.f32.gmra.mxu0 %v2146
    %v2289 = vpop.f32.mrf.mxu0
    %v2290 = vadd.f32 %v777, %v2289
    %2291 = vmatmul.f32.gmra.mxu0 %v2148
    %v2292 = vpop.f32.mrf.mxu0
    %v2293 = vadd.f32 %v780, %v2292
    %2294 = vdwg.mxu0
    %2295 = vmatpush.msra.mxu0 %v2181
    %2296 = vmatpush.msra.mxu0 %v2180
    %2297 = vmatpush.msra.mxu0 %v2179
    %2298 = vmatpush.msra.mxu0 %v2178
    %2299 = vmatpush.msra.mxu0 %v2177
    %2300 = vmatpush.msra.mxu0 %v2176
    %2301 = vmatpush.msra.mxu0 %v2175
    %2302 = vmatpush.msra.mxu0 %v2174
    %2303 = vmatpush.msra.mxu0 %v2173
    %2304 = vmatpush.msra.mxu0 %v2172
    %2305 = vmatpush.msra.mxu0 %v2171
    %2306 = vmatpush.msra.mxu0 %v2170
    %2307 = vmatpush.msra.mxu0 %v2169
    %2308 = vmatpush.msra.mxu0 %v2168
    %2309 = vmatpush.msra.mxu0 %v2167
    %2310 = vmatpush.msra.mxu0 %v2166
    %2311 = vmatmul.f32.gmra.mxu0 %v2087
    %v2312 = vpop.f32.mrf.mxu0
    %v2313 = vadd.f32 %v2200, %v2312
    %2314 = vmatmul.f32.gmra.mxu0 %v2089
    %v2315 = vpop.f32.mrf.mxu0
    %v2316 = vadd.f32 %v2203, %v2315
    %2317 = vmatmul.f32.gmra.mxu0 %v2091
    %v2318 = vpop.f32.mrf.mxu0
    %v2319 = vadd.f32 %v2206, %v2318
    %2320 = vmatmul.f32.gmra.mxu0 %v2093
    %v2321 = vpop.f32.mrf.mxu0
    %v2322 = vadd.f32 %v2209, %v2321
    %2323 = vmatmul.f32.gmra.mxu0 %v2095
    %v2324 = vpop.f32.mrf.mxu0
    %v2325 = vadd.f32 %v2212, %v2324
    %2326 = vmatmul.f32.gmra.mxu0 %v2097
    %v2327 = vpop.f32.mrf.mxu0
    %v2328 = vadd.f32 %v2215, %v2327
    %2329 = vmatmul.f32.gmra.mxu0 %v2099
    %v2330 = vpop.f32.mrf.mxu0
    %v2331 = vadd.f32 %v2218, %v2330
    %2332 = vmatmul.f32.gmra.mxu0 %v2101
    %v2333 = vpop.f32.mrf.mxu0
    %v2334 = vadd.f32 %v2221, %v2333
    %2335 = vmatmul.f32.gmra.mxu0 %v2103
    %v2336 = vpop.f32.mrf.mxu0
    %v2337 = vadd.f32 %v2224, %v2336
    %2338 = vmatmul.f32.gmra.mxu0 %v2105
    %v2339 = vpop.f32.mrf.mxu0
    %v2340 = vadd.f32 %v2227, %v2339
    %2341 = vmatmul.f32.gmra.mxu0 %v2107
    %v2342 = vpop.f32.mrf.mxu0
    %v2343 = vadd.f32 %v2230, %v2342
    %2344 = vmatmul.f32.gmra.mxu0 %v2109
    %v2345 = vpop.f32.mrf.mxu0
    %v2346 = vadd.f32 %v2233, %v2345
    %2347 = vmatmul.f32.gmra.mxu0 %v2111
    %v2348 = vpop.f32.mrf.mxu0
    %v2349 = vadd.f32 %v2236, %v2348
    %2350 = vmatmul.f32.gmra.mxu0 %v2113
    %v2351 = vpop.f32.mrf.mxu0
    %v2352 = vadd.f32 %v2239, %v2351
    %2353 = vmatmul.f32.gmra.mxu0 %v2115
    %v2354 = vpop.f32.mrf.mxu0
    %v2355 = vadd.f32 %v2242, %v2354
    %2356 = vmatmul.f32.gmra.mxu0 %v2117
    %v2357 = vpop.f32.mrf.mxu0
    %v2358 = vadd.f32 %v2245, %v2357
    %2359 = vmatmul.f32.gmra.mxu0 %v2119
    %v2360 = vpop.f32.mrf.mxu0
    %v2361 = vadd.f32 %v2248, %v2360
    %2362 = vmatmul.f32.gmra.mxu0 %v2121
    %v2363 = vpop.f32.mrf.mxu0
    %v2364 = vadd.f32 %v2251, %v2363
    %2365 = vmatmul.f32.gmra.mxu0 %v2123
    %v2366 = vpop.f32.mrf.mxu0
    %v2367 = vadd.f32 %v2254, %v2366
    %2368 = vmatmul.f32.gmra.mxu0 %v2125
    %v2369 = vpop.f32.mrf.mxu0
    %v2370 = vadd.f32 %v2257, %v2369
    %2371 = vmatmul.f32.gmra.mxu0 %v2127
    %v2372 = vpop.f32.mrf.mxu0
    %v2373 = vadd.f32 %v2260, %v2372
    %2374 = vmatmul.f32.gmra.mxu0 %v2129
    %v2375 = vpop.f32.mrf.mxu0
    %v2376 = vadd.f32 %v2263, %v2375
    %2377 = vmatmul.f32.gmra.mxu0 %v2131
    %v2378 = vpop.f32.mrf.mxu0
    %v2379 = vadd.f32 %v2266, %v2378
    %2380 = vmatmul.f32.gmra.mxu0 %v2133
    %v2381 = vpop.f32.mrf.mxu0
    %v2382 = vadd.f32 %v2269, %v2381
    %2383 = vmatmul.f32.gmra.mxu0 %v2135
    %v2384 = vpop.f32.mrf.mxu0
    %v2385 = vadd.f32 %v2272, %v2384
    %2386 = vmatmul.f32.gmra.mxu0 %v2137
    %v2387 = vpop.f32.mrf.mxu0
    %v2388 = vadd.f32 %v2275, %v2387
    %2389 = vmatmul.f32.gmra.mxu0 %v2139
    %v2390 = vpop.f32.mrf.mxu0
    %v2391 = vadd.f32 %v2278, %v2390
    %2392 = vmatmul.f32.gmra.mxu0 %v2141
    %v2393 = vpop.f32.mrf.mxu0
    %v2394 = vadd.f32 %v2281, %v2393
    %2395 = vmatmul.f32.gmra.mxu0 %v2143
    %v2396 = vpop.f32.mrf.mxu0
    %v2397 = vadd.f32 %v2284, %v2396
    %2398 = vmatmul.f32.gmra.mxu0 %v2145
    %v2399 = vpop.f32.mrf.mxu0
    %v2400 = vadd.f32 %v2287, %v2399
    %2401 = vmatmul.f32.gmra.mxu0 %v2147
    %v2402 = vpop.f32.mrf.mxu0
    %v2403 = vadd.f32 %v2290, %v2402
    %2404 = vmatmul.f32.gmra.mxu0 %v2149
    %v2405 = vpop.f32.mrf.mxu0
    %v2406 = vadd.f32 %v2293, %v2405
    %2407 = vdwg.mxu0
    %v2408 = vld [vmem:[%s6] sm:$0x1]
    %v2410 = vperm.slane %v2408, 0
    %v2412 = vadd.f32 %v2313, %v2410
    %v2413 = vadd.f32 %v2316, %v2410
    %v2414 = vadd.f32 %v2319, %v2410
    %v2415 = vadd.f32 %v2322, %v2410
    %v2416 = vadd.f32 %v2325, %v2410
    %v2417 = vadd.f32 %v2328, %v2410
    %v2418 = vadd.f32 %v2331, %v2410
    %v2419 = vadd.f32 %v2334, %v2410
    %v2420 = vadd.f32 %v2337, %v2410
    %v2421 = vadd.f32 %v2340, %v2410
    %v2422 = vadd.f32 %v2343, %v2410
    %v2423 = vadd.f32 %v2346, %v2410
    %v2424 = vadd.f32 %v2349, %v2410
    %v2425 = vadd.f32 %v2352, %v2410
    %v2426 = vadd.f32 %v2355, %v2410
    %v2427 = vadd.f32 %v2358, %v2410
    %v2428 = vadd.f32 %v2361, %v2410
    %v2429 = vadd.f32 %v2364, %v2410
    %v2430 = vadd.f32 %v2367, %v2410
    %v2431 = vadd.f32 %v2370, %v2410
    %v2432 = vadd.f32 %v2373, %v2410
    %v2433 = vadd.f32 %v2376, %v2410
    %v2434 = vadd.f32 %v2379, %v2410
    %v2435 = vadd.f32 %v2382, %v2410
    %v2436 = vadd.f32 %v2385, %v2410
    %v2437 = vadd.f32 %v2388, %v2410
    %v2438 = vadd.f32 %v2391, %v2410
    %v2439 = vadd.f32 %v2394, %v2410
    %v2440 = vadd.f32 %v2397, %v2410
    %v2441 = vadd.f32 %v2400, %v2410
    %v2442 = vadd.f32 %v2403, %v2410
    %v2443 = vadd.f32 %v2406, %v2410
    %v2444 = vmax.f32 %v2412, 0.0
    %v2445 = vmax.f32 %v2413, 0.0
    %v2446 = vmax.f32 %v2414, 0.0
    %v2447 = vmax.f32 %v2415, 0.0
    %v2448 = vmax.f32 %v2416, 0.0
    %v2449 = vmax.f32 %v2417, 0.0
    %v2450 = vmax.f32 %v2418, 0.0
    %v2451 = vmax.f32 %v2419, 0.0
    %v2452 = vmax.f32 %v2420, 0.0
    %v2453 = vmax.f32 %v2421, 0.0
    %v2454 = vmax.f32 %v2422, 0.0
    %v2455 = vmax.f32 %v2423, 0.0
    %v2456 = vmax.f32 %v2424, 0.0
    %v2457 = vmax.f32 %v2425, 0.0
    %v2458 = vmax.f32 %v2426, 0.0
    %v2459 = vmax.f32 %v2427, 0.0
    %v2460 = vmax.f32 %v2428, 0.0
    %v2461 = vmax.f32 %v2429, 0.0
    %v2462 = vmax.f32 %v2430, 0.0
    %v2463 = vmax.f32 %v2431, 0.0
    %v2464 = vmax.f32 %v2432, 0.0
    %v2465 = vmax.f32 %v2433, 0.0
    %v2466 = vmax.f32 %v2434, 0.0
    %v2467 = vmax.f32 %v2435, 0.0
    %v2468 = vmax.f32 %v2436, 0.0
    %v2469 = vmax.f32 %v2437, 0.0
    %v2470 = vmax.f32 %v2438, 0.0
    %v2471 = vmax.f32 %v2439, 0.0
    %v2472 = vmax.f32 %v2440, 0.0
    %v2473 = vmax.f32 %v2441, 0.0
    %v2474 = vmax.f32 %v2442, 0.0
    %v2475 = vmax.f32 %v2443, 0.0
    %v2476 = vld [vmem:[%s7] sm:$0xff]
    %v2477 = vld [vmem:[%s7 + $0x8] sm:$0xff]
    %v2478 = vld [vmem:[%s7 + $0x10] sm:$0xff]
    %v2479 = vld [vmem:[%s7 + $0x18] sm:$0xff]
    %v2480 = vld [vmem:[%s7 + $0x20] sm:$0xff]
    %v2481 = vld [vmem:[%s7 + $0x28] sm:$0xff]
    %v2482 = vld [vmem:[%s7 + $0x30] sm:$0xff]
    %v2483 = vld [vmem:[%s7 + $0x38] sm:$0xff]
    %v2484 = vld [vmem:[%s7 + $0x40] sm:$0xff]
    %v2485 = vld [vmem:[%s7 + $0x48] sm:$0xff]
    %v2486 = vld [vmem:[%s7 + $0x50] sm:$0xff]
    %v2487 = vld [vmem:[%s7 + $0x58] sm:$0xff]
    %v2488 = vld [vmem:[%s7 + $0x60] sm:$0xff]
    %v2489 = vld [vmem:[%s7 + $0x68] sm:$0xff]
    %v2490 = vld [vmem:[%s7 + $0x70] sm:$0xff]
    %v2491 = vld [vmem:[%s7 + $0x78] sm:$0xff]
    %v2492 = vld [vmem:[%s8] sm:$0x1]
    %v2494 = vperm.slane %v2492, 0
    %2496 = vmatpush.msra.mxu0 %v2491
    %2497 = vmatpush.msra.mxu0 %v2490
    %2498 = vmatpush.msra.mxu0 %v2489
    %2499 = vmatpush.msra.mxu0 %v2488
    %2500 = vmatpush.msra.mxu0 %v2487
    %2501 = vmatpush.msra.mxu0 %v2486
    %2502 = vmatpush.msra.mxu0 %v2485
    %2503 = vmatpush.msra.mxu0 %v2484
    %2504 = vmatpush.msra.mxu0 %v2483
    %2505 = vmatpush.msra.mxu0 %v2482
    %2506 = vmatpush.msra.mxu0 %v2481
    %2507 = vmatpush.msra.mxu0 %v2480
    %2508 = vmatpush.msra.mxu0 %v2479
    %2509 = vmatpush.msra.mxu0 %v2478
    %2510 = vmatpush.msra.mxu0 %v2477
    %2511 = vmatpush.msra.mxu0 %v2476
    %2512 = vmatmul.f32.gmra.mxu0 %v2444
    %v2513 = vpop.f32.mrf.mxu0
    %v2514 = vadd.f32 %v2494, %v2513
    %2515 = vmatmul.f32.gmra.mxu0 %v2445
    %v2516 = vpop.f32.mrf.mxu0
    %v2517 = vadd.f32 %v2494, %v2516
    %2518 = vmatmul.f32.gmra.mxu0 %v2446
    %v2519 = vpop.f32.mrf.mxu0
    %v2520 = vadd.f32 %v2494, %v2519
    %2521 = vmatmul.f32.gmra.mxu0 %v2447
    %v2522 = vpop.f32.mrf.mxu0
    %v2523 = vadd.f32 %v2494, %v2522
    %2524 = vmatmul.f32.gmra.mxu0 %v2448
    %v2525 = vpop.f32.mrf.mxu0
    %v2526 = vadd.f32 %v2494, %v2525
    %2527 = vmatmul.f32.gmra.mxu0 %v2449
    %v2528 = vpop.f32.mrf.mxu0
    %v2529 = vadd.f32 %v2494, %v2528
    %2530 = vmatmul.f32.gmra.mxu0 %v2450
    %v2531 = vpop.f32.mrf.mxu0
    %v2532 = vadd.f32 %v2494, %v2531
    %2533 = vmatmul.f32.gmra.mxu0 %v2451
    %v2534 = vpop.f32.mrf.mxu0
    %v2535 = vadd.f32 %v2494, %v2534
    %2536 = vmatmul.f32.gmra.mxu0 %v2452
    %v2537 = vpop.f32.mrf.mxu0
    %v2538 = vadd.f32 %v2494, %v2537
    %2539 = vmatmul.f32.gmra.mxu0 %v2453
    %v2540 = vpop.f32.mrf.mxu0
    %v2541 = vadd.f32 %v2494, %v2540
    %2542 = vmatmul.f32.gmra.mxu0 %v2454
    %v2543 = vpop.f32.mrf.mxu0
    %v2544 = vadd.f32 %v2494, %v2543
    %2545 = vmatmul.f32.gmra.mxu0 %v2455
    %v2546 = vpop.f32.mrf.mxu0
    %v2547 = vadd.f32 %v2494, %v2546
    %2548 = vmatmul.f32.gmra.mxu0 %v2456
    %v2549 = vpop.f32.mrf.mxu0
    %v2550 = vadd.f32 %v2494, %v2549
    %2551 = vmatmul.f32.gmra.mxu0 %v2457
    %v2552 = vpop.f32.mrf.mxu0
    %v2553 = vadd.f32 %v2494, %v2552
    %2554 = vmatmul.f32.gmra.mxu0 %v2458
    %v2555 = vpop.f32.mrf.mxu0
    %v2556 = vadd.f32 %v2494, %v2555
    %2557 = vmatmul.f32.gmra.mxu0 %v2459
    %v2558 = vpop.f32.mrf.mxu0
    %v2559 = vadd.f32 %v2494, %v2558
    %2560 = vmatmul.f32.gmra.mxu0 %v2460
    %v2561 = vpop.f32.mrf.mxu0
    %v2562 = vadd.f32 %v2494, %v2561
    %2563 = vmatmul.f32.gmra.mxu0 %v2461
    %v2564 = vpop.f32.mrf.mxu0
    %v2565 = vadd.f32 %v2494, %v2564
    %2566 = vmatmul.f32.gmra.mxu0 %v2462
    %v2567 = vpop.f32.mrf.mxu0
    %v2568 = vadd.f32 %v2494, %v2567
    %2569 = vmatmul.f32.gmra.mxu0 %v2463
    %v2570 = vpop.f32.mrf.mxu0
    %v2571 = vadd.f32 %v2494, %v2570
    %2572 = vmatmul.f32.gmra.mxu0 %v2464
    %v2573 = vpop.f32.mrf.mxu0
    %v2574 = vadd.f32 %v2494, %v2573
    %2575 = vmatmul.f32.gmra.mxu0 %v2465
    %v2576 = vpop.f32.mrf.mxu0
    %v2577 = vadd.f32 %v2494, %v2576
    %2578 = vmatmul.f32.gmra.mxu0 %v2466
    %v2579 = vpop.f32.mrf.mxu0
    %v2580 = vadd.f32 %v2494, %v2579
    %2581 = vmatmul.f32.gmra.mxu0 %v2467
    %v2582 = vpop.f32.mrf.mxu0
    %v2583 = vadd.f32 %v2494, %v2582
    %2584 = vmatmul.f32.gmra.mxu0 %v2468
    %v2585 = vpop.f32.mrf.mxu0
    %v2586 = vadd.f32 %v2494, %v2585
    %2587 = vmatmul.f32.gmra.mxu0 %v2469
    %v2588 = vpop.f32.mrf.mxu0
    %v2589 = vadd.f32 %v2494, %v2588
    %2590 = vmatmul.f32.gmra.mxu0 %v2470
    %v2591 = vpop.f32.mrf.mxu0
    %v2592 = vadd.f32 %v2494, %v2591
    %2593 = vmatmul.f32.gmra.mxu0 %v2471
    %v2594 = vpop.f32.mrf.mxu0
    %v2595 = vadd.f32 %v2494, %v2594
    %2596 = vmatmul.f32.gmra.mxu0 %v2472
    %v2597 = vpop.f32.mrf.mxu0
    %v2598 = vadd.f32 %v2494, %v2597
    %2599 = vmatmul.f32.gmra.mxu0 %v2473
    %v2600 = vpop.f32.mrf.mxu0
    %v2601 = vadd.f32 %v2494, %v2600
    %2602 = vmatmul.f32.gmra.mxu0 %v2474
    %v2603 = vpop.f32.mrf.mxu0
    %v2604 = vadd.f32 %v2494, %v2603
    %2605 = vmatmul.f32.gmra.mxu0 %v2475
    %v2606 = vpop.f32.mrf.mxu0
    %v2607 = vadd.f32 %v2494, %v2606
    %2608 = vdwg.mxu0
    %v2609 = vmax.f32 %v2514, 0.0
    %v2610 = vmax.f32 %v2517, 0.0
    %v2611 = vmax.f32 %v2520, 0.0
    %v2612 = vmax.f32 %v2523, 0.0
    %v2613 = vmax.f32 %v2526, 0.0
    %v2614 = vmax.f32 %v2529, 0.0
    %v2615 = vmax.f32 %v2532, 0.0
    %v2616 = vmax.f32 %v2535, 0.0
    %v2617 = vmax.f32 %v2538, 0.0
    %v2618 = vmax.f32 %v2541, 0.0
    %v2619 = vmax.f32 %v2544, 0.0
    %v2620 = vmax.f32 %v2547, 0.0
    %v2621 = vmax.f32 %v2550, 0.0
    %v2622 = vmax.f32 %v2553, 0.0
    %v2623 = vmax.f32 %v2556, 0.0
    %v2624 = vmax.f32 %v2559, 0.0
    %v2625 = vmax.f32 %v2562, 0.0
    %v2626 = vmax.f32 %v2565, 0.0
    %v2627 = vmax.f32 %v2568, 0.0
    %v2628 = vmax.f32 %v2571, 0.0
    %v2629 = vmax.f32 %v2574, 0.0
    %v2630 = vmax.f32 %v2577, 0.0
    %v2631 = vmax.f32 %v2580, 0.0
    %v2632 = vmax.f32 %v2583, 0.0
    %v2633 = vmax.f32 %v2586, 0.0
    %v2634 = vmax.f32 %v2589, 0.0
    %v2635 = vmax.f32 %v2592, 0.0
    %v2636 = vmax.f32 %v2595, 0.0
    %v2637 = vmax.f32 %v2598, 0.0
    %v2638 = vmax.f32 %v2601, 0.0
    %v2639 = vmax.f32 %v2604, 0.0
    %v2640 = vmax.f32 %v2607, 0.0
    %v2641 = vld [vmem:[%s9] sm:$0x1]
    %v2642 = vld [vmem:[#allocation2] sm:$0x1]
    %2644 = vset.pattern.permute.xlu0 0
    %2645 = vperm.xlu0 %2644, %v2642
    %v2646 = vpop.permute.xlu0 %2645
    %v2648 = vperm.slane %v2646, 0
    %vm2649 = vcmask 523264
    %v2651 = vsel %vm2649, %v2641, 0
    %v2654 = vsel %vm2649, %v2609, 0
    %v2657 = vsel %vm2649, %v2610, 0
    %v2660 = vsel %vm2649, %v2611, 0
    %v2663 = vsel %vm2649, %v2612, 0
    %v2666 = vsel %vm2649, %v2613, 0
    %v2669 = vsel %vm2649, %v2614, 0
    %v2672 = vsel %vm2649, %v2615, 0
    %v2675 = vsel %vm2649, %v2616, 0
    %v2678 = vsel %vm2649, %v2617, 0
    %v2681 = vsel %vm2649, %v2618, 0
    %v2684 = vsel %vm2649, %v2619, 0
    %v2687 = vsel %vm2649, %v2620, 0
    %v2690 = vsel %vm2649, %v2621, 0
    %v2693 = vsel %vm2649, %v2622, 0
    %v2696 = vsel %vm2649, %v2623, 0
    %v2699 = vsel %vm2649, %v2624, 0
    %v2702 = vsel %vm2649, %v2625, 0
    %v2705 = vsel %vm2649, %v2626, 0
    %v2708 = vsel %vm2649, %v2627, 0
    %v2711 = vsel %vm2649, %v2628, 0
    %v2714 = vsel %vm2649, %v2629, 0
    %v2717 = vsel %vm2649, %v2630, 0
    %v2720 = vsel %vm2649, %v2631, 0
    %v2723 = vsel %vm2649, %v2632, 0
    %v2726 = vsel %vm2649, %v2633, 0
    %v2729 = vsel %vm2649, %v2634, 0
    %v2732 = vsel %vm2649, %v2635, 0
    %v2735 = vsel %vm2649, %v2636, 0
    %v2738 = vsel %vm2649, %v2637, 0
    %v2741 = vsel %vm2649, %v2638, 0
    %v2744 = vsel %vm2649, %v2639, 0
    %v2747 = vsel %vm2649, %v2640, 0
    %2749 = vmatpush.xpose.msra.mxu0 %v2699
    %2750 = vmatpush.xpose.msra.mxu0 %v2696
    %2751 = vmatpush.xpose.msra.mxu0 %v2693
    %2752 = vmatpush.xpose.msra.mxu0 %v2690
    %2753 = vmatpush.xpose.msra.mxu0 %v2687
    %2754 = vmatpush.xpose.msra.mxu0 %v2684
    %2755 = vmatpush.xpose.msra.mxu0 %v2681
    %2756 = vmatpush.xpose.msra.mxu0 %v2678
    %2757 = vmatpush.xpose.msra.mxu0 %v2675
    %2758 = vmatpush.xpose.msra.mxu0 %v2672
    %2759 = vmatpush.xpose.msra.mxu0 %v2669
    %2760 = vmatpush.xpose.msra.mxu0 %v2666
    %2761 = vmatpush.xpose.msra.mxu0 %v2663
    %2762 = vmatpush.xpose.msra.mxu0 %v2660
    %2763 = vmatpush.xpose.msra.mxu0 %v2657
    %2764 = vmatpush.xpose.msra.mxu0 %v2654
    %2765 = vmatmul.f32.gmra.mxu0 %v2651
    %v2766 = vpop.f32.mrf.mxu0
    %v2767 = vadd.f32 %v2648, %v2766
    %2768 = vdwg.mxu0
    %2769 = vmatpush.xpose.msra.mxu0 %v2747
    %2770 = vmatpush.xpose.msra.mxu0 %v2744
    %2771 = vmatpush.xpose.msra.mxu0 %v2741
    %2772 = vmatpush.xpose.msra.mxu0 %v2738
    %2773 = vmatpush.xpose.msra.mxu0 %v2735
    %2774 = vmatpush.xpose.msra.mxu0 %v2732
    %2775 = vmatpush.xpose.msra.mxu0 %v2729
    %2776 = vmatpush.xpose.msra.mxu0 %v2726
    %2777 = vmatpush.xpose.msra.mxu0 %v2723
    %2778 = vmatpush.xpose.msra.mxu0 %v2720
    %2779 = vmatpush.xpose.msra.mxu0 %v2717
    %2780 = vmatpush.xpose.msra.mxu0 %v2714
    %2781 = vmatpush.xpose.msra.mxu0 %v2711
    %2782 = vmatpush.xpose.msra.mxu0 %v2708
    %2783 = vmatpush.xpose.msra.mxu0 %v2705
    %2784 = vmatpush.xpose.msra.mxu0 %v2702
    %2785 = vmatmul.f32.gmra.mxu0 %v2651
    %v2786 = vpop.f32.mrf.mxu0
    %v2787 = vadd.f32 %v2648, %v2786
    %2788 = vdwg.mxu0
    %v2789 = vand.u32 2147483647, %v2767
    %v2790 = vand.u32 2147483647, %v2787
    %v2793 = vrot.slane %v2790, 7
    %vm2794 = vcmask 1040384
    %v2795 = vsel %vm2794, %v2789, %v2793
    %v2797 = vlaneseq
    %vm2798 = vcmp.ge.s32.totalorder %v2797, 0
    %vm2799 = vcmp.lt.s32.totalorder %v2797, 256
    %vm2800 = vmand %vm2798, %vm2799
    %2801 = vst.msk [vmem:[#allocation6] sm:$0x3] %vm2800, %v2795
    // Predicated region
    $region50: #{tpu_custom_call.1} parent=1 // pred_check
      _
    $region51: #{tpu_custom_call.1} parent=1 // pred_check_branch
      %2803 = sbr.rel (0) target = $region53
    $region52: #{tpu_custom_call.1} parent=1 // pred_region
      %2805 = vsyncadd [#allocation5], 0
      %s2807 = sshll.u32 [#allocation6], 4
      %s2808 = int_to_ptr.vmem [resolvable:$true] %s2807
      %s2809 = sshll.u32 %s11, 4
      %s2810 = int_to_ptr.hbm [resolvable:$true] %s2809
      %2812 = dma.vmem_to_hbm [thread:$0]  %s2808, 32, %s2810, [#allocation5]
    $region53: #{tpu_custom_call.1} parent=1 // pred_fallthru
      _
    // Predicated region
    $region54: #{tpu_custom_call.1} parent=1 // pred_check
      _
    $region55: #{tpu_custom_call.1} parent=1 // pred_check_branch
      %2814 = sbr.rel (0) target = $region57
    $region56: #{tpu_custom_call.1} parent=1 // pred_region
      %2816 = dma.done [#allocation5], 32
    $region57: #{tpu_custom_call.1} parent=1 // pred_fallthru
      _
    %2817 = vsyncpa [#allocation4], 1
    %2818 = vsyncpa [#allocation5], 1

</llo_original>
